<compile_context>
chip_gen: v7x
topology: tpu7x:2x2x1
jax: 0.10.0
libtpu: 0.0.40
codegen_flags: <defaults>
</compile_context>

<pallas_src>
import functools

import jax
import jax.numpy as jnp
import numpy as np
from jax.experimental import pallas as pl
from jax.experimental.pallas import tpu as pltpu

# Problem sizes (GroupNorm(32, n_feats) requires n_feats % 32 == 0 -> 64 feats).
N, C, H, W = 2, 64, 8, 8
HW = H * W
KH = KW = 3
K9 = KH * KW
GROUPS = 32
CG = C // GROUPS                 # 2 channels per group
EPS = 1e-5
assert CG == 2                   # pair-sum group pooling below assumes CG == 2

# Flattened padded-image ("band") geometry: padded row stride PW = W + 2.  The band
# accumulator covers rows [0, BAND) of the flattened (H+2)*(W+2) padded image, and the
# buffer gets a zero tail so the largest tap slice (start 2*PW + 2) stays in bounds:
#   out[y, x, :] = band[y*PW + x, :],  band = sum_k padded[k_off : k_off + BAND, :] @ W_k
PW = W + 2                       # 10
BAND = H * PW                    # 80  (covers the last valid output row 7*PW + 7 = 77)
PAD_ROWS = 104                   # >= BAND + 2*PW + 2 = 102, rounded up to a multiple of 8


def _group_pair_sum(s):
    """s: (1, C) per-channel stats -> per-group (channel-pair) sums, broadcast per channel.

    out[:, c] = s[:, 2*(c//2)] + s[:, 2*(c//2)+1]  (CG == 2).  Built from lane-shifted copies
    (jnp.roll lowers to static slice + concat) and a parity select: pure VPU/XLU work.
    """
    nb_hi = jnp.roll(s, -1, axis=1)      # nb_hi[:, c] = s[:, c+1]
    nb_lo = jnp.roll(s, 1, axis=1)       # nb_lo[:, c] = s[:, c-1]
    ch = jax.lax.broadcasted_iota(jnp.int32, s.shape, 1)
    partner = jnp.where((ch % 2) == 0, nb_hi, nb_lo)
    return s + partner


def resblock_kernel(x_ref, w1_ref, b1_ref, g1_ref, be1_ref,
                    w2_ref, b2_ref, g2_ref, be2_ref,
                    o_ref, f_ref, *, res_scale):
    # Zero the band buffer once per sample: halo / tail rows are never written, and the
    # interior rows are fully overwritten before each conv.
    f_ref[...] = jnp.zeros(f_ref.shape, f_ref.dtype)

    def scatter(act):
        # act: (HW, C) f32 -> interior rows of the flattened padded image.
        for y in range(H):
            base = (y + 1) * PW + 1
            f_ref[base:base + W, :] = act[y * W:(y + 1) * W, :]

    def conv_gn(w_ref, b_ref, g_ref, be_ref):
        # 9 accumulating (BAND, C) @ (C, C) bf16 MXU matmuls over contiguous band slices.
        # The f32 accumulator lives in vregs: no im2col scratch, no col store/load traffic.
        acc = None
        for dy in range(KH):
            for dx in range(KW):
                k = dy * KW + dx
                start = dy * PW + dx
                lhs = f_ref[start:start + BAND, :].astype(jnp.bfloat16)
                t = jnp.dot(lhs, w_ref[k * C:(k + 1) * C, :],
                            preferred_element_type=jnp.float32)
                acc = t if acc is None else acc + t
        # Gather the valid rows: output row y*W + x sits at band row y*PW + x.
        y = jnp.concatenate([acc[r * PW:r * PW + W, :] for r in range(H)], axis=0)
        y = y + b_ref[...]                                   # conv bias

        # GroupNorm(32): biased per-(sample, group) stats in f32; CG == 2 -> lane pair-sum.
        cnt = float(HW * CG)
        s1 = jnp.sum(y, axis=0, keepdims=True)               # (1, C)
        s2 = jnp.sum(y * y, axis=0, keepdims=True)           # (1, C)
        mean = _group_pair_sum(s1) / cnt
        msq = _group_pair_sum(s2) / cnt
        var = jnp.maximum(msq - mean * mean, 0.0)            # guard tiny cancellation
        inv = jax.lax.rsqrt(var + EPS)
        scale = inv * g_ref[...]                             # fold gamma into scale
        shift = be_ref[...] - mean * scale
        return y * scale + shift

    x = x_ref[...]                                           # (HW, C) identity, f32
    scatter(x)
    y = jnp.maximum(conv_gn(w1_ref, b1_ref, g1_ref, be1_ref), 0.0)   # ReLU
    scatter(y)                                               # halo rows stay zero
    y = conv_gn(w2_ref, b2_ref, g2_ref, be2_ref)
    o_ref[...] = y * res_scale + x                           # fused residual epilogue


def resblock(x_nchw, w1, b1, g1, be1, w2, b2, g2, be2, res_scale=1.0):
    # NCHW -> NHWC -> flat (N*H*W, C): cheap wrapper-side layout plumbing.
    x_flat = jnp.transpose(x_nchw, (0, 2, 3, 1)).astype(jnp.float32).reshape(N * HW, C)

    # HWIO (3,3,Cin,Cout) -> (9*Cin, Cout) in (dy, dx, cin) row order, cast to bf16 so the
    # dominant HBM input traffic (conv weights) is halved and the MXU runs single-pass.
    # NOTE: real PyTorch Conv2d weights are OIHW; transpose to HWIO before calling this.
    w1f = w1.astype(jnp.bfloat16).reshape(K9 * C, C)
    w2f = w2.astype(jnp.bfloat16).reshape(K9 * C, C)
    row = lambda v: v.astype(jnp.float32).reshape(1, C)

    resident = lambda shape: pl.BlockSpec(shape, lambda i: (0, 0))    # same block all steps
    per_sample = pl.BlockSpec((HW, C), lambda i: (i, 0))

    out = pl.pallas_call(
        functools.partial(resblock_kernel, res_scale=float(res_scale)),
        out_shape=jax.ShapeDtypeStruct((N * HW, C), jnp.float32),
        grid_spec=pltpu.PrefetchScalarGridSpec(
            num_scalar_prefetch=0,
            grid=(N,),                                       # one sample per grid step
            in_specs=[per_sample,
                      resident((K9 * C, C)), resident((1, C)), resident((1, C)), resident((1, C)),
                      resident((K9 * C, C)), resident((1, C)), resident((1, C)), resident((1, C))],
            out_specs=per_sample,
            scratch_shapes=[pltpu.VMEM((PAD_ROWS, C), jnp.float32)],   # padded-activation band
        ),
        compiler_params=pltpu.CompilerParams(dimension_semantics=("parallel",)),
    )(x_flat, w1f, row(b1), row(g1), row(be1),
      w2f, row(b2), row(g2), row(be2))

    return jnp.transpose(out.reshape(N, H, W, C), (0, 3, 1, 2))       # back to NCHW


# ------------------------- pure-JAX reference check -------------------------
def ref_forward(x_nchw, w1, b1, g1, be1, w2, b2, g2, be2, res_scale=1.0):
    x = jnp.transpose(x_nchw, (0, 2, 3, 1))

    def conv(x, w, b):
        y = jax.lax.conv_general_dilated(
            x, w, window_strides=(1, 1), padding="SAME",
            dimension_numbers=("NHWC", "HWIO", "NHWC"))
        return y + b.reshape(1, 1, 1, C)

    def gn(x, gamma, beta):
        n, h, w, c = x.shape
        xg = x.reshape(n, h, w, GROUPS, CG)
        mean = xg.mean(axis=(1, 2, 4), keepdims=True)
        var = ((xg - mean) ** 2).mean(axis=(1, 2, 4), keepdims=True)
        xn = ((xg - mean) / jnp.sqrt(var + EPS)).reshape(n, h, w, c)
        return xn * gamma.reshape(1, 1, 1, C) + beta.reshape(1, 1, 1, C)

    identity = x
    y = jnp.maximum(gn(conv(x, w1, b1), g1, be1), 0.0)
    y = gn(conv(y, w2, b2), g2, be2)
    y = y * res_scale + identity
    return jnp.transpose(y, (0, 3, 1, 2))


# TODO(synk): the `input_list` side-effect branch of forward() (appending detached
# batch means) is Python-level state collection, not kernel compute; only the main
# tensor path is implemented here.

if __name__ == "__main__":
    key = jax.random.PRNGKey(0)
    ks = jax.random.split(key, 9)
    x_nchw = jax.random.normal(ks[0], (N, C, H, W), jnp.float32)

    w1 = jax.random.normal(ks[1], (KH, KW, C, C), jnp.float32) * 0.05
    b1 = 0.1 * jax.random.normal(ks[2], (C,), jnp.float32)
    g1 = 1.0 + 0.1 * jax.random.normal(ks[3], (C,), jnp.float32)
    be1 = 0.1 * jax.random.normal(ks[4], (C,), jnp.float32)
    w2 = jax.random.normal(ks[5], (KH, KW, C, C), jnp.float32) * 0.05
    b2 = 0.1 * jax.random.normal(ks[6], (C,), jnp.float32)
    g2 = 1.0 + 0.1 * jax.random.normal(ks[7], (C,), jnp.float32)
    be2 = 0.1 * jax.random.normal(ks[8], (C,), jnp.float32)

    out = resblock(x_nchw, w1, b1, g1, be1, w2, b2, g2, be2, res_scale=1.0)
    out = jax.block_until_ready(out)

    ref = ref_forward(x_nchw, w1, b1, g1, be1, w2, b2, g2, be2, res_scale=1.0)
    # bf16 MXU operands (per perf review) -> tolerance relaxed from 2e-3 to 2e-2; GroupNorm
    # statistics / normalization remain f32, which keeps the error at plain bf16-matmul level.
    np.testing.assert_allclose(np.asarray(out), np.asarray(ref), atol=2e-2, rtol=2e-2)

    print("KERNEL_OK")
</pallas_src>

<mosaic_0001>
module attributes {stable_mosaic.version = 11 : i64} {
  func.func @resblock_kernel(%arg0: i32, %arg1: memref<64x64xf32, #tpu.memory_space<vmem>>, %arg2: memref<576x64xbf16, #tpu.memory_space<vmem>>, %arg3: memref<1x64xf32, #tpu.memory_space<vmem>>, %arg4: memref<1x64xf32, #tpu.memory_space<vmem>>, %arg5: memref<1x64xf32, #tpu.memory_space<vmem>>, %arg6: memref<576x64xbf16, #tpu.memory_space<vmem>>, %arg7: memref<1x64xf32, #tpu.memory_space<vmem>>, %arg8: memref<1x64xf32, #tpu.memory_space<vmem>>, %arg9: memref<1x64xf32, #tpu.memory_space<vmem>>, %arg10: memref<64x64xf32, #tpu.memory_space<vmem>>, %arg11: memref<104x64xf32, #tpu.memory_space<vmem>>) attributes {dimension_semantics = [#tpu.dimension_semantics<parallel>], iteration_bounds = array<i64: 2>, scalar_prefetch = 0 : i64, scratch_operands = 1 : i64, tpu.core_type = #tpu.core_type<tc>, window_params = [{transform_indices = @transform_0, window_bounds = array<i64: 64, 64>}, {pipeline_mode = #tpu.pipeline_mode<synchronous>, transform_indices = @transform_1, window_bounds = array<i64: 576, 64>}, {pipeline_mode = #tpu.pipeline_mode<synchronous>, transform_indices = @transform_2, window_bounds = array<i64: 1, 64>}, {pipeline_mode = #tpu.pipeline_mode<synchronous>, transform_indices = @transform_3, window_bounds = array<i64: 1, 64>}, {pipeline_mode = #tpu.pipeline_mode<synchronous>, transform_indices = @transform_4, window_bounds = array<i64: 1, 64>}, {pipeline_mode = #tpu.pipeline_mode<synchronous>, transform_indices = @transform_5, window_bounds = array<i64: 576, 64>}, {pipeline_mode = #tpu.pipeline_mode<synchronous>, transform_indices = @transform_6, window_bounds = array<i64: 1, 64>}, {pipeline_mode = #tpu.pipeline_mode<synchronous>, transform_indices = @transform_7, window_bounds = array<i64: 1, 64>}, {pipeline_mode = #tpu.pipeline_mode<synchronous>, transform_indices = @transform_8, window_bounds = array<i64: 1, 64>}, {transform_indices = @transform_9, window_bounds = array<i64: 64, 64>}]} {
    %cst = arith.constant 0.000000e+00 : f32
    %0 = vector.broadcast %cst : f32 to vector<104x64xf32>
    %c0 = arith.constant 0 : index
    %c0_0 = arith.constant 0 : index
    %1 = vector.load %arg11[%c0, %c0_0] : memref<104x64xf32, #tpu.memory_space<vmem>>, vector<104x64xf32>
    tpu.vector_store %arg11[%c0, %c0_0], %0 {strides = array<i32>} : memref<104x64xf32, #tpu.memory_space<vmem>>, vector<104x64xf32>,
    %c0_1 = arith.constant 0 : index
    %c0_2 = arith.constant 0 : index
    %2 = vector.load %arg1[%c0_1, %c0_2] : memref<64x64xf32, #tpu.memory_space<vmem>>, vector<64x64xf32>
    %3 = vector.extract_strided_slice %2 {offsets = [0, 0], sizes = [8, 64], strides = [1, 1]} : vector<64x64xf32> to vector<8x64xf32>
    %c11 = arith.constant 11 : index
    %c0_3 = arith.constant 0 : index
    %4 = vector.load %arg11[%c11, %c0_3] : memref<104x64xf32, #tpu.memory_space<vmem>>, vector<8x64xf32>
    tpu.vector_store %arg11[%c11, %c0_3], %3 {strides = array<i32>} : memref<104x64xf32, #tpu.memory_space<vmem>>, vector<8x64xf32>,
    %5 = vector.extract_strided_slice %2 {offsets = [8, 0], sizes = [8, 64], strides = [1, 1]} : vector<64x64xf32> to vector<8x64xf32>
    %c21 = arith.constant 21 : index
    %c0_4 = arith.constant 0 : index
    %6 = vector.load %arg11[%c21, %c0_4] : memref<104x64xf32, #tpu.memory_space<vmem>>, vector<8x64xf32>
    tpu.vector_store %arg11[%c21, %c0_4], %5 {strides = array<i32>} : memref<104x64xf32, #tpu.memory_space<vmem>>, vector<8x64xf32>,
    %7 = vector.extract_strided_slice %2 {offsets = [16, 0], sizes = [8, 64], strides = [1, 1]} : vector<64x64xf32> to vector<8x64xf32>
    %c31 = arith.constant 31 : index
    %c0_5 = arith.constant 0 : index
    %8 = vector.load %arg11[%c31, %c0_5] : memref<104x64xf32, #tpu.memory_space<vmem>>, vector<8x64xf32>
    tpu.vector_store %arg11[%c31, %c0_5], %7 {strides = array<i32>} : memref<104x64xf32, #tpu.memory_space<vmem>>, vector<8x64xf32>,
    %9 = vector.extract_strided_slice %2 {offsets = [24, 0], sizes = [8, 64], strides = [1, 1]} : vector<64x64xf32> to vector<8x64xf32>
    %c41 = arith.constant 41 : index
    %c0_6 = arith.constant 0 : index
    %10 = vector.load %arg11[%c41, %c0_6] : memref<104x64xf32, #tpu.memory_space<vmem>>, vector<8x64xf32>
    tpu.vector_store %arg11[%c41, %c0_6], %9 {strides = array<i32>} : memref<104x64xf32, #tpu.memory_space<vmem>>, vector<8x64xf32>,
    %11 = vector.extract_strided_slice %2 {offsets = [32, 0], sizes = [8, 64], strides = [1, 1]} : vector<64x64xf32> to vector<8x64xf32>
    %c51 = arith.constant 51 : index
    %c0_7 = arith.constant 0 : index
    %12 = vector.load %arg11[%c51, %c0_7] : memref<104x64xf32, #tpu.memory_space<vmem>>, vector<8x64xf32>
    tpu.vector_store %arg11[%c51, %c0_7], %11 {strides = array<i32>} : memref<104x64xf32, #tpu.memory_space<vmem>>, vector<8x64xf32>,
    %13 = vector.extract_strided_slice %2 {offsets = [40, 0], sizes = [8, 64], strides = [1, 1]} : vector<64x64xf32> to vector<8x64xf32>
    %c61 = arith.constant 61 : index
    %c0_8 = arith.constant 0 : index
    %14 = vector.load %arg11[%c61, %c0_8] : memref<104x64xf32, #tpu.memory_space<vmem>>, vector<8x64xf32>
    tpu.vector_store %arg11[%c61, %c0_8], %13 {strides = array<i32>} : memref<104x64xf32, #tpu.memory_space<vmem>>, vector<8x64xf32>,
    %15 = vector.extract_strided_slice %2 {offsets = [48, 0], sizes = [8, 64], strides = [1, 1]} : vector<64x64xf32> to vector<8x64xf32>
    %c71 = arith.constant 71 : index
    %c0_9 = arith.constant 0 : index
    %16 = vector.load %arg11[%c71, %c0_9] : memref<104x64xf32, #tpu.memory_space<vmem>>, vector<8x64xf32>
    tpu.vector_store %arg11[%c71, %c0_9], %15 {strides = array<i32>} : memref<104x64xf32, #tpu.memory_space<vmem>>, vector<8x64xf32>,
    %17 = vector.extract_strided_slice %2 {offsets = [56, 0], sizes = [8, 64], strides = [1, 1]} : vector<64x64xf32> to vector<8x64xf32>
    %c81 = arith.constant 81 : index
    %c0_10 = arith.constant 0 : index
    %18 = vector.load %arg11[%c81, %c0_10] : memref<104x64xf32, #tpu.memory_space<vmem>>, vector<8x64xf32>
    tpu.vector_store %arg11[%c81, %c0_10], %17 {strides = array<i32>} : memref<104x64xf32, #tpu.memory_space<vmem>>, vector<8x64xf32>,
    %c0_11 = arith.constant 0 : index
    %c0_12 = arith.constant 0 : index
    %19 = vector.load %arg11[%c0_11, %c0_12] : memref<104x64xf32, #tpu.memory_space<vmem>>, vector<80x64xf32>
    %20 = arith.truncf %19 : vector<80x64xf32> to vector<80x64xbf16>
    %c0_13 = arith.constant 0 : index
    %c0_14 = arith.constant 0 : index
    %21 = vector.load %arg2[%c0_13, %c0_14] : memref<576x64xbf16, #tpu.memory_space<vmem>>, vector<64x64xbf16>
    %cst_15 = arith.constant dense<0.000000e+00> : vector<80x64xf32>
    %22 = tpu.matmul %20, %21, %cst_15 {dimension_numbers = #tpu.dot_dimension_numbers<[1], [0], [0], [1], [0, 0, 1, 1], [], []>} : vector<80x64xbf16>, vector<64x64xbf16>, vector<80x64xf32> -> vector<80x64xf32>
    %c1 = arith.constant 1 : index
    %c0_16 = arith.constant 0 : index
    %23 = vector.load %arg11[%c1, %c0_16] : memref<104x64xf32, #tpu.memory_space<vmem>>, vector<80x64xf32>
    %24 = arith.truncf %23 : vector<80x64xf32> to vector<80x64xbf16>
    %c64 = arith.constant 64 : index
    %c0_17 = arith.constant 0 : index
    %25 = vector.load %arg2[%c64, %c0_17] : memref<576x64xbf16, #tpu.memory_space<vmem>>, vector<64x64xbf16>
    %cst_18 = arith.constant dense<0.000000e+00> : vector<80x64xf32>
    %26 = tpu.matmul %24, %25, %cst_18 {dimension_numbers = #tpu.dot_dimension_numbers<[1], [0], [0], [1], [0, 0, 1, 1], [], []>} : vector<80x64xbf16>, vector<64x64xbf16>, vector<80x64xf32> -> vector<80x64xf32>
    %27 = arith.addf %22, %26 : vector<80x64xf32>
    %c2 = arith.constant 2 : index
    %c0_19 = arith.constant 0 : index
    %28 = vector.load %arg11[%c2, %c0_19] : memref<104x64xf32, #tpu.memory_space<vmem>>, vector<80x64xf32>
    %29 = arith.truncf %28 : vector<80x64xf32> to vector<80x64xbf16>
    %c128 = arith.constant 128 : index
    %c0_20 = arith.constant 0 : index
    %30 = vector.load %arg2[%c128, %c0_20] : memref<576x64xbf16, #tpu.memory_space<vmem>>, vector<64x64xbf16>
    %cst_21 = arith.constant dense<0.000000e+00> : vector<80x64xf32>
    %31 = tpu.matmul %29, %30, %cst_21 {dimension_numbers = #tpu.dot_dimension_numbers<[1], [0], [0], [1], [0, 0, 1, 1], [], []>} : vector<80x64xbf16>, vector<64x64xbf16>, vector<80x64xf32> -> vector<80x64xf32>
    %32 = arith.addf %27, %31 : vector<80x64xf32>
    %c10 = arith.constant 10 : index
    %c0_22 = arith.constant 0 : index
    %33 = vector.load %arg11[%c10, %c0_22] : memref<104x64xf32, #tpu.memory_space<vmem>>, vector<80x64xf32>
    %34 = arith.truncf %33 : vector<80x64xf32> to vector<80x64xbf16>
    %c192 = arith.constant 192 : index
    %c0_23 = arith.constant 0 : index
    %35 = vector.load %arg2[%c192, %c0_23] : memref<576x64xbf16, #tpu.memory_space<vmem>>, vector<64x64xbf16>
    %cst_24 = arith.constant dense<0.000000e+00> : vector<80x64xf32>
    %36 = tpu.matmul %34, %35, %cst_24 {dimension_numbers = #tpu.dot_dimension_numbers<[1], [0], [0], [1], [0, 0, 1, 1], [], []>} : vector<80x64xbf16>, vector<64x64xbf16>, vector<80x64xf32> -> vector<80x64xf32>
    %37 = arith.addf %32, %36 : vector<80x64xf32>
    %c11_25 = arith.constant 11 : index
    %c0_26 = arith.constant 0 : index
    %38 = vector.load %arg11[%c11_25, %c0_26] : memref<104x64xf32, #tpu.memory_space<vmem>>, vector<80x64xf32>
    %39 = arith.truncf %38 : vector<80x64xf32> to vector<80x64xbf16>
    %c256 = arith.constant 256 : index
    %c0_27 = arith.constant 0 : index
    %40 = vector.load %arg2[%c256, %c0_27] : memref<576x64xbf16, #tpu.memory_space<vmem>>, vector<64x64xbf16>
    %cst_28 = arith.constant dense<0.000000e+00> : vector<80x64xf32>
    %41 = tpu.matmul %39, %40, %cst_28 {dimension_numbers = #tpu.dot_dimension_numbers<[1], [0], [0], [1], [0, 0, 1, 1], [], []>} : vector<80x64xbf16>, vector<64x64xbf16>, vector<80x64xf32> -> vector<80x64xf32>
    %42 = arith.addf %37, %41 : vector<80x64xf32>
    %c12 = arith.constant 12 : index
    %c0_29 = arith.constant 0 : index
    %43 = vector.load %arg11[%c12, %c0_29] : memref<104x64xf32, #tpu.memory_space<vmem>>, vector<80x64xf32>
    %44 = arith.truncf %43 : vector<80x64xf32> to vector<80x64xbf16>
    %c320 = arith.constant 320 : index
    %c0_30 = arith.constant 0 : index
    %45 = vector.load %arg2[%c320, %c0_30] : memref<576x64xbf16, #tpu.memory_space<vmem>>, vector<64x64xbf16>
    %cst_31 = arith.constant dense<0.000000e+00> : vector<80x64xf32>
    %46 = tpu.matmul %44, %45, %cst_31 {dimension_numbers = #tpu.dot_dimension_numbers<[1], [0], [0], [1], [0, 0, 1, 1], [], []>} : vector<80x64xbf16>, vector<64x64xbf16>, vector<80x64xf32> -> vector<80x64xf32>
    %47 = arith.addf %42, %46 : vector<80x64xf32>
    %c20 = arith.constant 20 : index
    %c0_32 = arith.constant 0 : index
    %48 = vector.load %arg11[%c20, %c0_32] : memref<104x64xf32, #tpu.memory_space<vmem>>, vector<80x64xf32>
    %49 = arith.truncf %48 : vector<80x64xf32> to vector<80x64xbf16>
    %c384 = arith.constant 384 : index
    %c0_33 = arith.constant 0 : index
    %50 = vector.load %arg2[%c384, %c0_33] : memref<576x64xbf16, #tpu.memory_space<vmem>>, vector<64x64xbf16>
    %cst_34 = arith.constant dense<0.000000e+00> : vector<80x64xf32>
    %51 = tpu.matmul %49, %50, %cst_34 {dimension_numbers = #tpu.dot_dimension_numbers<[1], [0], [0], [1], [0, 0, 1, 1], [], []>} : vector<80x64xbf16>, vector<64x64xbf16>, vector<80x64xf32> -> vector<80x64xf32>
    %52 = arith.addf %47, %51 : vector<80x64xf32>
    %c21_35 = arith.constant 21 : index
    %c0_36 = arith.constant 0 : index
    %53 = vector.load %arg11[%c21_35, %c0_36] : memref<104x64xf32, #tpu.memory_space<vmem>>, vector<80x64xf32>
    %54 = arith.truncf %53 : vector<80x64xf32> to vector<80x64xbf16>
    %c448 = arith.constant 448 : index
    %c0_37 = arith.constant 0 : index
    %55 = vector.load %arg2[%c448, %c0_37] : memref<576x64xbf16, #tpu.memory_space<vmem>>, vector<64x64xbf16>
    %cst_38 = arith.constant dense<0.000000e+00> : vector<80x64xf32>
    %56 = tpu.matmul %54, %55, %cst_38 {dimension_numbers = #tpu.dot_dimension_numbers<[1], [0], [0], [1], [0, 0, 1, 1], [], []>} : vector<80x64xbf16>, vector<64x64xbf16>, vector<80x64xf32> -> vector<80x64xf32>
    %57 = arith.addf %52, %56 : vector<80x64xf32>
    %c22 = arith.constant 22 : index
    %c0_39 = arith.constant 0 : index
    %58 = vector.load %arg11[%c22, %c0_39] : memref<104x64xf32, #tpu.memory_space<vmem>>, vector<80x64xf32>
    %59 = arith.truncf %58 : vector<80x64xf32> to vector<80x64xbf16>
    %c512 = arith.constant 512 : index
    %c0_40 = arith.constant 0 : index
    %60 = vector.load %arg2[%c512, %c0_40] : memref<576x64xbf16, #tpu.memory_space<vmem>>, vector<64x64xbf16>
    %cst_41 = arith.constant dense<0.000000e+00> : vector<80x64xf32>
    %61 = tpu.matmul %59, %60, %cst_41 {dimension_numbers = #tpu.dot_dimension_numbers<[1], [0], [0], [1], [0, 0, 1, 1], [], []>} : vector<80x64xbf16>, vector<64x64xbf16>, vector<80x64xf32> -> vector<80x64xf32>
    %62 = arith.addf %57, %61 : vector<80x64xf32>
    %63 = vector.extract_strided_slice %62 {offsets = [0, 0], sizes = [8, 64], strides = [1, 1]} : vector<80x64xf32> to vector<8x64xf32>
    %64 = vector.extract_strided_slice %62 {offsets = [10, 0], sizes = [8, 64], strides = [1, 1]} : vector<80x64xf32> to vector<8x64xf32>
    %65 = vector.extract_strided_slice %62 {offsets = [20, 0], sizes = [8, 64], strides = [1, 1]} : vector<80x64xf32> to vector<8x64xf32>
    %66 = vector.extract_strided_slice %62 {offsets = [30, 0], sizes = [8, 64], strides = [1, 1]} : vector<80x64xf32> to vector<8x64xf32>
    %67 = vector.extract_strided_slice %62 {offsets = [40, 0], sizes = [8, 64], strides = [1, 1]} : vector<80x64xf32> to vector<8x64xf32>
    %68 = vector.extract_strided_slice %62 {offsets = [50, 0], sizes = [8, 64], strides = [1, 1]} : vector<80x64xf32> to vector<8x64xf32>
    %69 = vector.extract_strided_slice %62 {offsets = [60, 0], sizes = [8, 64], strides = [1, 1]} : vector<80x64xf32> to vector<8x64xf32>
    %70 = vector.extract_strided_slice %62 {offsets = [70, 0], sizes = [8, 64], strides = [1, 1]} : vector<80x64xf32> to vector<8x64xf32>
    %71 = tpu.concatenate %63, %64, %65, %66, %67, %68, %69, %70 in 0 : vector<8x64xf32>, vector<8x64xf32>, vector<8x64xf32>, vector<8x64xf32>, vector<8x64xf32>, vector<8x64xf32>, vector<8x64xf32>, vector<8x64xf32> -> vector<64x64xf32>
    %c0_42 = arith.constant 0 : index
    %c0_43 = arith.constant 0 : index
    %72 = vector.load %arg3[%c0_42, %c0_43] : memref<1x64xf32, #tpu.memory_space<vmem>>, vector<1x64xf32>
    %73 = vector.broadcast %72 : vector<1x64xf32> to vector<64x64xf32>
    %74 = arith.addf %71, %73 : vector<64x64xf32>
    %cst_44 = arith.constant dense<0.000000e+00> : vector<64xf32>
    %75 = vector.multi_reduction <add>, %74, %cst_44 [0] : vector<64x64xf32> to vector<64xf32>
    %76 = vector.shape_cast %75 : vector<64xf32> to vector<1x64xf32>
    %77 = arith.mulf %74, %74 : vector<64x64xf32>
    %cst_45 = arith.constant dense<0.000000e+00> : vector<64xf32>
    %78 = vector.multi_reduction <add>, %77, %cst_45 [0] : vector<64x64xf32> to vector<64xf32>
    %79 = vector.shape_cast %78 : vector<64xf32> to vector<1x64xf32>
    %80 = vector.extract_strided_slice %76 {offsets = [0, 1], sizes = [1, 63], strides = [1, 1]} : vector<1x64xf32> to vector<1x63xf32>
    %81 = vector.extract_strided_slice %76 {offsets = [0, 0], sizes = [1, 1], strides = [1, 1]} : vector<1x64xf32> to vector<1x1xf32>
    %82 = tpu.concatenate %80, %81 in 1 : vector<1x63xf32>, vector<1x1xf32> -> vector<1x64xf32>
    %83 = vector.extract_strided_slice %76 {offsets = [0, 63], sizes = [1, 1], strides = [1, 1]} : vector<1x64xf32> to vector<1x1xf32>
    %84 = vector.extract_strided_slice %76 {offsets = [0, 0], sizes = [1, 63], strides = [1, 1]} : vector<1x64xf32> to vector<1x63xf32>
    %85 = tpu.concatenate %83, %84 in 1 : vector<1x1xf32>, vector<1x63xf32> -> vector<1x64xf32>
    %86 = tpu.iota {dimensions = array<i32: 1>} : vector<1x64xi32>
    %c2_i32 = arith.constant 2 : i32
    %c0_i32 = arith.constant 0 : i32
    %87 = arith.cmpi eq, %c2_i32, %c0_i32 : i32
    %c1_i32 = arith.constant 1 : i32
    %88 = arith.select %87, %c1_i32, %c2_i32 : i32
    %89 = vector.broadcast %88 : i32 to vector<1x64xi32>
    %90 = arith.remsi %86, %89 : vector<1x64xi32>
    %c0_i32_46 = arith.constant 0 : i32
    %91 = vector.broadcast %c0_i32_46 : i32 to vector<1x64xi32>
    %92 = arith.cmpi ne, %90, %91 : vector<1x64xi32>
    %c0_i32_47 = arith.constant 0 : i32
    %93 = vector.broadcast %c0_i32_47 : i32 to vector<1x64xi32>
    %94 = arith.cmpi slt, %90, %93 : vector<1x64xi32>
    %c0_i32_48 = arith.constant 0 : i32
    %95 = arith.cmpi slt, %88, %c0_i32_48 : i32
    %96 = vector.broadcast %95 : i1 to vector<1x64xi1>
    %97 = vector.broadcast %96 : vector<1x64xi1> to vector<1x64xi1>
    %98 = arith.xori %94, %97 : vector<1x64xi1>
    %99 = arith.andi %98, %92 : vector<1x64xi1>
    %100 = vector.broadcast %88 : i32 to vector<1x64xi32>
    %101 = arith.addi %90, %100 : vector<1x64xi32>
    %102 = arith.select %99, %101, %90 : vector<1x64xi1>, vector<1x64xi32>
    %c0_i32_49 = arith.constant 0 : i32
    %103 = vector.broadcast %c0_i32_49 : i32 to vector<1x64xi32>
    %104 = arith.cmpi eq, %102, %103 : vector<1x64xi32>
    %105 = arith.select %104, %82, %85 : vector<1x64xi1>, vector<1x64xf32>
    %106 = arith.addf %76, %105 : vector<1x64xf32>
    %cst_50 = arith.constant 1.280000e+02 : f32
    %107 = vector.broadcast %cst_50 : f32 to vector<1x64xf32>
    %108 = arith.divf %106, %107 : vector<1x64xf32>
    %109 = vector.extract_strided_slice %79 {offsets = [0, 1], sizes = [1, 63], strides = [1, 1]} : vector<1x64xf32> to vector<1x63xf32>
    %110 = vector.extract_strided_slice %79 {offsets = [0, 0], sizes = [1, 1], strides = [1, 1]} : vector<1x64xf32> to vector<1x1xf32>
    %111 = tpu.concatenate %109, %110 in 1 : vector<1x63xf32>, vector<1x1xf32> -> vector<1x64xf32>
    %112 = vector.extract_strided_slice %79 {offsets = [0, 63], sizes = [1, 1], strides = [1, 1]} : vector<1x64xf32> to vector<1x1xf32>
    %113 = vector.extract_strided_slice %79 {offsets = [0, 0], sizes = [1, 63], strides = [1, 1]} : vector<1x64xf32> to vector<1x63xf32>
    %114 = tpu.concatenate %112, %113 in 1 : vector<1x1xf32>, vector<1x63xf32> -> vector<1x64xf32>
    %115 = tpu.iota {dimensions = array<i32: 1>} : vector<1x64xi32>
    %c2_i32_51 = arith.constant 2 : i32
    %c0_i32_52 = arith.constant 0 : i32
    %116 = arith.cmpi eq, %c2_i32_51, %c0_i32_52 : i32
    %c1_i32_53 = arith.constant 1 : i32
    %117 = arith.select %116, %c1_i32_53, %c2_i32_51 : i32
    %118 = vector.broadcast %117 : i32 to vector<1x64xi32>
    %119 = arith.remsi %115, %118 : vector<1x64xi32>
    %c0_i32_54 = arith.constant 0 : i32
    %120 = vector.broadcast %c0_i32_54 : i32 to vector<1x64xi32>
    %121 = arith.cmpi ne, %119, %120 : vector<1x64xi32>
    %c0_i32_55 = arith.constant 0 : i32
    %122 = vector.broadcast %c0_i32_55 : i32 to vector<1x64xi32>
    %123 = arith.cmpi slt, %119, %122 : vector<1x64xi32>
    %c0_i32_56 = arith.constant 0 : i32
    %124 = arith.cmpi slt, %117, %c0_i32_56 : i32
    %125 = vector.broadcast %124 : i1 to vector<1x64xi1>
    %126 = vector.broadcast %125 : vector<1x64xi1> to vector<1x64xi1>
    %127 = arith.xori %123, %126 : vector<1x64xi1>
    %128 = arith.andi %127, %121 : vector<1x64xi1>
    %129 = vector.broadcast %117 : i32 to vector<1x64xi32>
    %130 = arith.addi %119, %129 : vector<1x64xi32>
    %131 = arith.select %128, %130, %119 : vector<1x64xi1>, vector<1x64xi32>
    %c0_i32_57 = arith.constant 0 : i32
    %132 = vector.broadcast %c0_i32_57 : i32 to vector<1x64xi32>
    %133 = arith.cmpi eq, %131, %132 : vector<1x64xi32>
    %134 = arith.select %133, %111, %114 : vector<1x64xi1>, vector<1x64xf32>
    %135 = arith.addf %79, %134 : vector<1x64xf32>
    %cst_58 = arith.constant 1.280000e+02 : f32
    %136 = vector.broadcast %cst_58 : f32 to vector<1x64xf32>
    %137 = arith.divf %135, %136 : vector<1x64xf32>
    %138 = arith.mulf %108, %108 : vector<1x64xf32>
    %139 = arith.subf %137, %138 : vector<1x64xf32>
    %cst_59 = arith.constant 0.000000e+00 : f32
    %140 = vector.broadcast %cst_59 : f32 to vector<1x64xf32>
    %141 = arith.maximumf %139, %140 : vector<1x64xf32>
    %cst_60 = arith.constant 9.99999974E-6 : f32
    %142 = vector.broadcast %cst_60 : f32 to vector<1x64xf32>
    %143 = arith.addf %141, %142 : vector<1x64xf32>
    %144 = math.rsqrt %143 : vector<1x64xf32>
    %c0_61 = arith.constant 0 : index
    %c0_62 = arith.constant 0 : index
    %145 = vector.load %arg4[%c0_61, %c0_62] : memref<1x64xf32, #tpu.memory_space<vmem>>, vector<1x64xf32>
    %146 = arith.mulf %144, %145 : vector<1x64xf32>
    %c0_63 = arith.constant 0 : index
    %c0_64 = arith.constant 0 : index
    %147 = vector.load %arg5[%c0_63, %c0_64] : memref<1x64xf32, #tpu.memory_space<vmem>>, vector<1x64xf32>
    %148 = arith.mulf %108, %146 : vector<1x64xf32>
    %149 = arith.subf %147, %148 : vector<1x64xf32>
    %150 = vector.broadcast %146 : vector<1x64xf32> to vector<64x64xf32>
    %151 = arith.mulf %74, %150 : vector<64x64xf32>
    %152 = vector.broadcast %149 : vector<1x64xf32> to vector<64x64xf32>
    %153 = arith.addf %151, %152 : vector<64x64xf32>
    %cst_65 = arith.constant 0.000000e+00 : f32
    %154 = vector.broadcast %cst_65 : f32 to vector<64x64xf32>
    %155 = arith.maximumf %153, %154 : vector<64x64xf32>
    %156 = vector.extract_strided_slice %155 {offsets = [0, 0], sizes = [8, 64], strides = [1, 1]} : vector<64x64xf32> to vector<8x64xf32>
    %c11_66 = arith.constant 11 : index
    %c0_67 = arith.constant 0 : index
    %157 = vector.load %arg11[%c11_66, %c0_67] : memref<104x64xf32, #tpu.memory_space<vmem>>, vector<8x64xf32>
    tpu.vector_store %arg11[%c11_66, %c0_67], %156 {strides = array<i32>} : memref<104x64xf32, #tpu.memory_space<vmem>>, vector<8x64xf32>,
    %158 = vector.extract_strided_slice %155 {offsets = [8, 0], sizes = [8, 64], strides = [1, 1]} : vector<64x64xf32> to vector<8x64xf32>
    %c21_68 = arith.constant 21 : index
    %c0_69 = arith.constant 0 : index
    %159 = vector.load %arg11[%c21_68, %c0_69] : memref<104x64xf32, #tpu.memory_space<vmem>>, vector<8x64xf32>
    tpu.vector_store %arg11[%c21_68, %c0_69], %158 {strides = array<i32>} : memref<104x64xf32, #tpu.memory_space<vmem>>, vector<8x64xf32>,
    %160 = vector.extract_strided_slice %155 {offsets = [16, 0], sizes = [8, 64], strides = [1, 1]} : vector<64x64xf32> to vector<8x64xf32>
    %c31_70 = arith.constant 31 : index
    %c0_71 = arith.constant 0 : index
    %161 = vector.load %arg11[%c31_70, %c0_71] : memref<104x64xf32, #tpu.memory_space<vmem>>, vector<8x64xf32>
    tpu.vector_store %arg11[%c31_70, %c0_71], %160 {strides = array<i32>} : memref<104x64xf32, #tpu.memory_space<vmem>>, vector<8x64xf32>,
    %162 = vector.extract_strided_slice %155 {offsets = [24, 0], sizes = [8, 64], strides = [1, 1]} : vector<64x64xf32> to vector<8x64xf32>
    %c41_72 = arith.constant 41 : index
    %c0_73 = arith.constant 0 : index
    %163 = vector.load %arg11[%c41_72, %c0_73] : memref<104x64xf32, #tpu.memory_space<vmem>>, vector<8x64xf32>
    tpu.vector_store %arg11[%c41_72, %c0_73], %162 {strides = array<i32>} : memref<104x64xf32, #tpu.memory_space<vmem>>, vector<8x64xf32>,
    %164 = vector.extract_strided_slice %155 {offsets = [32, 0], sizes = [8, 64], strides = [1, 1]} : vector<64x64xf32> to vector<8x64xf32>
    %c51_74 = arith.constant 51 : index
    %c0_75 = arith.constant 0 : index
    %165 = vector.load %arg11[%c51_74, %c0_75] : memref<104x64xf32, #tpu.memory_space<vmem>>, vector<8x64xf32>
    tpu.vector_store %arg11[%c51_74, %c0_75], %164 {strides = array<i32>} : memref<104x64xf32, #tpu.memory_space<vmem>>, vector<8x64xf32>,
    %166 = vector.extract_strided_slice %155 {offsets = [40, 0], sizes = [8, 64], strides = [1, 1]} : vector<64x64xf32> to vector<8x64xf32>
    %c61_76 = arith.constant 61 : index
    %c0_77 = arith.constant 0 : index
    %167 = vector.load %arg11[%c61_76, %c0_77] : memref<104x64xf32, #tpu.memory_space<vmem>>, vector<8x64xf32>
    tpu.vector_store %arg11[%c61_76, %c0_77], %166 {strides = array<i32>} : memref<104x64xf32, #tpu.memory_space<vmem>>, vector<8x64xf32>,
    %168 = vector.extract_strided_slice %155 {offsets = [48, 0], sizes = [8, 64], strides = [1, 1]} : vector<64x64xf32> to vector<8x64xf32>
    %c71_78 = arith.constant 71 : index
    %c0_79 = arith.constant 0 : index
    %169 = vector.load %arg11[%c71_78, %c0_79] : memref<104x64xf32, #tpu.memory_space<vmem>>, vector<8x64xf32>
    tpu.vector_store %arg11[%c71_78, %c0_79], %168 {strides = array<i32>} : memref<104x64xf32, #tpu.memory_space<vmem>>, vector<8x64xf32>,
    %170 = vector.extract_strided_slice %155 {offsets = [56, 0], sizes = [8, 64], strides = [1, 1]} : vector<64x64xf32> to vector<8x64xf32>
    %c81_80 = arith.constant 81 : index
    %c0_81 = arith.constant 0 : index
    %171 = vector.load %arg11[%c81_80, %c0_81] : memref<104x64xf32, #tpu.memory_space<vmem>>, vector<8x64xf32>
    tpu.vector_store %arg11[%c81_80, %c0_81], %170 {strides = array<i32>} : memref<104x64xf32, #tpu.memory_space<vmem>>, vector<8x64xf32>,
    %c0_82 = arith.constant 0 : index
    %c0_83 = arith.constant 0 : index
    %172 = vector.load %arg11[%c0_82, %c0_83] : memref<104x64xf32, #tpu.memory_space<vmem>>, vector<80x64xf32>
    %173 = arith.truncf %172 : vector<80x64xf32> to vector<80x64xbf16>
    %c0_84 = arith.constant 0 : index
    %c0_85 = arith.constant 0 : index
    %174 = vector.load %arg6[%c0_84, %c0_85] : memref<576x64xbf16, #tpu.memory_space<vmem>>, vector<64x64xbf16>
    %cst_86 = arith.constant dense<0.000000e+00> : vector<80x64xf32>
    %175 = tpu.matmul %173, %174, %cst_86 {dimension_numbers = #tpu.dot_dimension_numbers<[1], [0], [0], [1], [0, 0, 1, 1], [], []>} : vector<80x64xbf16>, vector<64x64xbf16>, vector<80x64xf32> -> vector<80x64xf32>
    %c1_87 = arith.constant 1 : index
    %c0_88 = arith.constant 0 : index
    %176 = vector.load %arg11[%c1_87, %c0_88] : memref<104x64xf32, #tpu.memory_space<vmem>>, vector<80x64xf32>
    %177 = arith.truncf %176 : vector<80x64xf32> to vector<80x64xbf16>
    %c64_89 = arith.constant 64 : index
    %c0_90 = arith.constant 0 : index
    %178 = vector.load %arg6[%c64_89, %c0_90] : memref<576x64xbf16, #tpu.memory_space<vmem>>, vector<64x64xbf16>
    %cst_91 = arith.constant dense<0.000000e+00> : vector<80x64xf32>
    %179 = tpu.matmul %177, %178, %cst_91 {dimension_numbers = #tpu.dot_dimension_numbers<[1], [0], [0], [1], [0, 0, 1, 1], [], []>} : vector<80x64xbf16>, vector<64x64xbf16>, vector<80x64xf32> -> vector<80x64xf32>
    %180 = arith.addf %175, %179 : vector<80x64xf32>
    %c2_92 = arith.constant 2 : index
    %c0_93 = arith.constant 0 : index
    %181 = vector.load %arg11[%c2_92, %c0_93] : memref<104x64xf32, #tpu.memory_space<vmem>>, vector<80x64xf32>
    %182 = arith.truncf %181 : vector<80x64xf32> to vector<80x64xbf16>
    %c128_94 = arith.constant 128 : index
    %c0_95 = arith.constant 0 : index
    %183 = vector.load %arg6[%c128_94, %c0_95] : memref<576x64xbf16, #tpu.memory_space<vmem>>, vector<64x64xbf16>
    %cst_96 = arith.constant dense<0.000000e+00> : vector<80x64xf32>
    %184 = tpu.matmul %182, %183, %cst_96 {dimension_numbers = #tpu.dot_dimension_numbers<[1], [0], [0], [1], [0, 0, 1, 1], [], []>} : vector<80x64xbf16>, vector<64x64xbf16>, vector<80x64xf32> -> vector<80x64xf32>
    %185 = arith.addf %180, %184 : vector<80x64xf32>
    %c10_97 = arith.constant 10 : index
    %c0_98 = arith.constant 0 : index
    %186 = vector.load %arg11[%c10_97, %c0_98] : memref<104x64xf32, #tpu.memory_space<vmem>>, vector<80x64xf32>
    %187 = arith.truncf %186 : vector<80x64xf32> to vector<80x64xbf16>
    %c192_99 = arith.constant 192 : index
    %c0_100 = arith.constant 0 : index
    %188 = vector.load %arg6[%c192_99, %c0_100] : memref<576x64xbf16, #tpu.memory_space<vmem>>, vector<64x64xbf16>
    %cst_101 = arith.constant dense<0.000000e+00> : vector<80x64xf32>
    %189 = tpu.matmul %187, %188, %cst_101 {dimension_numbers = #tpu.dot_dimension_numbers<[1], [0], [0], [1], [0, 0, 1, 1], [], []>} : vector<80x64xbf16>, vector<64x64xbf16>, vector<80x64xf32> -> vector<80x64xf32>
    %190 = arith.addf %185, %189 : vector<80x64xf32>
    %c11_102 = arith.constant 11 : index
    %c0_103 = arith.constant 0 : index
    %191 = vector.load %arg11[%c11_102, %c0_103] : memref<104x64xf32, #tpu.memory_space<vmem>>, vector<80x64xf32>
    %192 = arith.truncf %191 : vector<80x64xf32> to vector<80x64xbf16>
    %c256_104 = arith.constant 256 : index
    %c0_105 = arith.constant 0 : index
    %193 = vector.load %arg6[%c256_104, %c0_105] : memref<576x64xbf16, #tpu.memory_space<vmem>>, vector<64x64xbf16>
    %cst_106 = arith.constant dense<0.000000e+00> : vector<80x64xf32>
    %194 = tpu.matmul %192, %193, %cst_106 {dimension_numbers = #tpu.dot_dimension_numbers<[1], [0], [0], [1], [0, 0, 1, 1], [], []>} : vector<80x64xbf16>, vector<64x64xbf16>, vector<80x64xf32> -> vector<80x64xf32>
    %195 = arith.addf %190, %194 : vector<80x64xf32>
    %c12_107 = arith.constant 12 : index
    %c0_108 = arith.constant 0 : index
    %196 = vector.load %arg11[%c12_107, %c0_108] : memref<104x64xf32, #tpu.memory_space<vmem>>, vector<80x64xf32>
    %197 = arith.truncf %196 : vector<80x64xf32> to vector<80x64xbf16>
    %c320_109 = arith.constant 320 : index
    %c0_110 = arith.constant 0 : index
    %198 = vector.load %arg6[%c320_109, %c0_110] : memref<576x64xbf16, #tpu.memory_space<vmem>>, vector<64x64xbf16>
    %cst_111 = arith.constant dense<0.000000e+00> : vector<80x64xf32>
    %199 = tpu.matmul %197, %198, %cst_111 {dimension_numbers = #tpu.dot_dimension_numbers<[1], [0], [0], [1], [0, 0, 1, 1], [], []>} : vector<80x64xbf16>, vector<64x64xbf16>, vector<80x64xf32> -> vector<80x64xf32>
    %200 = arith.addf %195, %199 : vector<80x64xf32>
    %c20_112 = arith.constant 20 : index
    %c0_113 = arith.constant 0 : index
    %201 = vector.load %arg11[%c20_112, %c0_113] : memref<104x64xf32, #tpu.memory_space<vmem>>, vector<80x64xf32>
    %202 = arith.truncf %201 : vector<80x64xf32> to vector<80x64xbf16>
    %c384_114 = arith.constant 384 : index
    %c0_115 = arith.constant 0 : index
    %203 = vector.load %arg6[%c384_114, %c0_115] : memref<576x64xbf16, #tpu.memory_space<vmem>>, vector<64x64xbf16>
    %cst_116 = arith.constant dense<0.000000e+00> : vector<80x64xf32>
    %204 = tpu.matmul %202, %203, %cst_116 {dimension_numbers = #tpu.dot_dimension_numbers<[1], [0], [0], [1], [0, 0, 1, 1], [], []>} : vector<80x64xbf16>, vector<64x64xbf16>, vector<80x64xf32> -> vector<80x64xf32>
    %205 = arith.addf %200, %204 : vector<80x64xf32>
    %c21_117 = arith.constant 21 : index
    %c0_118 = arith.constant 0 : index
    %206 = vector.load %arg11[%c21_117, %c0_118] : memref<104x64xf32, #tpu.memory_space<vmem>>, vector<80x64xf32>
    %207 = arith.truncf %206 : vector<80x64xf32> to vector<80x64xbf16>
    %c448_119 = arith.constant 448 : index
    %c0_120 = arith.constant 0 : index
    %208 = vector.load %arg6[%c448_119, %c0_120] : memref<576x64xbf16, #tpu.memory_space<vmem>>, vector<64x64xbf16>
    %cst_121 = arith.constant dense<0.000000e+00> : vector<80x64xf32>
    %209 = tpu.matmul %207, %208, %cst_121 {dimension_numbers = #tpu.dot_dimension_numbers<[1], [0], [0], [1], [0, 0, 1, 1], [], []>} : vector<80x64xbf16>, vector<64x64xbf16>, vector<80x64xf32> -> vector<80x64xf32>
    %210 = arith.addf %205, %209 : vector<80x64xf32>
    %c22_122 = arith.constant 22 : index
    %c0_123 = arith.constant 0 : index
    %211 = vector.load %arg11[%c22_122, %c0_123] : memref<104x64xf32, #tpu.memory_space<vmem>>, vector<80x64xf32>
    %212 = arith.truncf %211 : vector<80x64xf32> to vector<80x64xbf16>
    %c512_124 = arith.constant 512 : index
    %c0_125 = arith.constant 0 : index
    %213 = vector.load %arg6[%c512_124, %c0_125] : memref<576x64xbf16, #tpu.memory_space<vmem>>, vector<64x64xbf16>
    %cst_126 = arith.constant dense<0.000000e+00> : vector<80x64xf32>
    %214 = tpu.matmul %212, %213, %cst_126 {dimension_numbers = #tpu.dot_dimension_numbers<[1], [0], [0], [1], [0, 0, 1, 1], [], []>} : vector<80x64xbf16>, vector<64x64xbf16>, vector<80x64xf32> -> vector<80x64xf32>
    %215 = arith.addf %210, %214 : vector<80x64xf32>
    %216 = vector.extract_strided_slice %215 {offsets = [0, 0], sizes = [8, 64], strides = [1, 1]} : vector<80x64xf32> to vector<8x64xf32>
    %217 = vector.extract_strided_slice %215 {offsets = [10, 0], sizes = [8, 64], strides = [1, 1]} : vector<80x64xf32> to vector<8x64xf32>
    %218 = vector.extract_strided_slice %215 {offsets = [20, 0], sizes = [8, 64], strides = [1, 1]} : vector<80x64xf32> to vector<8x64xf32>
    %219 = vector.extract_strided_slice %215 {offsets = [30, 0], sizes = [8, 64], strides = [1, 1]} : vector<80x64xf32> to vector<8x64xf32>
    %220 = vector.extract_strided_slice %215 {offsets = [40, 0], sizes = [8, 64], strides = [1, 1]} : vector<80x64xf32> to vector<8x64xf32>
    %221 = vector.extract_strided_slice %215 {offsets = [50, 0], sizes = [8, 64], strides = [1, 1]} : vector<80x64xf32> to vector<8x64xf32>
    %222 = vector.extract_strided_slice %215 {offsets = [60, 0], sizes = [8, 64], strides = [1, 1]} : vector<80x64xf32> to vector<8x64xf32>
    %223 = vector.extract_strided_slice %215 {offsets = [70, 0], sizes = [8, 64], strides = [1, 1]} : vector<80x64xf32> to vector<8x64xf32>
    %224 = tpu.concatenate %216, %217, %218, %219, %220, %221, %222, %223 in 0 : vector<8x64xf32>, vector<8x64xf32>, vector<8x64xf32>, vector<8x64xf32>, vector<8x64xf32>, vector<8x64xf32>, vector<8x64xf32>, vector<8x64xf32> -> vector<64x64xf32>
    %c0_127 = arith.constant 0 : index
    %c0_128 = arith.constant 0 : index
    %225 = vector.load %arg7[%c0_127, %c0_128] : memref<1x64xf32, #tpu.memory_space<vmem>>, vector<1x64xf32>
    %226 = vector.broadcast %225 : vector<1x64xf32> to vector<64x64xf32>
    %227 = arith.addf %224, %226 : vector<64x64xf32>
    %cst_129 = arith.constant dense<0.000000e+00> : vector<64xf32>
    %228 = vector.multi_reduction <add>, %227, %cst_129 [0] : vector<64x64xf32> to vector<64xf32>
    %229 = vector.shape_cast %228 : vector<64xf32> to vector<1x64xf32>
    %230 = arith.mulf %227, %227 : vector<64x64xf32>
    %cst_130 = arith.constant dense<0.000000e+00> : vector<64xf32>
    %231 = vector.multi_reduction <add>, %230, %cst_130 [0] : vector<64x64xf32> to vector<64xf32>
    %232 = vector.shape_cast %231 : vector<64xf32> to vector<1x64xf32>
    %233 = vector.extract_strided_slice %229 {offsets = [0, 1], sizes = [1, 63], strides = [1, 1]} : vector<1x64xf32> to vector<1x63xf32>
    %234 = vector.extract_strided_slice %229 {offsets = [0, 0], sizes = [1, 1], strides = [1, 1]} : vector<1x64xf32> to vector<1x1xf32>
    %235 = tpu.concatenate %233, %234 in 1 : vector<1x63xf32>, vector<1x1xf32> -> vector<1x64xf32>
    %236 = vector.extract_strided_slice %229 {offsets = [0, 63], sizes = [1, 1], strides = [1, 1]} : vector<1x64xf32> to vector<1x1xf32>
    %237 = vector.extract_strided_slice %229 {offsets = [0, 0], sizes = [1, 63], strides = [1, 1]} : vector<1x64xf32> to vector<1x63xf32>
    %238 = tpu.concatenate %236, %237 in 1 : vector<1x1xf32>, vector<1x63xf32> -> vector<1x64xf32>
    %239 = tpu.iota {dimensions = array<i32: 1>} : vector<1x64xi32>
    %c2_i32_131 = arith.constant 2 : i32
    %c0_i32_132 = arith.constant 0 : i32
    %240 = arith.cmpi eq, %c2_i32_131, %c0_i32_132 : i32
    %c1_i32_133 = arith.constant 1 : i32
    %241 = arith.select %240, %c1_i32_133, %c2_i32_131 : i32
    %242 = vector.broadcast %241 : i32 to vector<1x64xi32>
    %243 = arith.remsi %239, %242 : vector<1x64xi32>
    %c0_i32_134 = arith.constant 0 : i32
    %244 = vector.broadcast %c0_i32_134 : i32 to vector<1x64xi32>
    %245 = arith.cmpi ne, %243, %244 : vector<1x64xi32>
    %c0_i32_135 = arith.constant 0 : i32
    %246 = vector.broadcast %c0_i32_135 : i32 to vector<1x64xi32>
    %247 = arith.cmpi slt, %243, %246 : vector<1x64xi32>
    %c0_i32_136 = arith.constant 0 : i32
    %248 = arith.cmpi slt, %241, %c0_i32_136 : i32
    %249 = vector.broadcast %248 : i1 to vector<1x64xi1>
    %250 = vector.broadcast %249 : vector<1x64xi1> to vector<1x64xi1>
    %251 = arith.xori %247, %250 : vector<1x64xi1>
    %252 = arith.andi %251, %245 : vector<1x64xi1>
    %253 = vector.broadcast %241 : i32 to vector<1x64xi32>
    %254 = arith.addi %243, %253 : vector<1x64xi32>
    %255 = arith.select %252, %254, %243 : vector<1x64xi1>, vector<1x64xi32>
    %c0_i32_137 = arith.constant 0 : i32
    %256 = vector.broadcast %c0_i32_137 : i32 to vector<1x64xi32>
    %257 = arith.cmpi eq, %255, %256 : vector<1x64xi32>
    %258 = arith.select %257, %235, %238 : vector<1x64xi1>, vector<1x64xf32>
    %259 = arith.addf %229, %258 : vector<1x64xf32>
    %cst_138 = arith.constant 1.280000e+02 : f32
    %260 = vector.broadcast %cst_138 : f32 to vector<1x64xf32>
    %261 = arith.divf %259, %260 : vector<1x64xf32>
    %262 = vector.extract_strided_slice %232 {offsets = [0, 1], sizes = [1, 63], strides = [1, 1]} : vector<1x64xf32> to vector<1x63xf32>
    %263 = vector.extract_strided_slice %232 {offsets = [0, 0], sizes = [1, 1], strides = [1, 1]} : vector<1x64xf32> to vector<1x1xf32>
    %264 = tpu.concatenate %262, %263 in 1 : vector<1x63xf32>, vector<1x1xf32> -> vector<1x64xf32>
    %265 = vector.extract_strided_slice %232 {offsets = [0, 63], sizes = [1, 1], strides = [1, 1]} : vector<1x64xf32> to vector<1x1xf32>
    %266 = vector.extract_strided_slice %232 {offsets = [0, 0], sizes = [1, 63], strides = [1, 1]} : vector<1x64xf32> to vector<1x63xf32>
    %267 = tpu.concatenate %265, %266 in 1 : vector<1x1xf32>, vector<1x63xf32> -> vector<1x64xf32>
    %268 = tpu.iota {dimensions = array<i32: 1>} : vector<1x64xi32>
    %c2_i32_139 = arith.constant 2 : i32
    %c0_i32_140 = arith.constant 0 : i32
    %269 = arith.cmpi eq, %c2_i32_139, %c0_i32_140 : i32
    %c1_i32_141 = arith.constant 1 : i32
    %270 = arith.select %269, %c1_i32_141, %c2_i32_139 : i32
    %271 = vector.broadcast %270 : i32 to vector<1x64xi32>
    %272 = arith.remsi %268, %271 : vector<1x64xi32>
    %c0_i32_142 = arith.constant 0 : i32
    %273 = vector.broadcast %c0_i32_142 : i32 to vector<1x64xi32>
    %274 = arith.cmpi ne, %272, %273 : vector<1x64xi32>
    %c0_i32_143 = arith.constant 0 : i32
    %275 = vector.broadcast %c0_i32_143 : i32 to vector<1x64xi32>
    %276 = arith.cmpi slt, %272, %275 : vector<1x64xi32>
    %c0_i32_144 = arith.constant 0 : i32
    %277 = arith.cmpi slt, %270, %c0_i32_144 : i32
    %278 = vector.broadcast %277 : i1 to vector<1x64xi1>
    %279 = vector.broadcast %278 : vector<1x64xi1> to vector<1x64xi1>
    %280 = arith.xori %276, %279 : vector<1x64xi1>
    %281 = arith.andi %280, %274 : vector<1x64xi1>
    %282 = vector.broadcast %270 : i32 to vector<1x64xi32>
    %283 = arith.addi %272, %282 : vector<1x64xi32>
    %284 = arith.select %281, %283, %272 : vector<1x64xi1>, vector<1x64xi32>
    %c0_i32_145 = arith.constant 0 : i32
    %285 = vector.broadcast %c0_i32_145 : i32 to vector<1x64xi32>
    %286 = arith.cmpi eq, %284, %285 : vector<1x64xi32>
    %287 = arith.select %286, %264, %267 : vector<1x64xi1>, vector<1x64xf32>
    %288 = arith.addf %232, %287 : vector<1x64xf32>
    %cst_146 = arith.constant 1.280000e+02 : f32
    %289 = vector.broadcast %cst_146 : f32 to vector<1x64xf32>
    %290 = arith.divf %288, %289 : vector<1x64xf32>
    %291 = arith.mulf %261, %261 : vector<1x64xf32>
    %292 = arith.subf %290, %291 : vector<1x64xf32>
    %cst_147 = arith.constant 0.000000e+00 : f32
    %293 = vector.broadcast %cst_147 : f32 to vector<1x64xf32>
    %294 = arith.maximumf %292, %293 : vector<1x64xf32>
    %cst_148 = arith.constant 9.99999974E-6 : f32
    %295 = vector.broadcast %cst_148 : f32 to vector<1x64xf32>
    %296 = arith.addf %294, %295 : vector<1x64xf32>
    %297 = math.rsqrt %296 : vector<1x64xf32>
    %c0_149 = arith.constant 0 : index
    %c0_150 = arith.constant 0 : index
    %298 = vector.load %arg8[%c0_149, %c0_150] : memref<1x64xf32, #tpu.memory_space<vmem>>, vector<1x64xf32>
    %299 = arith.mulf %297, %298 : vector<1x64xf32>
    %c0_151 = arith.constant 0 : index
    %c0_152 = arith.constant 0 : index
    %300 = vector.load %arg9[%c0_151, %c0_152] : memref<1x64xf32, #tpu.memory_space<vmem>>, vector<1x64xf32>
    %301 = arith.mulf %261, %299 : vector<1x64xf32>
    %302 = arith.subf %300, %301 : vector<1x64xf32>
    %303 = vector.broadcast %299 : vector<1x64xf32> to vector<64x64xf32>
    %304 = arith.mulf %227, %303 : vector<64x64xf32>
    %305 = vector.broadcast %302 : vector<1x64xf32> to vector<64x64xf32>
    %306 = arith.addf %304, %305 : vector<64x64xf32>
    %cst_153 = arith.constant 1.000000e+00 : f32
    %307 = vector.broadcast %cst_153 : f32 to vector<64x64xf32>
    %308 = arith.mulf %306, %307 : vector<64x64xf32>
    %309 = arith.addf %308, %2 : vector<64x64xf32>
    %c0_154 = arith.constant 0 : index
    %c0_155 = arith.constant 0 : index
    %310 = vector.load %arg10[%c0_154, %c0_155] : memref<64x64xf32, #tpu.memory_space<vmem>>, vector<64x64xf32>
    tpu.vector_store %arg10[%c0_154, %c0_155], %309 {strides = array<i32>} : memref<64x64xf32, #tpu.memory_space<vmem>>, vector<64x64xf32>,
    return
  }
  func.func @transform_0(%arg0: i32) -> (i32, i32) {
    %c0_i32 = arith.constant 0 : i32
    %c0_i32_0 = arith.constant 0 : i32
    return %arg0, %c0_i32 : i32, i32
  }
  func.func @transform_1(%arg0: i32) -> (i32, i32) {
    %c0_i32 = arith.constant 0 : i32
    %c0_i32_0 = arith.constant 0 : i32
    %c0_i32_1 = arith.constant 0 : i32
    return %c0_i32, %c0_i32_0 : i32, i32
  }
  func.func @transform_2(%arg0: i32) -> (i32, i32) {
    %c0_i32 = arith.constant 0 : i32
    %c0_i32_0 = arith.constant 0 : i32
    %c0_i32_1 = arith.constant 0 : i32
    return %c0_i32, %c0_i32_0 : i32, i32
  }
  func.func @transform_3(%arg0: i32) -> (i32, i32) {
    %c0_i32 = arith.constant 0 : i32
    %c0_i32_0 = arith.constant 0 : i32
    %c0_i32_1 = arith.constant 0 : i32
    return %c0_i32, %c0_i32_0 : i32, i32
  }
  func.func @transform_4(%arg0: i32) -> (i32, i32) {
    %c0_i32 = arith.constant 0 : i32
    %c0_i32_0 = arith.constant 0 : i32
    %c0_i32_1 = arith.constant 0 : i32
    return %c0_i32, %c0_i32_0 : i32, i32
  }
  func.func @transform_5(%arg0: i32) -> (i32, i32) {
    %c0_i32 = arith.constant 0 : i32
    %c0_i32_0 = arith.constant 0 : i32
    %c0_i32_1 = arith.constant 0 : i32
    return %c0_i32, %c0_i32_0 : i32, i32
  }
  func.func @transform_6(%arg0: i32) -> (i32, i32) {
    %c0_i32 = arith.constant 0 : i32
    %c0_i32_0 = arith.constant 0 : i32
    %c0_i32_1 = arith.constant 0 : i32
    return %c0_i32, %c0_i32_0 : i32, i32
  }
  func.func @transform_7(%arg0: i32) -> (i32, i32) {
    %c0_i32 = arith.constant 0 : i32
    %c0_i32_0 = arith.constant 0 : i32
    %c0_i32_1 = arith.constant 0 : i32
    return %c0_i32, %c0_i32_0 : i32, i32
  }
  func.func @transform_8(%arg0: i32) -> (i32, i32) {
    %c0_i32 = arith.constant 0 : i32
    %c0_i32_0 = arith.constant 0 : i32
    %c0_i32_1 = arith.constant 0 : i32
    return %c0_i32, %c0_i32_0 : i32, i32
  }
  func.func @transform_9(%arg0: i32) -> (i32, i32) {
    %c0_i32 = arith.constant 0 : i32
    %c0_i32_0 = arith.constant 0 : i32
    return %arg0, %c0_i32 : i32, i32
  }
}

</mosaic_0001>

<llo_original>
// kernel: tpu_custom_call.1
$region0: #{tpu_custom_call.1}
  #allocation0 [shape = 'u32[]', space=smem, size = 0x4, offset = 0x4, fixed_abs, tag = 'smem constant byte address 0x4 - core index']
  #allocation1 [shape = 'u32[144,128]{1,0:T(1,128)}', space=vmem, size = 0x12000, scoped, tag = 'internal scratch']
  #allocation2 [shape = 'f32[104,64]{1,0:T(8,128)}', space=vmem, size = 0xd000, scoped, tag = 'scratch operand']
  %s0 = inlined_call_operand.vmem [shape: f32[128,64], index: 0, kind: input, shape index: {}]
  %s1 = inlined_call_operand.vmem [shape: bf16[576,64], index: 1, kind: input, shape index: {}]
  %s2 = inlined_call_operand.vmem [shape: f32[1,64], index: 2, kind: input, shape index: {}]
  %s3 = inlined_call_operand.vmem [shape: f32[1,64], index: 3, kind: input, shape index: {}]
  %s4 = inlined_call_operand.vmem [shape: f32[1,64], index: 4, kind: input, shape index: {}]
  %s5 = inlined_call_operand.vmem [shape: bf16[576,64], index: 5, kind: input, shape index: {}]
  %s6 = inlined_call_operand.vmem [shape: f32[1,64], index: 6, kind: input, shape index: {}]
  %s7 = inlined_call_operand.vmem [shape: f32[1,64], index: 7, kind: input, shape index: {}]
  %s8 = inlined_call_operand.vmem [shape: f32[1,64], index: 8, kind: input, shape index: {}]
  %s9 = inlined_call_operand.vmem [shape: f32[128,64], index: 9, kind: output, shape index: {}]
  %s10 = sld [smem:[#allocation0]]
  $region69: #{tpu_custom_call.1} parent=0
    _
  %s12 = ssub.s32 1, %s10
  %s13 = scalar_select 0, %s12, %s10
  loop: start=0, step=1, limit=4
  $region2: #{tpu_custom_call.1} parent=0 // loop_pre_header
    _
  $region3: #{tpu_custom_call.1} parent=0 // loop_header
    %s15 = sphi 0, %s19
    %p16 = scmp.ge.s32.totalorder %s15, 4
    %s25 = sphi 0, %s27
    %s28 = sphi 0, %s25
    %s29 = sphi 0, %s28
    %s45 = sphi 0, %s29
    %s49 = sphi 0, %s49
    %s51 = sphi 0, %s49
    %s52 = sphi 0, %s51
    %s66 = sphi 0, %s52
    %s70 = sphi 0, %s70
    %s72 = sphi 0, %s70
    %s73 = sphi 0, %s72
    %s87 = sphi 0, %s73
    %s91 = sphi 0, %s91
    %s93 = sphi 0, %s91
    %s94 = sphi 0, %s93
    %s108 = sphi 0, %s94
    %s112 = sphi 0, %s112
    %s114 = sphi 0, %s112
    %s115 = sphi 0, %s114
    %s129 = sphi 0, %s115
    %s133 = sphi 0, %s133
    %s135 = sphi 0, %s133
    %s136 = sphi 0, %s135
    %s150 = sphi 0, %s136
    %s154 = sphi 0, %s154
    %s156 = sphi 0, %s154
    %s157 = sphi 0, %s156
    %s171 = sphi 0, %s157
    %s175 = sphi 0, %s175
    %s177 = sphi 0, %s175
    %s178 = sphi 0, %s177
    %s192 = sphi 0, %s178
    %s196 = sphi 0, %s196
    %s198 = sphi 0, %s196
    %s199 = sphi 0, %s198
    %s213 = sphi 0, %s199
    %s219 = sphi 0, %s221
    %s222 = sphi 0, %s219
    %s223 = sphi 0, %s222
    %s239 = sphi 0, %s223
  $region4: #{tpu_custom_call.1} parent=0 // loop_header_branch
    %18 = sbr.rel (%p16) target = $region8
  $region5: #{tpu_custom_call.1} parent=0 // loop_body
    %s20 = ssub.s32 %s15, 1
    %s21 = ssub.s32 %s15, 2
    %s22 = sadd.s32 %s15, 1
    %s23 = ssub.s32 %s15, %s22
    %p24 = scmp.eq.s32.totalorder %s23, 0
    %s26 = sadd.s32 %s25, 1
    %s27 = scalar_select %p24, %s25, %s26
    %p30 = pneg %p24
    %p31 = scmp.eq.s32.totalorder %s15, 1
    %p32 = por %p30, %p31
    %p33 = scmp.ne.s32.totalorder %s25, %s28
    %p34 = scmp.eq.s32.totalorder %s15, 0
    %p35 = por %p33, %p34
    %p36 = scmp.ne.s32.totalorder %s25, %s28
    %p37 = scmp.eq.s32.totalorder %s20, 1
    %p38 = por %p36, %p37
    %p39 = scmp.ne.s32.totalorder %s28, %s29
    %p40 = scmp.eq.s32.totalorder %s20, 0
    %p41 = por %p39, %p40
    %p42 = scmp.ne.s32.totalorder %s28, %s29
    %p43 = scmp.eq.s32.totalorder %s21, 1
    %p44 = por %p42, %p43
    %p46 = scmp.ne.s32.totalorder %s29, %s45
    %p47 = scmp.eq.s32.totalorder %s21, 0
    %p48 = por %p46, %p47
    %s50 = sadd.s32 %s49, 1
    %p53 = scmp.eq.s32.totalorder %s15, 1
    %p54 = scmp.ne.s32.totalorder %s49, %s51
    %p55 = scmp.eq.s32.totalorder %s15, 0
    %p56 = por %p54, %p55
    %p57 = scmp.ne.s32.totalorder %s49, %s51
    %p58 = scmp.eq.s32.totalorder %s20, 1
    %p59 = por %p57, %p58
    %p60 = scmp.ne.s32.totalorder %s51, %s52
    %p61 = scmp.eq.s32.totalorder %s20, 0
    %p62 = por %p60, %p61
    %p63 = scmp.ne.s32.totalorder %s51, %s52
    %p64 = scmp.eq.s32.totalorder %s21, 1
    %p65 = por %p63, %p64
    %p67 = scmp.ne.s32.totalorder %s52, %s66
    %p68 = scmp.eq.s32.totalorder %s21, 0
    %p69 = por %p67, %p68
    %s71 = sadd.s32 %s70, 1
    %p74 = scmp.eq.s32.totalorder %s15, 1
    %p75 = scmp.ne.s32.totalorder %s70, %s72
    %p76 = scmp.eq.s32.totalorder %s15, 0
    %p77 = por %p75, %p76
    %p78 = scmp.ne.s32.totalorder %s70, %s72
    %p79 = scmp.eq.s32.totalorder %s20, 1
    %p80 = por %p78, %p79
    %p81 = scmp.ne.s32.totalorder %s72, %s73
    %p82 = scmp.eq.s32.totalorder %s20, 0
    %p83 = por %p81, %p82
    %p84 = scmp.ne.s32.totalorder %s72, %s73
    %p85 = scmp.eq.s32.totalorder %s21, 1
    %p86 = por %p84, %p85
    %p88 = scmp.ne.s32.totalorder %s73, %s87
    %p89 = scmp.eq.s32.totalorder %s21, 0
    %p90 = por %p88, %p89
    %s92 = sadd.s32 %s91, 1
    %p95 = scmp.eq.s32.totalorder %s15, 1
    %p96 = scmp.ne.s32.totalorder %s91, %s93
    %p97 = scmp.eq.s32.totalorder %s15, 0
    %p98 = por %p96, %p97
    %p99 = scmp.ne.s32.totalorder %s91, %s93
    %p100 = scmp.eq.s32.totalorder %s20, 1
    %p101 = por %p99, %p100
    %p102 = scmp.ne.s32.totalorder %s93, %s94
    %p103 = scmp.eq.s32.totalorder %s20, 0
    %p104 = por %p102, %p103
    %p105 = scmp.ne.s32.totalorder %s93, %s94
    %p106 = scmp.eq.s32.totalorder %s21, 1
    %p107 = por %p105, %p106
    %p109 = scmp.ne.s32.totalorder %s94, %s108
    %p110 = scmp.eq.s32.totalorder %s21, 0
    %p111 = por %p109, %p110
    %s113 = sadd.s32 %s112, 1
    %p116 = scmp.eq.s32.totalorder %s15, 1
    %p117 = scmp.ne.s32.totalorder %s112, %s114
    %p118 = scmp.eq.s32.totalorder %s15, 0
    %p119 = por %p117, %p118
    %p120 = scmp.ne.s32.totalorder %s112, %s114
    %p121 = scmp.eq.s32.totalorder %s20, 1
    %p122 = por %p120, %p121
    %p123 = scmp.ne.s32.totalorder %s114, %s115
    %p124 = scmp.eq.s32.totalorder %s20, 0
    %p125 = por %p123, %p124
    %p126 = scmp.ne.s32.totalorder %s114, %s115
    %p127 = scmp.eq.s32.totalorder %s21, 1
    %p128 = por %p126, %p127
    %p130 = scmp.ne.s32.totalorder %s115, %s129
    %p131 = scmp.eq.s32.totalorder %s21, 0
    %p132 = por %p130, %p131
    %s134 = sadd.s32 %s133, 1
    %p137 = scmp.eq.s32.totalorder %s15, 1
    %p138 = scmp.ne.s32.totalorder %s133, %s135
    %p139 = scmp.eq.s32.totalorder %s15, 0
    %p140 = por %p138, %p139
    %p141 = scmp.ne.s32.totalorder %s133, %s135
    %p142 = scmp.eq.s32.totalorder %s20, 1
    %p143 = por %p141, %p142
    %p144 = scmp.ne.s32.totalorder %s135, %s136
    %p145 = scmp.eq.s32.totalorder %s20, 0
    %p146 = por %p144, %p145
    %p147 = scmp.ne.s32.totalorder %s135, %s136
    %p148 = scmp.eq.s32.totalorder %s21, 1
    %p149 = por %p147, %p148
    %p151 = scmp.ne.s32.totalorder %s136, %s150
    %p152 = scmp.eq.s32.totalorder %s21, 0
    %p153 = por %p151, %p152
    %s155 = sadd.s32 %s154, 1
    %p158 = scmp.eq.s32.totalorder %s15, 1
    %p159 = scmp.ne.s32.totalorder %s154, %s156
    %p160 = scmp.eq.s32.totalorder %s15, 0
    %p161 = por %p159, %p160
    %p162 = scmp.ne.s32.totalorder %s154, %s156
    %p163 = scmp.eq.s32.totalorder %s20, 1
    %p164 = por %p162, %p163
    %p165 = scmp.ne.s32.totalorder %s156, %s157
    %p166 = scmp.eq.s32.totalorder %s20, 0
    %p167 = por %p165, %p166
    %p168 = scmp.ne.s32.totalorder %s156, %s157
    %p169 = scmp.eq.s32.totalorder %s21, 1
    %p170 = por %p168, %p169
    %p172 = scmp.ne.s32.totalorder %s157, %s171
    %p173 = scmp.eq.s32.totalorder %s21, 0
    %p174 = por %p172, %p173
    %s176 = sadd.s32 %s175, 1
    %p179 = scmp.eq.s32.totalorder %s15, 1
    %p180 = scmp.ne.s32.totalorder %s175, %s177
    %p181 = scmp.eq.s32.totalorder %s15, 0
    %p182 = por %p180, %p181
    %p183 = scmp.ne.s32.totalorder %s175, %s177
    %p184 = scmp.eq.s32.totalorder %s20, 1
    %p185 = por %p183, %p184
    %p186 = scmp.ne.s32.totalorder %s177, %s178
    %p187 = scmp.eq.s32.totalorder %s20, 0
    %p188 = por %p186, %p187
    %p189 = scmp.ne.s32.totalorder %s177, %s178
    %p190 = scmp.eq.s32.totalorder %s21, 1
    %p191 = por %p189, %p190
    %p193 = scmp.ne.s32.totalorder %s178, %s192
    %p194 = scmp.eq.s32.totalorder %s21, 0
    %p195 = por %p193, %p194
    %s197 = sadd.s32 %s196, 1
    %p200 = scmp.eq.s32.totalorder %s15, 1
    %p201 = scmp.ne.s32.totalorder %s196, %s198
    %p202 = scmp.eq.s32.totalorder %s15, 0
    %p203 = por %p201, %p202
    %p204 = scmp.ne.s32.totalorder %s196, %s198
    %p205 = scmp.eq.s32.totalorder %s20, 1
    %p206 = por %p204, %p205
    %p207 = scmp.ne.s32.totalorder %s198, %s199
    %p208 = scmp.eq.s32.totalorder %s20, 0
    %p209 = por %p207, %p208
    %p210 = scmp.ne.s32.totalorder %s198, %s199
    %p211 = scmp.eq.s32.totalorder %s21, 1
    %p212 = por %p210, %p211
    %p214 = scmp.ne.s32.totalorder %s199, %s213
    %p215 = scmp.eq.s32.totalorder %s21, 0
    %p216 = por %p214, %p215
    %s217 = ssub.s32 %s15, %s22
    %p218 = scmp.eq.s32.totalorder %s217, 0
    %s220 = sadd.s32 %s219, 1
    %s221 = scalar_select %p218, %s219, %s220
    %p224 = pneg %p218
    %p225 = scmp.eq.s32.totalorder %s15, 1
    %p226 = por %p224, %p225
    %p227 = scmp.ne.s32.totalorder %s219, %s222
    %p228 = scmp.eq.s32.totalorder %s15, 0
    %p229 = por %p227, %p228
    %p230 = scmp.ne.s32.totalorder %s219, %s222
    %p231 = scmp.eq.s32.totalorder %s20, 1
    %p232 = por %p230, %p231
    %p233 = scmp.ne.s32.totalorder %s222, %s223
    %p234 = scmp.eq.s32.totalorder %s20, 0
    %p235 = por %p233, %p234
    %p236 = scmp.ne.s32.totalorder %s222, %s223
    %p237 = scmp.eq.s32.totalorder %s21, 1
    %p238 = por %p236, %p237
    %p240 = scmp.ne.s32.totalorder %s223, %s239
    %p241 = scmp.eq.s32.totalorder %s21, 0
    %p242 = por %p240, %p241
    %p243 = scmp.le.s32.totalorder 1, %s15
    %p244 = scmp.lt.s32.totalorder %s15, 3
    %p245 = pnand %p243, %p244
    %p246 = pneg %p245
    // Predicated region
    $region9: #{tpu_custom_call.1} parent=5 // pred_check
      _
    $region10: #{tpu_custom_call.1} parent=5 // pred_check_branch
      %248 = sbr.rel (%p245) target = $region12
    $region11: #{tpu_custom_call.1} parent=5 // pred_region
      %s249 = ssub.s32 %s15, 1
      // Predicated region
      $region13: #{tpu_custom_call.1} parent=11 // pred_check
        %p250 = pneg %p62
      $region14: #{tpu_custom_call.1} parent=11 // pred_check_branch
        %252 = sbr.rel (%p250) target = $region16
      $region15: #{tpu_custom_call.1} parent=11 // pred_region
        _
      $region16: #{tpu_custom_call.1} parent=11 // pred_fallthru
        _
      // Predicated region
      $region17: #{tpu_custom_call.1} parent=11 // pred_check
        %p253 = pneg %p83
      $region18: #{tpu_custom_call.1} parent=11 // pred_check_branch
        %255 = sbr.rel (%p253) target = $region20
      $region19: #{tpu_custom_call.1} parent=11 // pred_region
        _
      $region20: #{tpu_custom_call.1} parent=11 // pred_fallthru
        _
      // Predicated region
      $region21: #{tpu_custom_call.1} parent=11 // pred_check
        %p256 = pneg %p104
      $region22: #{tpu_custom_call.1} parent=11 // pred_check_branch
        %258 = sbr.rel (%p256) target = $region24
      $region23: #{tpu_custom_call.1} parent=11 // pred_region
        _
      $region24: #{tpu_custom_call.1} parent=11 // pred_fallthru
        _
      // Predicated region
      $region25: #{tpu_custom_call.1} parent=11 // pred_check
        %p259 = pneg %p125
      $region26: #{tpu_custom_call.1} parent=11 // pred_check_branch
        %261 = sbr.rel (%p259) target = $region28
      $region27: #{tpu_custom_call.1} parent=11 // pred_region
        _
      $region28: #{tpu_custom_call.1} parent=11 // pred_fallthru
        _
      // Predicated region
      $region29: #{tpu_custom_call.1} parent=11 // pred_check
        %p262 = pneg %p146
      $region30: #{tpu_custom_call.1} parent=11 // pred_check_branch
        %264 = sbr.rel (%p262) target = $region32
      $region31: #{tpu_custom_call.1} parent=11 // pred_region
        _
      $region32: #{tpu_custom_call.1} parent=11 // pred_fallthru
        _
      // Predicated region
      $region33: #{tpu_custom_call.1} parent=11 // pred_check
        %p265 = pneg %p167
      $region34: #{tpu_custom_call.1} parent=11 // pred_check_branch
        %267 = sbr.rel (%p265) target = $region36
      $region35: #{tpu_custom_call.1} parent=11 // pred_region
        _
      $region36: #{tpu_custom_call.1} parent=11 // pred_fallthru
        _
      // Predicated region
      $region37: #{tpu_custom_call.1} parent=11 // pred_check
        %p268 = pneg %p188
      $region38: #{tpu_custom_call.1} parent=11 // pred_check_branch
        %270 = sbr.rel (%p268) target = $region40
      $region39: #{tpu_custom_call.1} parent=11 // pred_region
        _
      $region40: #{tpu_custom_call.1} parent=11 // pred_fallthru
        _
      // Predicated region
      $region41: #{tpu_custom_call.1} parent=11 // pred_check
        %p271 = pneg %p209
      $region42: #{tpu_custom_call.1} parent=11 // pred_check_branch
        %273 = sbr.rel (%p271) target = $region44
      $region43: #{tpu_custom_call.1} parent=11 // pred_region
        _
      $region44: #{tpu_custom_call.1} parent=11 // pred_fallthru
        _
    $region12: #{tpu_custom_call.1} parent=5 // pred_fallthru
      _
    %p274 = scmp.lt.s32.totalorder %s15, 2
    // Predicated region
    $region45: #{tpu_custom_call.1} parent=5 // pred_check
      %p275 = pneg %p274
    $region46: #{tpu_custom_call.1} parent=5 // pred_check_branch
      %277 = sbr.rel (%p275) target = $region48
    $region47: #{tpu_custom_call.1} parent=5 // pred_region
      // Predicated region
      $region49: #{tpu_custom_call.1} parent=47 // pred_check
        %p278 = pneg %p35
      $region50: #{tpu_custom_call.1} parent=47 // pred_check_branch
        %280 = sbr.rel (%p278) target = $region52
      $region51: #{tpu_custom_call.1} parent=47 // pred_region
        %s281 = smul.u32 8, %s15
        %p282 = scmp.lt.s32.totalorder %s281, 15
        %s283 = scalar_select %p282, %s281, 15
        %s284 = smul.addr %s283, 8
        %s285 = scalar_lea.vmem %s0, %s284
        %s286 = smul.u32 8, %s15
      $region52: #{tpu_custom_call.1} parent=47 // pred_fallthru
        _
    $region48: #{tpu_custom_call.1} parent=5 // pred_fallthru
      _
    %p287 = scmp.le.s32.totalorder 1, %s15
    %p288 = scmp.lt.s32.totalorder %s15, 3
    %p289 = pnand %p287, %p288
    %p290 = pneg %p289
    // Predicated region
    $region53: #{tpu_custom_call.1} parent=5 // pred_check
      _
    $region54: #{tpu_custom_call.1} parent=5 // pred_check_branch
      %292 = sbr.rel (%p289) target = $region56
    $region55: #{tpu_custom_call.1} parent=5 // pred_region
      %s293 = ssub.s32 %s15, 1
      %s294 = smul.u32 8, %s20
      %p295 = scmp.lt.s32.totalorder %s294, 15
      %s296 = scalar_select %p295, %s294, 15
      %s297 = smul.addr %s296, 8
      %s298 = scalar_lea.vmem %s0, %s297
      %p299 = pneg %p41
      %p300 = pneg %p38
      %p301 = pneg %p62
      %p302 = pneg %p59
      %p303 = pneg %p83
      %p304 = pneg %p80
      %p305 = pneg %p104
      %p306 = pneg %p101
      %p307 = pneg %p125
      %p308 = pneg %p122
      %p309 = pneg %p146
      %p310 = pneg %p143
      %p311 = pneg %p167
      %p312 = pneg %p164
      %p313 = pneg %p188
      %p314 = pneg %p185
      %p315 = pneg %p209
      %p316 = pneg %p206
      %p317 = pneg %p235
      %p318 = pneg %p232
      %s319 = smul.u32 8, %s20
      %p320 = scmp.lt.s32.totalorder %s319, 15
      %s321 = scalar_select %p320, %s319, 15
      %s322 = smul.addr %s321, 8
      %s323 = scalar_lea.vmem %s9, %s322
      %s324 = smul.u32 8, %s20
      %p325 = scmp.lt.s32.totalorder %s324, 15
      %s326 = scalar_select %p325, %s324, 15
      %s327 = smul.addr %s326, 8
      %s328 = scalar_lea.vmem %s0, %s327
      %s329 = smul.u32 8, %s20
      %s330 = smul.u32 8, %s20
      %p331 = scmp.lt.s32.totalorder %s330, 15
      %s332 = scalar_select %p331, %s330, 15
      %s333 = smul.addr %s332, 8
      %s334 = scalar_lea.vmem %s9, %s333
      %s335 = smul.u32 8, %s20
      %vm337 = vcmask 523264
      %338 = vst.msk [vmem:[#allocation2] sm:$0xff] %vm337, 0.0
      %339 = vst.msk [vmem:[#allocation2 + $0x8] sm:$0xff] %vm337, 0.0
      %340 = vst.msk [vmem:[#allocation2 + $0x10] sm:$0xff] %vm337, 0.0
      %341 = vst.msk [vmem:[#allocation2 + $0x18] sm:$0xff] %vm337, 0.0
      %342 = vst.msk [vmem:[#allocation2 + $0x20] sm:$0xff] %vm337, 0.0
      %343 = vst.msk [vmem:[#allocation2 + $0x28] sm:$0xff] %vm337, 0.0
      %344 = vst.msk [vmem:[#allocation2 + $0x30] sm:$0xff] %vm337, 0.0
      %345 = vst.msk [vmem:[#allocation2 + $0x38] sm:$0xff] %vm337, 0.0
      %346 = vst.msk [vmem:[#allocation2 + $0x40] sm:$0xff] %vm337, 0.0
      %347 = vst.msk [vmem:[#allocation2 + $0x48] sm:$0xff] %vm337, 0.0
      %348 = vst.msk [vmem:[#allocation2 + $0x50] sm:$0xff] %vm337, 0.0
      %349 = vst.msk [vmem:[#allocation2 + $0x58] sm:$0xff] %vm337, 0.0
      %350 = vst.msk [vmem:[#allocation2 + $0x60] sm:$0xff] %vm337, 0.0
      %v351 = vld [vmem:[%s328] sm:$0xff]
      %v352 = vld [vmem:[%s328 + $0x8] sm:$0xff]
      %v353 = vld [vmem:[%s328 + $0x10] sm:$0xff]
      %v354 = vld [vmem:[%s328 + $0x18] sm:$0xff]
      %v355 = vld [vmem:[%s328 + $0x20] sm:$0xff]
      %v356 = vld [vmem:[%s328 + $0x28] sm:$0xff]
      %v357 = vld [vmem:[%s328 + $0x30] sm:$0xff]
      %v358 = vld [vmem:[%s328 + $0x38] sm:$0xff]
      %359 = vst.msk [vmem:[#allocation2 + $0xb] sm:$0xff] %vm337, %v351
      %360 = vst.msk [vmem:[#allocation2 + $0x15] sm:$0xff] %vm337, %v352
      %361 = vst.msk [vmem:[#allocation2 + $0x1f] sm:$0xff] %vm337, %v353
      %362 = vst.msk [vmem:[#allocation2 + $0x29] sm:$0xff] %vm337, %v354
      %363 = vst.msk [vmem:[#allocation2 + $0x33] sm:$0xff] %vm337, %v355
      %364 = vst.msk [vmem:[#allocation2 + $0x3d] sm:$0xff] %vm337, %v356
      %365 = vst.msk [vmem:[#allocation2 + $0x47] sm:$0xff] %vm337, %v357
      %366 = vst.msk [vmem:[#allocation2 + $0x51] sm:$0xff] %vm337, %v358
      %v367 = vld [vmem:[#allocation2] sm:$0xff]
      %v368 = vld [vmem:[#allocation2 + $0x8] sm:$0xff]
      %v369 = vld [vmem:[#allocation2 + $0x10] sm:$0xff]
      %v370 = vld [vmem:[#allocation2 + $0x18] sm:$0xff]
      %v371 = vld [vmem:[#allocation2 + $0x20] sm:$0xff]
      %v372 = vld [vmem:[#allocation2 + $0x28] sm:$0xff]
      %v373 = vld [vmem:[#allocation2 + $0x30] sm:$0xff]
      %v374 = vld [vmem:[#allocation2 + $0x38] sm:$0xff]
      %v375 = vld [vmem:[#allocation2 + $0x40] sm:$0xff]
      %v376 = vld [vmem:[#allocation2 + $0x48] sm:$0xff]
      %v377 = vpack.c.bf16 %v368, %v367
      %v378 = vpack.c.bf16 %v370, %v369
      %v379 = vpack.c.bf16 %v372, %v371
      %v380 = vpack.c.bf16 %v374, %v373
      %v381 = vpack.c.bf16 %v376, %v375
      %v382 = vld [vmem:[%s1] sm:$0xf]
      %v383 = vld [vmem:[%s1 + $0x4] sm:$0xf]
      %v384 = vld [vmem:[%s1 + $0x8] sm:$0xf]
      %v385 = vld [vmem:[%s1 + $0xc] sm:$0xf]
      %v386 = vld [vmem:[%s1 + $0x10] sm:$0xf]
      %v387 = vld [vmem:[%s1 + $0x14] sm:$0xf]
      %v388 = vld [vmem:[%s1 + $0x18] sm:$0xf]
      %v389 = vld [vmem:[%s1 + $0x1c] sm:$0xf]
      %v390 = vld [vmem:[#allocation2 + $0x1] sm:$0xff]
      %v391 = vld [vmem:[#allocation2 + $0x9] sm:$0xff]
      %v392 = vld [vmem:[#allocation2 + $0x11] sm:$0xff]
      %v393 = vld [vmem:[#allocation2 + $0x19] sm:$0xff]
      %v394 = vld [vmem:[#allocation2 + $0x21] sm:$0xff]
      %v395 = vld [vmem:[#allocation2 + $0x29] sm:$0xff]
      %v396 = vld [vmem:[#allocation2 + $0x31] sm:$0xff]
      %v397 = vld [vmem:[#allocation2 + $0x39] sm:$0xff]
      %v398 = vld [vmem:[#allocation2 + $0x41] sm:$0xff]
      %v399 = vld [vmem:[#allocation2 + $0x49] sm:$0xff]
      %v400 = vpack.c.bf16 %v391, %v390
      %v401 = vpack.c.bf16 %v393, %v392
      %v402 = vpack.c.bf16 %v395, %v394
      %v403 = vpack.c.bf16 %v397, %v396
      %v404 = vpack.c.bf16 %v399, %v398
      %v405 = vld [vmem:[%s1 + $0x20] sm:$0xf]
      %v406 = vld [vmem:[%s1 + $0x24] sm:$0xf]
      %v407 = vld [vmem:[%s1 + $0x28] sm:$0xf]
      %v408 = vld [vmem:[%s1 + $0x2c] sm:$0xf]
      %v409 = vld [vmem:[%s1 + $0x30] sm:$0xf]
      %v410 = vld [vmem:[%s1 + $0x34] sm:$0xf]
      %v411 = vld [vmem:[%s1 + $0x38] sm:$0xf]
      %v412 = vld [vmem:[%s1 + $0x3c] sm:$0xf]
      %v421 = vunpack.c.l.b16 %v405
      %v422 = vunpack.c.l.b16 %v406
      %v423 = vunpack.c.l.b16 %v407
      %v424 = vunpack.c.l.b16 %v408
      %v425 = vunpack.c.l.b16 %v409
      %v426 = vunpack.c.l.b16 %v410
      %v427 = vunpack.c.l.b16 %v411
      %v428 = vunpack.c.l.b16 %v412
      %v429 = vpack.c.b16 %v422, %v421
      %v430 = vpack.c.b16 %v424, %v423
      %v431 = vpack.c.b16 %v426, %v425
      %v432 = vpack.c.b16 %v428, %v427
      %v438 = vsel %vm337, %v400, 0
      %v441 = vsel %vm337, %v401, 0
      %v444 = vsel %vm337, %v402, 0
      %v447 = vsel %vm337, %v403, 0
      %v450 = vsel %vm337, %v404, 0
      %452 = vmatprep.subr.bf16.mxu0 0
      %453 = vmatpush1.bf16.msra.mxu0 %v429
      %454 = vmatprep.subr.bf16.mxu0 0
      %455 = vmatpush1.bf16.msra.mxu0 %v430
      %456 = vmatprep.subr.bf16.mxu0 0
      %457 = vmatpush1.bf16.msra.mxu0 %v431
      %458 = vmatprep.subr.bf16.mxu0 0
      %459 = vmatpush1.bf16.msra.mxu0 %v432
      %460 = vmatprep.subr.bf16.mxu0 0
      %461 = vmatpush1.bf16.msra.mxu0 0
      %462 = vmatprep.subr.bf16.mxu0 0
      %463 = vmatpush1.bf16.msra.mxu0 0
      %464 = vmatprep.subr.bf16.mxu0 0
      %465 = vmatpush1.bf16.msra.mxu0 0
      %466 = vmatprep.subr.bf16.mxu0 0
      %467 = vmatpush1.bf16.msra.mxu0 0
      %468 = vmatprep.subr.bf16.mxu0 0
      %469 = vmatpush1.bf16.msra.mxu0 0
      %470 = vmatprep.subr.bf16.mxu0 0
      %471 = vmatpush1.bf16.msra.mxu0 0
      %472 = vmatprep.subr.bf16.mxu0 0
      %473 = vmatpush1.bf16.msra.mxu0 0
      %474 = vmatprep.subr.bf16.mxu0 0
      %475 = vmatpush1.bf16.msra.mxu0 0
      %476 = vmatprep.subr.bf16.mxu0 0
      %477 = vmatpush1.bf16.msra.mxu0 0
      %478 = vmatprep.subr.bf16.mxu0 0
      %479 = vmatpush1.bf16.msra.mxu0 0
      %480 = vmatprep.subr.bf16.mxu0 0
      %481 = vmatpush1.bf16.msra.mxu0 0
      %482 = vmatprep.subr.bf16.mxu0 0
      %483 = vmatpush1.bf16.msra.mxu0 0
      %484 = vmatprep.mubr.bf16.mxu0 0
      %485 = vmatmul.mubr.bf16.gmra.mrb[0].mxu0 %v438
      %v486 = vpop.f32.mrb[0].mxu0
      %v487 = vadd.f32 0.0, %v486
      %v488 = vpop.f32.mrb[0].mxu0
      %v489 = vpop.f32.mrb[0].mxu0
      %v490 = vadd.f32 0.0, %v489
      %v491 = vpop.f32.mrb[0].mxu0
      %492 = vmatprep.mubr.bf16.mxu0 0
      %493 = vmatmul.mubr.bf16.gmra.mrb[0].mxu0 %v441
      %v494 = vpop.f32.mrb[0].mxu0
      %v495 = vadd.f32 0.0, %v494
      %v496 = vpop.f32.mrb[0].mxu0
      %v497 = vpop.f32.mrb[0].mxu0
      %v498 = vadd.f32 0.0, %v497
      %v499 = vpop.f32.mrb[0].mxu0
      %500 = vmatprep.mubr.bf16.mxu0 0
      %501 = vmatmul.mubr.bf16.gmra.mrb[0].mxu0 %v444
      %v502 = vpop.f32.mrb[0].mxu0
      %v503 = vadd.f32 0.0, %v502
      %v504 = vpop.f32.mrb[0].mxu0
      %v505 = vpop.f32.mrb[0].mxu0
      %v506 = vadd.f32 0.0, %v505
      %v507 = vpop.f32.mrb[0].mxu0
      %508 = vmatprep.mubr.bf16.mxu0 0
      %509 = vmatmul.mubr.bf16.gmra.mrb[0].mxu0 %v447
      %v510 = vpop.f32.mrb[0].mxu0
      %v511 = vadd.f32 0.0, %v510
      %v512 = vpop.f32.mrb[0].mxu0
      %v513 = vpop.f32.mrb[0].mxu0
      %v514 = vadd.f32 0.0, %v513
      %v515 = vpop.f32.mrb[0].mxu0
      %516 = vmatprep.mubr.bf16.mxu0 0
      %517 = vmatmul.mubr.bf16.gmra.mrb[0].mxu0 %v450
      %v518 = vpop.f32.mrb[0].mxu0
      %v519 = vadd.f32 0.0, %v518
      %v520 = vpop.f32.mrb[0].mxu0
      %v521 = vpop.f32.mrb[0].mxu0
      %v522 = vadd.f32 0.0, %v521
      %v523 = vpop.f32.mrb[0].mxu0
      %524 = vdwg.mxu0
      %v533 = vunpack.c.l.b16 %v382
      %v534 = vunpack.c.l.b16 %v383
      %v535 = vunpack.c.l.b16 %v384
      %v536 = vunpack.c.l.b16 %v385
      %v537 = vunpack.c.l.b16 %v386
      %v538 = vunpack.c.l.b16 %v387
      %v539 = vunpack.c.l.b16 %v388
      %v540 = vunpack.c.l.b16 %v389
      %v541 = vpack.c.b16 %v534, %v533
      %v542 = vpack.c.b16 %v536, %v535
      %v543 = vpack.c.b16 %v538, %v537
      %v544 = vpack.c.b16 %v540, %v539
      %v550 = vsel %vm337, %v377, 0
      %v553 = vsel %vm337, %v378, 0
      %v556 = vsel %vm337, %v379, 0
      %v559 = vsel %vm337, %v380, 0
      %v562 = vsel %vm337, %v381, 0
      %564 = vmatprep.subr.bf16.mxu0 0
      %565 = vmatpush1.bf16.msra.mxu0 %v541
      %566 = vmatprep.subr.bf16.mxu0 0
      %567 = vmatpush1.bf16.msra.mxu0 %v542
      %568 = vmatprep.subr.bf16.mxu0 0
      %569 = vmatpush1.bf16.msra.mxu0 %v543
      %570 = vmatprep.subr.bf16.mxu0 0
      %571 = vmatpush1.bf16.msra.mxu0 %v544
      %572 = vmatprep.subr.bf16.mxu0 0
      %573 = vmatpush1.bf16.msra.mxu0 0
      %574 = vmatprep.subr.bf16.mxu0 0
      %575 = vmatpush1.bf16.msra.mxu0 0
      %576 = vmatprep.subr.bf16.mxu0 0
      %577 = vmatpush1.bf16.msra.mxu0 0
      %578 = vmatprep.subr.bf16.mxu0 0
      %579 = vmatpush1.bf16.msra.mxu0 0
      %580 = vmatprep.subr.bf16.mxu0 0
      %581 = vmatpush1.bf16.msra.mxu0 0
      %582 = vmatprep.subr.bf16.mxu0 0
      %583 = vmatpush1.bf16.msra.mxu0 0
      %584 = vmatprep.subr.bf16.mxu0 0
      %585 = vmatpush1.bf16.msra.mxu0 0
      %586 = vmatprep.subr.bf16.mxu0 0
      %587 = vmatpush1.bf16.msra.mxu0 0
      %588 = vmatprep.subr.bf16.mxu0 0
      %589 = vmatpush1.bf16.msra.mxu0 0
      %590 = vmatprep.subr.bf16.mxu0 0
      %591 = vmatpush1.bf16.msra.mxu0 0
      %592 = vmatprep.subr.bf16.mxu0 0
      %593 = vmatpush1.bf16.msra.mxu0 0
      %594 = vmatprep.subr.bf16.mxu0 0
      %595 = vmatpush1.bf16.msra.mxu0 0
      %596 = vmatprep.mubr.bf16.mxu0 0
      %597 = vmatmul.mubr.bf16.gmra.mrb[0].mxu0 %v550
      %v598 = vpop.f32.mrb[0].mxu0
      %v599 = vadd.f32 %v487, %v598
      %v600 = vpop.f32.mrb[0].mxu0
      %v601 = vpop.f32.mrb[0].mxu0
      %v602 = vadd.f32 %v490, %v601
      %v603 = vpop.f32.mrb[0].mxu0
      %604 = vmatprep.mubr.bf16.mxu0 0
      %605 = vmatmul.mubr.bf16.gmra.mrb[0].mxu0 %v553
      %v606 = vpop.f32.mrb[0].mxu0
      %v607 = vadd.f32 %v495, %v606
      %v608 = vpop.f32.mrb[0].mxu0
      %v609 = vpop.f32.mrb[0].mxu0
      %v610 = vadd.f32 %v498, %v609
      %v611 = vpop.f32.mrb[0].mxu0
      %612 = vmatprep.mubr.bf16.mxu0 0
      %613 = vmatmul.mubr.bf16.gmra.mrb[0].mxu0 %v556
      %v614 = vpop.f32.mrb[0].mxu0
      %v615 = vadd.f32 %v503, %v614
      %v616 = vpop.f32.mrb[0].mxu0
      %v617 = vpop.f32.mrb[0].mxu0
      %v618 = vadd.f32 %v506, %v617
      %v619 = vpop.f32.mrb[0].mxu0
      %620 = vmatprep.mubr.bf16.mxu0 0
      %621 = vmatmul.mubr.bf16.gmra.mrb[0].mxu0 %v559
      %v622 = vpop.f32.mrb[0].mxu0
      %v623 = vadd.f32 %v511, %v622
      %v624 = vpop.f32.mrb[0].mxu0
      %v625 = vpop.f32.mrb[0].mxu0
      %v626 = vadd.f32 %v514, %v625
      %v627 = vpop.f32.mrb[0].mxu0
      %628 = vmatprep.mubr.bf16.mxu0 0
      %629 = vmatmul.mubr.bf16.gmra.mrb[0].mxu0 %v562
      %v630 = vpop.f32.mrb[0].mxu0
      %v631 = vadd.f32 %v519, %v630
      %v632 = vpop.f32.mrb[0].mxu0
      %v633 = vpop.f32.mrb[0].mxu0
      %v634 = vadd.f32 %v522, %v633
      %v635 = vpop.f32.mrb[0].mxu0
      %636 = vdwg.mxu0
      %v637 = vld [vmem:[#allocation2 + $0x2] sm:$0xff]
      %v638 = vld [vmem:[#allocation2 + $0xa] sm:$0xff]
      %v639 = vld [vmem:[#allocation2 + $0x12] sm:$0xff]
      %v640 = vld [vmem:[#allocation2 + $0x1a] sm:$0xff]
      %v641 = vld [vmem:[#allocation2 + $0x22] sm:$0xff]
      %v642 = vld [vmem:[#allocation2 + $0x2a] sm:$0xff]
      %v643 = vld [vmem:[#allocation2 + $0x32] sm:$0xff]
      %v644 = vld [vmem:[#allocation2 + $0x3a] sm:$0xff]
      %v645 = vld [vmem:[#allocation2 + $0x42] sm:$0xff]
      %v646 = vld [vmem:[#allocation2 + $0x4a] sm:$0xff]
      %v647 = vpack.c.bf16 %v638, %v637
      %v648 = vpack.c.bf16 %v640, %v639
      %v649 = vpack.c.bf16 %v642, %v641
      %v650 = vpack.c.bf16 %v644, %v643
      %v651 = vpack.c.bf16 %v646, %v645
      %v652 = vld [vmem:[%s1 + $0x40] sm:$0xf]
      %v653 = vld [vmem:[%s1 + $0x44] sm:$0xf]
      %v654 = vld [vmem:[%s1 + $0x48] sm:$0xf]
      %v655 = vld [vmem:[%s1 + $0x4c] sm:$0xf]
      %v656 = vld [vmem:[%s1 + $0x50] sm:$0xf]
      %v657 = vld [vmem:[%s1 + $0x54] sm:$0xf]
      %v658 = vld [vmem:[%s1 + $0x58] sm:$0xf]
      %v659 = vld [vmem:[%s1 + $0x5c] sm:$0xf]
      %v668 = vunpack.c.l.b16 %v652
      %v669 = vunpack.c.l.b16 %v653
      %v670 = vunpack.c.l.b16 %v654
      %v671 = vunpack.c.l.b16 %v655
      %v672 = vunpack.c.l.b16 %v656
      %v673 = vunpack.c.l.b16 %v657
      %v674 = vunpack.c.l.b16 %v658
      %v675 = vunpack.c.l.b16 %v659
      %v676 = vpack.c.b16 %v669, %v668
      %v677 = vpack.c.b16 %v671, %v670
      %v678 = vpack.c.b16 %v673, %v672
      %v679 = vpack.c.b16 %v675, %v674
      %v685 = vsel %vm337, %v647, 0
      %v688 = vsel %vm337, %v648, 0
      %v691 = vsel %vm337, %v649, 0
      %v694 = vsel %vm337, %v650, 0
      %v697 = vsel %vm337, %v651, 0
      %699 = vmatprep.subr.bf16.mxu0 0
      %700 = vmatpush1.bf16.msra.mxu0 %v676
      %701 = vmatprep.subr.bf16.mxu0 0
      %702 = vmatpush1.bf16.msra.mxu0 %v677
      %703 = vmatprep.subr.bf16.mxu0 0
      %704 = vmatpush1.bf16.msra.mxu0 %v678
      %705 = vmatprep.subr.bf16.mxu0 0
      %706 = vmatpush1.bf16.msra.mxu0 %v679
      %707 = vmatprep.subr.bf16.mxu0 0
      %708 = vmatpush1.bf16.msra.mxu0 0
      %709 = vmatprep.subr.bf16.mxu0 0
      %710 = vmatpush1.bf16.msra.mxu0 0
      %711 = vmatprep.subr.bf16.mxu0 0
      %712 = vmatpush1.bf16.msra.mxu0 0
      %713 = vmatprep.subr.bf16.mxu0 0
      %714 = vmatpush1.bf16.msra.mxu0 0
      %715 = vmatprep.subr.bf16.mxu0 0
      %716 = vmatpush1.bf16.msra.mxu0 0
      %717 = vmatprep.subr.bf16.mxu0 0
      %718 = vmatpush1.bf16.msra.mxu0 0
      %719 = vmatprep.subr.bf16.mxu0 0
      %720 = vmatpush1.bf16.msra.mxu0 0
      %721 = vmatprep.subr.bf16.mxu0 0
      %722 = vmatpush1.bf16.msra.mxu0 0
      %723 = vmatprep.subr.bf16.mxu0 0
      %724 = vmatpush1.bf16.msra.mxu0 0
      %725 = vmatprep.subr.bf16.mxu0 0
      %726 = vmatpush1.bf16.msra.mxu0 0
      %727 = vmatprep.subr.bf16.mxu0 0
      %728 = vmatpush1.bf16.msra.mxu0 0
      %729 = vmatprep.subr.bf16.mxu0 0
      %730 = vmatpush1.bf16.msra.mxu0 0
      %731 = vmatprep.mubr.bf16.mxu0 0
      %732 = vmatmul.mubr.bf16.gmra.mrb[0].mxu0 %v685
      %v733 = vpop.f32.mrb[0].mxu0
      %v734 = vadd.f32 0.0, %v733
      %v735 = vpop.f32.mrb[0].mxu0
      %v736 = vpop.f32.mrb[0].mxu0
      %v737 = vadd.f32 0.0, %v736
      %v738 = vpop.f32.mrb[0].mxu0
      %739 = vmatprep.mubr.bf16.mxu0 0
      %740 = vmatmul.mubr.bf16.gmra.mrb[0].mxu0 %v688
      %v741 = vpop.f32.mrb[0].mxu0
      %v742 = vadd.f32 0.0, %v741
      %v743 = vpop.f32.mrb[0].mxu0
      %v744 = vpop.f32.mrb[0].mxu0
      %v745 = vadd.f32 0.0, %v744
      %v746 = vpop.f32.mrb[0].mxu0
      %747 = vmatprep.mubr.bf16.mxu0 0
      %748 = vmatmul.mubr.bf16.gmra.mrb[0].mxu0 %v691
      %v749 = vpop.f32.mrb[0].mxu0
      %v750 = vadd.f32 0.0, %v749
      %v751 = vpop.f32.mrb[0].mxu0
      %v752 = vpop.f32.mrb[0].mxu0
      %v753 = vadd.f32 0.0, %v752
      %v754 = vpop.f32.mrb[0].mxu0
      %755 = vmatprep.mubr.bf16.mxu0 0
      %756 = vmatmul.mubr.bf16.gmra.mrb[0].mxu0 %v694
      %v757 = vpop.f32.mrb[0].mxu0
      %v758 = vadd.f32 0.0, %v757
      %v759 = vpop.f32.mrb[0].mxu0
      %v760 = vpop.f32.mrb[0].mxu0
      %v761 = vadd.f32 0.0, %v760
      %v762 = vpop.f32.mrb[0].mxu0
      %763 = vmatprep.mubr.bf16.mxu0 0
      %764 = vmatmul.mubr.bf16.gmra.mrb[0].mxu0 %v697
      %v765 = vpop.f32.mrb[0].mxu0
      %v766 = vadd.f32 0.0, %v765
      %v767 = vpop.f32.mrb[0].mxu0
      %v768 = vpop.f32.mrb[0].mxu0
      %v769 = vadd.f32 0.0, %v768
      %v770 = vpop.f32.mrb[0].mxu0
      %771 = vdwg.mxu0
      %v772 = vadd.f32 %v599, %v734
      %v773 = vadd.f32 %v602, %v737
      %v774 = vadd.f32 %v607, %v742
      %v775 = vadd.f32 %v610, %v745
      %v776 = vadd.f32 %v615, %v750
      %v777 = vadd.f32 %v618, %v753
      %v778 = vadd.f32 %v623, %v758
      %v779 = vadd.f32 %v626, %v761
      %v780 = vadd.f32 %v631, %v766
      %v781 = vadd.f32 %v634, %v769
      %v782 = vld [vmem:[#allocation2 + $0xa] sm:$0xff]
      %v783 = vld [vmem:[#allocation2 + $0x12] sm:$0xff]
      %v784 = vld [vmem:[#allocation2 + $0x1a] sm:$0xff]
      %v785 = vld [vmem:[#allocation2 + $0x22] sm:$0xff]
      %v786 = vld [vmem:[#allocation2 + $0x2a] sm:$0xff]
      %v787 = vld [vmem:[#allocation2 + $0x32] sm:$0xff]
      %v788 = vld [vmem:[#allocation2 + $0x3a] sm:$0xff]
      %v789 = vld [vmem:[#allocation2 + $0x42] sm:$0xff]
      %v790 = vld [vmem:[#allocation2 + $0x4a] sm:$0xff]
      %v791 = vld [vmem:[#allocation2 + $0x52] sm:$0xff]
      %v792 = vpack.c.bf16 %v783, %v782
      %v793 = vpack.c.bf16 %v785, %v784
      %v794 = vpack.c.bf16 %v787, %v786
      %v795 = vpack.c.bf16 %v789, %v788
      %v796 = vpack.c.bf16 %v791, %v790
      %v797 = vld [vmem:[%s1 + $0x60] sm:$0xf]
      %v798 = vld [vmem:[%s1 + $0x64] sm:$0xf]
      %v799 = vld [vmem:[%s1 + $0x68] sm:$0xf]
      %v800 = vld [vmem:[%s1 + $0x6c] sm:$0xf]
      %v801 = vld [vmem:[%s1 + $0x70] sm:$0xf]
      %v802 = vld [vmem:[%s1 + $0x74] sm:$0xf]
      %v803 = vld [vmem:[%s1 + $0x78] sm:$0xf]
      %v804 = vld [vmem:[%s1 + $0x7c] sm:$0xf]
      %v813 = vunpack.c.l.b16 %v797
      %v814 = vunpack.c.l.b16 %v798
      %v815 = vunpack.c.l.b16 %v799
      %v816 = vunpack.c.l.b16 %v800
      %v817 = vunpack.c.l.b16 %v801
      %v818 = vunpack.c.l.b16 %v802
      %v819 = vunpack.c.l.b16 %v803
      %v820 = vunpack.c.l.b16 %v804
      %v821 = vpack.c.b16 %v814, %v813
      %v822 = vpack.c.b16 %v816, %v815
      %v823 = vpack.c.b16 %v818, %v817
      %v824 = vpack.c.b16 %v820, %v819
      %v830 = vsel %vm337, %v792, 0
      %v833 = vsel %vm337, %v793, 0
      %v836 = vsel %vm337, %v794, 0
      %v839 = vsel %vm337, %v795, 0
      %v842 = vsel %vm337, %v796, 0
      %844 = vmatprep.subr.bf16.mxu0 0
      %845 = vmatpush1.bf16.msra.mxu0 %v821
      %846 = vmatprep.subr.bf16.mxu0 0
      %847 = vmatpush1.bf16.msra.mxu0 %v822
      %848 = vmatprep.subr.bf16.mxu0 0
      %849 = vmatpush1.bf16.msra.mxu0 %v823
      %850 = vmatprep.subr.bf16.mxu0 0
      %851 = vmatpush1.bf16.msra.mxu0 %v824
      %852 = vmatprep.subr.bf16.mxu0 0
      %853 = vmatpush1.bf16.msra.mxu0 0
      %854 = vmatprep.subr.bf16.mxu0 0
      %855 = vmatpush1.bf16.msra.mxu0 0
      %856 = vmatprep.subr.bf16.mxu0 0
      %857 = vmatpush1.bf16.msra.mxu0 0
      %858 = vmatprep.subr.bf16.mxu0 0
      %859 = vmatpush1.bf16.msra.mxu0 0
      %860 = vmatprep.subr.bf16.mxu0 0
      %861 = vmatpush1.bf16.msra.mxu0 0
      %862 = vmatprep.subr.bf16.mxu0 0
      %863 = vmatpush1.bf16.msra.mxu0 0
      %864 = vmatprep.subr.bf16.mxu0 0
      %865 = vmatpush1.bf16.msra.mxu0 0
      %866 = vmatprep.subr.bf16.mxu0 0
      %867 = vmatpush1.bf16.msra.mxu0 0
      %868 = vmatprep.subr.bf16.mxu0 0
      %869 = vmatpush1.bf16.msra.mxu0 0
      %870 = vmatprep.subr.bf16.mxu0 0
      %871 = vmatpush1.bf16.msra.mxu0 0
      %872 = vmatprep.subr.bf16.mxu0 0
      %873 = vmatpush1.bf16.msra.mxu0 0
      %874 = vmatprep.subr.bf16.mxu0 0
      %875 = vmatpush1.bf16.msra.mxu0 0
      %876 = vmatprep.mubr.bf16.mxu0 0
      %877 = vmatmul.mubr.bf16.gmra.mrb[0].mxu0 %v830
      %v878 = vpop.f32.mrb[0].mxu0
      %v879 = vadd.f32 0.0, %v878
      %v880 = vpop.f32.mrb[0].mxu0
      %v881 = vpop.f32.mrb[0].mxu0
      %v882 = vadd.f32 0.0, %v881
      %v883 = vpop.f32.mrb[0].mxu0
      %884 = vmatprep.mubr.bf16.mxu0 0
      %885 = vmatmul.mubr.bf16.gmra.mrb[0].mxu0 %v833
      %v886 = vpop.f32.mrb[0].mxu0
      %v887 = vadd.f32 0.0, %v886
      %v888 = vpop.f32.mrb[0].mxu0
      %v889 = vpop.f32.mrb[0].mxu0
      %v890 = vadd.f32 0.0, %v889
      %v891 = vpop.f32.mrb[0].mxu0
      %892 = vmatprep.mubr.bf16.mxu0 0
      %893 = vmatmul.mubr.bf16.gmra.mrb[0].mxu0 %v836
      %v894 = vpop.f32.mrb[0].mxu0
      %v895 = vadd.f32 0.0, %v894
      %v896 = vpop.f32.mrb[0].mxu0
      %v897 = vpop.f32.mrb[0].mxu0
      %v898 = vadd.f32 0.0, %v897
      %v899 = vpop.f32.mrb[0].mxu0
      %900 = vmatprep.mubr.bf16.mxu0 0
      %901 = vmatmul.mubr.bf16.gmra.mrb[0].mxu0 %v839
      %v902 = vpop.f32.mrb[0].mxu0
      %v903 = vadd.f32 0.0, %v902
      %v904 = vpop.f32.mrb[0].mxu0
      %v905 = vpop.f32.mrb[0].mxu0
      %v906 = vadd.f32 0.0, %v905
      %v907 = vpop.f32.mrb[0].mxu0
      %908 = vmatprep.mubr.bf16.mxu0 0
      %909 = vmatmul.mubr.bf16.gmra.mrb[0].mxu0 %v842
      %v910 = vpop.f32.mrb[0].mxu0
      %v911 = vadd.f32 0.0, %v910
      %v912 = vpop.f32.mrb[0].mxu0
      %v913 = vpop.f32.mrb[0].mxu0
      %v914 = vadd.f32 0.0, %v913
      %v915 = vpop.f32.mrb[0].mxu0
      %916 = vdwg.mxu0
      %v917 = vadd.f32 %v772, %v879
      %v918 = vadd.f32 %v773, %v882
      %v919 = vadd.f32 %v774, %v887
      %v920 = vadd.f32 %v775, %v890
      %v921 = vadd.f32 %v776, %v895
      %v922 = vadd.f32 %v777, %v898
      %v923 = vadd.f32 %v778, %v903
      %v924 = vadd.f32 %v779, %v906
      %v925 = vadd.f32 %v780, %v911
      %v926 = vadd.f32 %v781, %v914
      %v927 = vld [vmem:[#allocation2 + $0xb] sm:$0xff]
      %v928 = vld [vmem:[#allocation2 + $0x13] sm:$0xff]
      %v929 = vld [vmem:[#allocation2 + $0x1b] sm:$0xff]
      %v930 = vld [vmem:[#allocation2 + $0x23] sm:$0xff]
      %v931 = vld [vmem:[#allocation2 + $0x2b] sm:$0xff]
      %v932 = vld [vmem:[#allocation2 + $0x33] sm:$0xff]
      %v933 = vld [vmem:[#allocation2 + $0x3b] sm:$0xff]
      %v934 = vld [vmem:[#allocation2 + $0x43] sm:$0xff]
      %v935 = vld [vmem:[#allocation2 + $0x4b] sm:$0xff]
      %v936 = vld [vmem:[#allocation2 + $0x53] sm:$0xff]
      %v937 = vpack.c.bf16 %v928, %v927
      %v938 = vpack.c.bf16 %v930, %v929
      %v939 = vpack.c.bf16 %v932, %v931
      %v940 = vpack.c.bf16 %v934, %v933
      %v941 = vpack.c.bf16 %v936, %v935
      %v942 = vld [vmem:[%s1 + $0x80] sm:$0xf]
      %v943 = vld [vmem:[%s1 + $0x84] sm:$0xf]
      %v944 = vld [vmem:[%s1 + $0x88] sm:$0xf]
      %v945 = vld [vmem:[%s1 + $0x8c] sm:$0xf]
      %v946 = vld [vmem:[%s1 + $0x90] sm:$0xf]
      %v947 = vld [vmem:[%s1 + $0x94] sm:$0xf]
      %v948 = vld [vmem:[%s1 + $0x98] sm:$0xf]
      %v949 = vld [vmem:[%s1 + $0x9c] sm:$0xf]
      %v958 = vunpack.c.l.b16 %v942
      %v959 = vunpack.c.l.b16 %v943
      %v960 = vunpack.c.l.b16 %v944
      %v961 = vunpack.c.l.b16 %v945
      %v962 = vunpack.c.l.b16 %v946
      %v963 = vunpack.c.l.b16 %v947
      %v964 = vunpack.c.l.b16 %v948
      %v965 = vunpack.c.l.b16 %v949
      %v966 = vpack.c.b16 %v959, %v958
      %v967 = vpack.c.b16 %v961, %v960
      %v968 = vpack.c.b16 %v963, %v962
      %v969 = vpack.c.b16 %v965, %v964
      %v975 = vsel %vm337, %v937, 0
      %v978 = vsel %vm337, %v938, 0
      %v981 = vsel %vm337, %v939, 0
      %v984 = vsel %vm337, %v940, 0
      %v987 = vsel %vm337, %v941, 0
      %989 = vmatprep.subr.bf16.mxu0 0
      %990 = vmatpush1.bf16.msra.mxu0 %v966
      %991 = vmatprep.subr.bf16.mxu0 0
      %992 = vmatpush1.bf16.msra.mxu0 %v967
      %993 = vmatprep.subr.bf16.mxu0 0
      %994 = vmatpush1.bf16.msra.mxu0 %v968
      %995 = vmatprep.subr.bf16.mxu0 0
      %996 = vmatpush1.bf16.msra.mxu0 %v969
      %997 = vmatprep.subr.bf16.mxu0 0
      %998 = vmatpush1.bf16.msra.mxu0 0
      %999 = vmatprep.subr.bf16.mxu0 0
      %1000 = vmatpush1.bf16.msra.mxu0 0
      %1001 = vmatprep.subr.bf16.mxu0 0
      %1002 = vmatpush1.bf16.msra.mxu0 0
      %1003 = vmatprep.subr.bf16.mxu0 0
      %1004 = vmatpush1.bf16.msra.mxu0 0
      %1005 = vmatprep.subr.bf16.mxu0 0
      %1006 = vmatpush1.bf16.msra.mxu0 0
      %1007 = vmatprep.subr.bf16.mxu0 0
      %1008 = vmatpush1.bf16.msra.mxu0 0
      %1009 = vmatprep.subr.bf16.mxu0 0
      %1010 = vmatpush1.bf16.msra.mxu0 0
      %1011 = vmatprep.subr.bf16.mxu0 0
      %1012 = vmatpush1.bf16.msra.mxu0 0
      %1013 = vmatprep.subr.bf16.mxu0 0
      %1014 = vmatpush1.bf16.msra.mxu0 0
      %1015 = vmatprep.subr.bf16.mxu0 0
      %1016 = vmatpush1.bf16.msra.mxu0 0
      %1017 = vmatprep.subr.bf16.mxu0 0
      %1018 = vmatpush1.bf16.msra.mxu0 0
      %1019 = vmatprep.subr.bf16.mxu0 0
      %1020 = vmatpush1.bf16.msra.mxu0 0
      %1021 = vmatprep.mubr.bf16.mxu0 0
      %1022 = vmatmul.mubr.bf16.gmra.mrb[0].mxu0 %v975
      %v1023 = vpop.f32.mrb[0].mxu0
      %v1024 = vadd.f32 0.0, %v1023
      %v1025 = vpop.f32.mrb[0].mxu0
      %v1026 = vpop.f32.mrb[0].mxu0
      %v1027 = vadd.f32 0.0, %v1026
      %v1028 = vpop.f32.mrb[0].mxu0
      %1029 = vmatprep.mubr.bf16.mxu0 0
      %1030 = vmatmul.mubr.bf16.gmra.mrb[0].mxu0 %v978
      %v1031 = vpop.f32.mrb[0].mxu0
      %v1032 = vadd.f32 0.0, %v1031
      %v1033 = vpop.f32.mrb[0].mxu0
      %v1034 = vpop.f32.mrb[0].mxu0
      %v1035 = vadd.f32 0.0, %v1034
      %v1036 = vpop.f32.mrb[0].mxu0
      %1037 = vmatprep.mubr.bf16.mxu0 0
      %1038 = vmatmul.mubr.bf16.gmra.mrb[0].mxu0 %v981
      %v1039 = vpop.f32.mrb[0].mxu0
      %v1040 = vadd.f32 0.0, %v1039
      %v1041 = vpop.f32.mrb[0].mxu0
      %v1042 = vpop.f32.mrb[0].mxu0
      %v1043 = vadd.f32 0.0, %v1042
      %v1044 = vpop.f32.mrb[0].mxu0
      %1045 = vmatprep.mubr.bf16.mxu0 0
      %1046 = vmatmul.mubr.bf16.gmra.mrb[0].mxu0 %v984
      %v1047 = vpop.f32.mrb[0].mxu0
      %v1048 = vadd.f32 0.0, %v1047
      %v1049 = vpop.f32.mrb[0].mxu0
      %v1050 = vpop.f32.mrb[0].mxu0
      %v1051 = vadd.f32 0.0, %v1050
      %v1052 = vpop.f32.mrb[0].mxu0
      %1053 = vmatprep.mubr.bf16.mxu0 0
      %1054 = vmatmul.mubr.bf16.gmra.mrb[0].mxu0 %v987
      %v1055 = vpop.f32.mrb[0].mxu0
      %v1056 = vadd.f32 0.0, %v1055
      %v1057 = vpop.f32.mrb[0].mxu0
      %v1058 = vpop.f32.mrb[0].mxu0
      %v1059 = vadd.f32 0.0, %v1058
      %v1060 = vpop.f32.mrb[0].mxu0
      %1061 = vdwg.mxu0
      %v1062 = vadd.f32 %v917, %v1024
      %v1063 = vadd.f32 %v918, %v1027
      %v1064 = vadd.f32 %v919, %v1032
      %v1065 = vadd.f32 %v920, %v1035
      %v1066 = vadd.f32 %v921, %v1040
      %v1067 = vadd.f32 %v922, %v1043
      %v1068 = vadd.f32 %v923, %v1048
      %v1069 = vadd.f32 %v924, %v1051
      %v1070 = vadd.f32 %v925, %v1056
      %v1071 = vadd.f32 %v926, %v1059
      %v1072 = vld [vmem:[#allocation2 + $0xc] sm:$0xff]
      %v1073 = vld [vmem:[#allocation2 + $0x14] sm:$0xff]
      %v1074 = vld [vmem:[#allocation2 + $0x1c] sm:$0xff]
      %v1075 = vld [vmem:[#allocation2 + $0x24] sm:$0xff]
      %v1076 = vld [vmem:[#allocation2 + $0x2c] sm:$0xff]
      %v1077 = vld [vmem:[#allocation2 + $0x34] sm:$0xff]
      %v1078 = vld [vmem:[#allocation2 + $0x3c] sm:$0xff]
      %v1079 = vld [vmem:[#allocation2 + $0x44] sm:$0xff]
      %v1080 = vld [vmem:[#allocation2 + $0x4c] sm:$0xff]
      %v1081 = vld [vmem:[#allocation2 + $0x54] sm:$0xff]
      %v1082 = vpack.c.bf16 %v1073, %v1072
      %v1083 = vpack.c.bf16 %v1075, %v1074
      %v1084 = vpack.c.bf16 %v1077, %v1076
      %v1085 = vpack.c.bf16 %v1079, %v1078
      %v1086 = vpack.c.bf16 %v1081, %v1080
      %v1087 = vld [vmem:[%s1 + $0xa0] sm:$0xf]
      %v1088 = vld [vmem:[%s1 + $0xa4] sm:$0xf]
      %v1089 = vld [vmem:[%s1 + $0xa8] sm:$0xf]
      %v1090 = vld [vmem:[%s1 + $0xac] sm:$0xf]
      %v1091 = vld [vmem:[%s1 + $0xb0] sm:$0xf]
      %v1092 = vld [vmem:[%s1 + $0xb4] sm:$0xf]
      %v1093 = vld [vmem:[%s1 + $0xb8] sm:$0xf]
      %v1094 = vld [vmem:[%s1 + $0xbc] sm:$0xf]
      %v1103 = vunpack.c.l.b16 %v1087
      %v1104 = vunpack.c.l.b16 %v1088
      %v1105 = vunpack.c.l.b16 %v1089
      %v1106 = vunpack.c.l.b16 %v1090
      %v1107 = vunpack.c.l.b16 %v1091
      %v1108 = vunpack.c.l.b16 %v1092
      %v1109 = vunpack.c.l.b16 %v1093
      %v1110 = vunpack.c.l.b16 %v1094
      %v1111 = vpack.c.b16 %v1104, %v1103
      %v1112 = vpack.c.b16 %v1106, %v1105
      %v1113 = vpack.c.b16 %v1108, %v1107
      %v1114 = vpack.c.b16 %v1110, %v1109
      %v1120 = vsel %vm337, %v1082, 0
      %v1123 = vsel %vm337, %v1083, 0
      %v1126 = vsel %vm337, %v1084, 0
      %v1129 = vsel %vm337, %v1085, 0
      %v1132 = vsel %vm337, %v1086, 0
      %1134 = vmatprep.subr.bf16.mxu0 0
      %1135 = vmatpush1.bf16.msra.mxu0 %v1111
      %1136 = vmatprep.subr.bf16.mxu0 0
      %1137 = vmatpush1.bf16.msra.mxu0 %v1112
      %1138 = vmatprep.subr.bf16.mxu0 0
      %1139 = vmatpush1.bf16.msra.mxu0 %v1113
      %1140 = vmatprep.subr.bf16.mxu0 0
      %1141 = vmatpush1.bf16.msra.mxu0 %v1114
      %1142 = vmatprep.subr.bf16.mxu0 0
      %1143 = vmatpush1.bf16.msra.mxu0 0
      %1144 = vmatprep.subr.bf16.mxu0 0
      %1145 = vmatpush1.bf16.msra.mxu0 0
      %1146 = vmatprep.subr.bf16.mxu0 0
      %1147 = vmatpush1.bf16.msra.mxu0 0
      %1148 = vmatprep.subr.bf16.mxu0 0
      %1149 = vmatpush1.bf16.msra.mxu0 0
      %1150 = vmatprep.subr.bf16.mxu0 0
      %1151 = vmatpush1.bf16.msra.mxu0 0
      %1152 = vmatprep.subr.bf16.mxu0 0
      %1153 = vmatpush1.bf16.msra.mxu0 0
      %1154 = vmatprep.subr.bf16.mxu0 0
      %1155 = vmatpush1.bf16.msra.mxu0 0
      %1156 = vmatprep.subr.bf16.mxu0 0
      %1157 = vmatpush1.bf16.msra.mxu0 0
      %1158 = vmatprep.subr.bf16.mxu0 0
      %1159 = vmatpush1.bf16.msra.mxu0 0
      %1160 = vmatprep.subr.bf16.mxu0 0
      %1161 = vmatpush1.bf16.msra.mxu0 0
      %1162 = vmatprep.subr.bf16.mxu0 0
      %1163 = vmatpush1.bf16.msra.mxu0 0
      %1164 = vmatprep.subr.bf16.mxu0 0
      %1165 = vmatpush1.bf16.msra.mxu0 0
      %1166 = vmatprep.mubr.bf16.mxu0 0
      %1167 = vmatmul.mubr.bf16.gmra.mrb[0].mxu0 %v1120
      %v1168 = vpop.f32.mrb[0].mxu0
      %v1169 = vadd.f32 0.0, %v1168
      %v1170 = vpop.f32.mrb[0].mxu0
      %v1171 = vpop.f32.mrb[0].mxu0
      %v1172 = vadd.f32 0.0, %v1171
      %v1173 = vpop.f32.mrb[0].mxu0
      %1174 = vmatprep.mubr.bf16.mxu0 0
      %1175 = vmatmul.mubr.bf16.gmra.mrb[0].mxu0 %v1123
      %v1176 = vpop.f32.mrb[0].mxu0
      %v1177 = vadd.f32 0.0, %v1176
      %v1178 = vpop.f32.mrb[0].mxu0
      %v1179 = vpop.f32.mrb[0].mxu0
      %v1180 = vadd.f32 0.0, %v1179
      %v1181 = vpop.f32.mrb[0].mxu0
      %1182 = vmatprep.mubr.bf16.mxu0 0
      %1183 = vmatmul.mubr.bf16.gmra.mrb[0].mxu0 %v1126
      %v1184 = vpop.f32.mrb[0].mxu0
      %v1185 = vadd.f32 0.0, %v1184
      %v1186 = vpop.f32.mrb[0].mxu0
      %v1187 = vpop.f32.mrb[0].mxu0
      %v1188 = vadd.f32 0.0, %v1187
      %v1189 = vpop.f32.mrb[0].mxu0
      %1190 = vmatprep.mubr.bf16.mxu0 0
      %1191 = vmatmul.mubr.bf16.gmra.mrb[0].mxu0 %v1129
      %v1192 = vpop.f32.mrb[0].mxu0
      %v1193 = vadd.f32 0.0, %v1192
      %v1194 = vpop.f32.mrb[0].mxu0
      %v1195 = vpop.f32.mrb[0].mxu0
      %v1196 = vadd.f32 0.0, %v1195
      %v1197 = vpop.f32.mrb[0].mxu0
      %1198 = vmatprep.mubr.bf16.mxu0 0
      %1199 = vmatmul.mubr.bf16.gmra.mrb[0].mxu0 %v1132
      %v1200 = vpop.f32.mrb[0].mxu0
      %v1201 = vadd.f32 0.0, %v1200
      %v1202 = vpop.f32.mrb[0].mxu0
      %v1203 = vpop.f32.mrb[0].mxu0
      %v1204 = vadd.f32 0.0, %v1203
      %v1205 = vpop.f32.mrb[0].mxu0
      %1206 = vdwg.mxu0
      %v1207 = vadd.f32 %v1062, %v1169
      %v1208 = vadd.f32 %v1063, %v1172
      %v1209 = vadd.f32 %v1064, %v1177
      %v1210 = vadd.f32 %v1065, %v1180
      %v1211 = vadd.f32 %v1066, %v1185
      %v1212 = vadd.f32 %v1067, %v1188
      %v1213 = vadd.f32 %v1068, %v1193
      %v1214 = vadd.f32 %v1069, %v1196
      %v1215 = vadd.f32 %v1070, %v1201
      %v1216 = vadd.f32 %v1071, %v1204
      %v1217 = vld [vmem:[#allocation2 + $0x14] sm:$0xff]
      %v1218 = vld [vmem:[#allocation2 + $0x1c] sm:$0xff]
      %v1219 = vld [vmem:[#allocation2 + $0x24] sm:$0xff]
      %v1220 = vld [vmem:[#allocation2 + $0x2c] sm:$0xff]
      %v1221 = vld [vmem:[#allocation2 + $0x34] sm:$0xff]
      %v1222 = vld [vmem:[#allocation2 + $0x3c] sm:$0xff]
      %v1223 = vld [vmem:[#allocation2 + $0x44] sm:$0xff]
      %v1224 = vld [vmem:[#allocation2 + $0x4c] sm:$0xff]
      %v1225 = vld [vmem:[#allocation2 + $0x54] sm:$0xff]
      %v1226 = vld [vmem:[#allocation2 + $0x5c] sm:$0xff]
      %v1227 = vpack.c.bf16 %v1218, %v1217
      %v1228 = vpack.c.bf16 %v1220, %v1219
      %v1229 = vpack.c.bf16 %v1222, %v1221
      %v1230 = vpack.c.bf16 %v1224, %v1223
      %v1231 = vpack.c.bf16 %v1226, %v1225
      %v1232 = vld [vmem:[%s1 + $0xc0] sm:$0xf]
      %v1233 = vld [vmem:[%s1 + $0xc4] sm:$0xf]
      %v1234 = vld [vmem:[%s1 + $0xc8] sm:$0xf]
      %v1235 = vld [vmem:[%s1 + $0xcc] sm:$0xf]
      %v1236 = vld [vmem:[%s1 + $0xd0] sm:$0xf]
      %v1237 = vld [vmem:[%s1 + $0xd4] sm:$0xf]
      %v1238 = vld [vmem:[%s1 + $0xd8] sm:$0xf]
      %v1239 = vld [vmem:[%s1 + $0xdc] sm:$0xf]
      %v1248 = vunpack.c.l.b16 %v1232
      %v1249 = vunpack.c.l.b16 %v1233
      %v1250 = vunpack.c.l.b16 %v1234
      %v1251 = vunpack.c.l.b16 %v1235
      %v1252 = vunpack.c.l.b16 %v1236
      %v1253 = vunpack.c.l.b16 %v1237
      %v1254 = vunpack.c.l.b16 %v1238
      %v1255 = vunpack.c.l.b16 %v1239
      %v1256 = vpack.c.b16 %v1249, %v1248
      %v1257 = vpack.c.b16 %v1251, %v1250
      %v1258 = vpack.c.b16 %v1253, %v1252
      %v1259 = vpack.c.b16 %v1255, %v1254
      %v1265 = vsel %vm337, %v1227, 0
      %v1268 = vsel %vm337, %v1228, 0
      %v1271 = vsel %vm337, %v1229, 0
      %v1274 = vsel %vm337, %v1230, 0
      %v1277 = vsel %vm337, %v1231, 0
      %1279 = vmatprep.subr.bf16.mxu0 0
      %1280 = vmatpush1.bf16.msra.mxu0 %v1256
      %1281 = vmatprep.subr.bf16.mxu0 0
      %1282 = vmatpush1.bf16.msra.mxu0 %v1257
      %1283 = vmatprep.subr.bf16.mxu0 0
      %1284 = vmatpush1.bf16.msra.mxu0 %v1258
      %1285 = vmatprep.subr.bf16.mxu0 0
      %1286 = vmatpush1.bf16.msra.mxu0 %v1259
      %1287 = vmatprep.subr.bf16.mxu0 0
      %1288 = vmatpush1.bf16.msra.mxu0 0
      %1289 = vmatprep.subr.bf16.mxu0 0
      %1290 = vmatpush1.bf16.msra.mxu0 0
      %1291 = vmatprep.subr.bf16.mxu0 0
      %1292 = vmatpush1.bf16.msra.mxu0 0
      %1293 = vmatprep.subr.bf16.mxu0 0
      %1294 = vmatpush1.bf16.msra.mxu0 0
      %1295 = vmatprep.subr.bf16.mxu0 0
      %1296 = vmatpush1.bf16.msra.mxu0 0
      %1297 = vmatprep.subr.bf16.mxu0 0
      %1298 = vmatpush1.bf16.msra.mxu0 0
      %1299 = vmatprep.subr.bf16.mxu0 0
      %1300 = vmatpush1.bf16.msra.mxu0 0
      %1301 = vmatprep.subr.bf16.mxu0 0
      %1302 = vmatpush1.bf16.msra.mxu0 0
      %1303 = vmatprep.subr.bf16.mxu0 0
      %1304 = vmatpush1.bf16.msra.mxu0 0
      %1305 = vmatprep.subr.bf16.mxu0 0
      %1306 = vmatpush1.bf16.msra.mxu0 0
      %1307 = vmatprep.subr.bf16.mxu0 0
      %1308 = vmatpush1.bf16.msra.mxu0 0
      %1309 = vmatprep.subr.bf16.mxu0 0
      %1310 = vmatpush1.bf16.msra.mxu0 0
      %1311 = vmatprep.mubr.bf16.mxu0 0
      %1312 = vmatmul.mubr.bf16.gmra.mrb[0].mxu0 %v1265
      %v1313 = vpop.f32.mrb[0].mxu0
      %v1314 = vadd.f32 0.0, %v1313
      %v1315 = vpop.f32.mrb[0].mxu0
      %v1316 = vpop.f32.mrb[0].mxu0
      %v1317 = vadd.f32 0.0, %v1316
      %v1318 = vpop.f32.mrb[0].mxu0
      %1319 = vmatprep.mubr.bf16.mxu0 0
      %1320 = vmatmul.mubr.bf16.gmra.mrb[0].mxu0 %v1268
      %v1321 = vpop.f32.mrb[0].mxu0
      %v1322 = vadd.f32 0.0, %v1321
      %v1323 = vpop.f32.mrb[0].mxu0
      %v1324 = vpop.f32.mrb[0].mxu0
      %v1325 = vadd.f32 0.0, %v1324
      %v1326 = vpop.f32.mrb[0].mxu0
      %1327 = vmatprep.mubr.bf16.mxu0 0
      %1328 = vmatmul.mubr.bf16.gmra.mrb[0].mxu0 %v1271
      %v1329 = vpop.f32.mrb[0].mxu0
      %v1330 = vadd.f32 0.0, %v1329
      %v1331 = vpop.f32.mrb[0].mxu0
      %v1332 = vpop.f32.mrb[0].mxu0
      %v1333 = vadd.f32 0.0, %v1332
      %v1334 = vpop.f32.mrb[0].mxu0
      %1335 = vmatprep.mubr.bf16.mxu0 0
      %1336 = vmatmul.mubr.bf16.gmra.mrb[0].mxu0 %v1274
      %v1337 = vpop.f32.mrb[0].mxu0
      %v1338 = vadd.f32 0.0, %v1337
      %v1339 = vpop.f32.mrb[0].mxu0
      %v1340 = vpop.f32.mrb[0].mxu0
      %v1341 = vadd.f32 0.0, %v1340
      %v1342 = vpop.f32.mrb[0].mxu0
      %1343 = vmatprep.mubr.bf16.mxu0 0
      %1344 = vmatmul.mubr.bf16.gmra.mrb[0].mxu0 %v1277
      %v1345 = vpop.f32.mrb[0].mxu0
      %v1346 = vadd.f32 0.0, %v1345
      %v1347 = vpop.f32.mrb[0].mxu0
      %v1348 = vpop.f32.mrb[0].mxu0
      %v1349 = vadd.f32 0.0, %v1348
      %v1350 = vpop.f32.mrb[0].mxu0
      %1351 = vdwg.mxu0
      %v1352 = vadd.f32 %v1207, %v1314
      %v1353 = vadd.f32 %v1208, %v1317
      %v1354 = vadd.f32 %v1209, %v1322
      %v1355 = vadd.f32 %v1210, %v1325
      %v1356 = vadd.f32 %v1211, %v1330
      %v1357 = vadd.f32 %v1212, %v1333
      %v1358 = vadd.f32 %v1213, %v1338
      %v1359 = vadd.f32 %v1214, %v1341
      %v1360 = vadd.f32 %v1215, %v1346
      %v1361 = vadd.f32 %v1216, %v1349
      %v1362 = vld [vmem:[#allocation2 + $0x15] sm:$0xff]
      %v1363 = vld [vmem:[#allocation2 + $0x1d] sm:$0xff]
      %v1364 = vld [vmem:[#allocation2 + $0x25] sm:$0xff]
      %v1365 = vld [vmem:[#allocation2 + $0x2d] sm:$0xff]
      %v1366 = vld [vmem:[#allocation2 + $0x35] sm:$0xff]
      %v1367 = vld [vmem:[#allocation2 + $0x3d] sm:$0xff]
      %v1368 = vld [vmem:[#allocation2 + $0x45] sm:$0xff]
      %v1369 = vld [vmem:[#allocation2 + $0x4d] sm:$0xff]
      %v1370 = vld [vmem:[#allocation2 + $0x55] sm:$0xff]
      %v1371 = vld [vmem:[#allocation2 + $0x5d] sm:$0xff]
      %v1372 = vpack.c.bf16 %v1363, %v1362
      %v1373 = vpack.c.bf16 %v1365, %v1364
      %v1374 = vpack.c.bf16 %v1367, %v1366
      %v1375 = vpack.c.bf16 %v1369, %v1368
      %v1376 = vpack.c.bf16 %v1371, %v1370
      %v1377 = vld [vmem:[%s1 + $0xe0] sm:$0xf]
      %v1378 = vld [vmem:[%s1 + $0xe4] sm:$0xf]
      %v1379 = vld [vmem:[%s1 + $0xe8] sm:$0xf]
      %v1380 = vld [vmem:[%s1 + $0xec] sm:$0xf]
      %v1381 = vld [vmem:[%s1 + $0xf0] sm:$0xf]
      %v1382 = vld [vmem:[%s1 + $0xf4] sm:$0xf]
      %v1383 = vld [vmem:[%s1 + $0xf8] sm:$0xf]
      %v1384 = vld [vmem:[%s1 + $0xfc] sm:$0xf]
      %v1393 = vunpack.c.l.b16 %v1377
      %v1394 = vunpack.c.l.b16 %v1378
      %v1395 = vunpack.c.l.b16 %v1379
      %v1396 = vunpack.c.l.b16 %v1380
      %v1397 = vunpack.c.l.b16 %v1381
      %v1398 = vunpack.c.l.b16 %v1382
      %v1399 = vunpack.c.l.b16 %v1383
      %v1400 = vunpack.c.l.b16 %v1384
      %v1401 = vpack.c.b16 %v1394, %v1393
      %v1402 = vpack.c.b16 %v1396, %v1395
      %v1403 = vpack.c.b16 %v1398, %v1397
      %v1404 = vpack.c.b16 %v1400, %v1399
      %v1410 = vsel %vm337, %v1372, 0
      %v1413 = vsel %vm337, %v1373, 0
      %v1416 = vsel %vm337, %v1374, 0
      %v1419 = vsel %vm337, %v1375, 0
      %v1422 = vsel %vm337, %v1376, 0
      %1424 = vmatprep.subr.bf16.mxu0 0
      %1425 = vmatpush1.bf16.msra.mxu0 %v1401
      %1426 = vmatprep.subr.bf16.mxu0 0
      %1427 = vmatpush1.bf16.msra.mxu0 %v1402
      %1428 = vmatprep.subr.bf16.mxu0 0
      %1429 = vmatpush1.bf16.msra.mxu0 %v1403
      %1430 = vmatprep.subr.bf16.mxu0 0
      %1431 = vmatpush1.bf16.msra.mxu0 %v1404
      %1432 = vmatprep.subr.bf16.mxu0 0
      %1433 = vmatpush1.bf16.msra.mxu0 0
      %1434 = vmatprep.subr.bf16.mxu0 0
      %1435 = vmatpush1.bf16.msra.mxu0 0
      %1436 = vmatprep.subr.bf16.mxu0 0
      %1437 = vmatpush1.bf16.msra.mxu0 0
      %1438 = vmatprep.subr.bf16.mxu0 0
      %1439 = vmatpush1.bf16.msra.mxu0 0
      %1440 = vmatprep.subr.bf16.mxu0 0
      %1441 = vmatpush1.bf16.msra.mxu0 0
      %1442 = vmatprep.subr.bf16.mxu0 0
      %1443 = vmatpush1.bf16.msra.mxu0 0
      %1444 = vmatprep.subr.bf16.mxu0 0
      %1445 = vmatpush1.bf16.msra.mxu0 0
      %1446 = vmatprep.subr.bf16.mxu0 0
      %1447 = vmatpush1.bf16.msra.mxu0 0
      %1448 = vmatprep.subr.bf16.mxu0 0
      %1449 = vmatpush1.bf16.msra.mxu0 0
      %1450 = vmatprep.subr.bf16.mxu0 0
      %1451 = vmatpush1.bf16.msra.mxu0 0
      %1452 = vmatprep.subr.bf16.mxu0 0
      %1453 = vmatpush1.bf16.msra.mxu0 0
      %1454 = vmatprep.subr.bf16.mxu0 0
      %1455 = vmatpush1.bf16.msra.mxu0 0
      %1456 = vmatprep.mubr.bf16.mxu0 0
      %1457 = vmatmul.mubr.bf16.gmra.mrb[0].mxu0 %v1410
      %v1458 = vpop.f32.mrb[0].mxu0
      %v1459 = vadd.f32 0.0, %v1458
      %v1460 = vpop.f32.mrb[0].mxu0
      %v1461 = vpop.f32.mrb[0].mxu0
      %v1462 = vadd.f32 0.0, %v1461
      %v1463 = vpop.f32.mrb[0].mxu0
      %1464 = vmatprep.mubr.bf16.mxu0 0
      %1465 = vmatmul.mubr.bf16.gmra.mrb[0].mxu0 %v1413
      %v1466 = vpop.f32.mrb[0].mxu0
      %v1467 = vadd.f32 0.0, %v1466
      %v1468 = vpop.f32.mrb[0].mxu0
      %v1469 = vpop.f32.mrb[0].mxu0
      %v1470 = vadd.f32 0.0, %v1469
      %v1471 = vpop.f32.mrb[0].mxu0
      %1472 = vmatprep.mubr.bf16.mxu0 0
      %1473 = vmatmul.mubr.bf16.gmra.mrb[0].mxu0 %v1416
      %v1474 = vpop.f32.mrb[0].mxu0
      %v1475 = vadd.f32 0.0, %v1474
      %v1476 = vpop.f32.mrb[0].mxu0
      %v1477 = vpop.f32.mrb[0].mxu0
      %v1478 = vadd.f32 0.0, %v1477
      %v1479 = vpop.f32.mrb[0].mxu0
      %1480 = vmatprep.mubr.bf16.mxu0 0
      %1481 = vmatmul.mubr.bf16.gmra.mrb[0].mxu0 %v1419
      %v1482 = vpop.f32.mrb[0].mxu0
      %v1483 = vadd.f32 0.0, %v1482
      %v1484 = vpop.f32.mrb[0].mxu0
      %v1485 = vpop.f32.mrb[0].mxu0
      %v1486 = vadd.f32 0.0, %v1485
      %v1487 = vpop.f32.mrb[0].mxu0
      %1488 = vmatprep.mubr.bf16.mxu0 0
      %1489 = vmatmul.mubr.bf16.gmra.mrb[0].mxu0 %v1422
      %v1490 = vpop.f32.mrb[0].mxu0
      %v1491 = vadd.f32 0.0, %v1490
      %v1492 = vpop.f32.mrb[0].mxu0
      %v1493 = vpop.f32.mrb[0].mxu0
      %v1494 = vadd.f32 0.0, %v1493
      %v1495 = vpop.f32.mrb[0].mxu0
      %1496 = vdwg.mxu0
      %v1497 = vadd.f32 %v1352, %v1459
      %v1498 = vadd.f32 %v1353, %v1462
      %v1499 = vadd.f32 %v1354, %v1467
      %v1500 = vadd.f32 %v1355, %v1470
      %v1501 = vadd.f32 %v1356, %v1475
      %v1502 = vadd.f32 %v1357, %v1478
      %v1503 = vadd.f32 %v1358, %v1483
      %v1504 = vadd.f32 %v1359, %v1486
      %v1505 = vadd.f32 %v1360, %v1491
      %v1506 = vadd.f32 %v1361, %v1494
      %v1507 = vld [vmem:[#allocation2 + $0x16] sm:$0xff]
      %v1508 = vld [vmem:[#allocation2 + $0x1e] sm:$0xff]
      %v1509 = vld [vmem:[#allocation2 + $0x26] sm:$0xff]
      %v1510 = vld [vmem:[#allocation2 + $0x2e] sm:$0xff]
      %v1511 = vld [vmem:[#allocation2 + $0x36] sm:$0xff]
      %v1512 = vld [vmem:[#allocation2 + $0x3e] sm:$0xff]
      %v1513 = vld [vmem:[#allocation2 + $0x46] sm:$0xff]
      %v1514 = vld [vmem:[#allocation2 + $0x4e] sm:$0xff]
      %v1515 = vld [vmem:[#allocation2 + $0x56] sm:$0xff]
      %v1516 = vld [vmem:[#allocation2 + $0x5e] sm:$0xff]
      %v1517 = vpack.c.bf16 %v1508, %v1507
      %v1518 = vpack.c.bf16 %v1510, %v1509
      %v1519 = vpack.c.bf16 %v1512, %v1511
      %v1520 = vpack.c.bf16 %v1514, %v1513
      %v1521 = vpack.c.bf16 %v1516, %v1515
      %v1522 = vld [vmem:[%s1 + $0x100] sm:$0xf]
      %v1523 = vld [vmem:[%s1 + $0x104] sm:$0xf]
      %v1524 = vld [vmem:[%s1 + $0x108] sm:$0xf]
      %v1525 = vld [vmem:[%s1 + $0x10c] sm:$0xf]
      %v1526 = vld [vmem:[%s1 + $0x110] sm:$0xf]
      %v1527 = vld [vmem:[%s1 + $0x114] sm:$0xf]
      %v1528 = vld [vmem:[%s1 + $0x118] sm:$0xf]
      %v1529 = vld [vmem:[%s1 + $0x11c] sm:$0xf]
      %v1538 = vunpack.c.l.b16 %v1522
      %v1539 = vunpack.c.l.b16 %v1523
      %v1540 = vunpack.c.l.b16 %v1524
      %v1541 = vunpack.c.l.b16 %v1525
      %v1542 = vunpack.c.l.b16 %v1526
      %v1543 = vunpack.c.l.b16 %v1527
      %v1544 = vunpack.c.l.b16 %v1528
      %v1545 = vunpack.c.l.b16 %v1529
      %v1546 = vpack.c.b16 %v1539, %v1538
      %v1547 = vpack.c.b16 %v1541, %v1540
      %v1548 = vpack.c.b16 %v1543, %v1542
      %v1549 = vpack.c.b16 %v1545, %v1544
      %v1555 = vsel %vm337, %v1517, 0
      %v1558 = vsel %vm337, %v1518, 0
      %v1561 = vsel %vm337, %v1519, 0
      %v1564 = vsel %vm337, %v1520, 0
      %v1567 = vsel %vm337, %v1521, 0
      %1569 = vmatprep.subr.bf16.mxu0 0
      %1570 = vmatpush1.bf16.msra.mxu0 %v1546
      %1571 = vmatprep.subr.bf16.mxu0 0
      %1572 = vmatpush1.bf16.msra.mxu0 %v1547
      %1573 = vmatprep.subr.bf16.mxu0 0
      %1574 = vmatpush1.bf16.msra.mxu0 %v1548
      %1575 = vmatprep.subr.bf16.mxu0 0
      %1576 = vmatpush1.bf16.msra.mxu0 %v1549
      %1577 = vmatprep.subr.bf16.mxu0 0
      %1578 = vmatpush1.bf16.msra.mxu0 0
      %1579 = vmatprep.subr.bf16.mxu0 0
      %1580 = vmatpush1.bf16.msra.mxu0 0
      %1581 = vmatprep.subr.bf16.mxu0 0
      %1582 = vmatpush1.bf16.msra.mxu0 0
      %1583 = vmatprep.subr.bf16.mxu0 0
      %1584 = vmatpush1.bf16.msra.mxu0 0
      %1585 = vmatprep.subr.bf16.mxu0 0
      %1586 = vmatpush1.bf16.msra.mxu0 0
      %1587 = vmatprep.subr.bf16.mxu0 0
      %1588 = vmatpush1.bf16.msra.mxu0 0
      %1589 = vmatprep.subr.bf16.mxu0 0
      %1590 = vmatpush1.bf16.msra.mxu0 0
      %1591 = vmatprep.subr.bf16.mxu0 0
      %1592 = vmatpush1.bf16.msra.mxu0 0
      %1593 = vmatprep.subr.bf16.mxu0 0
      %1594 = vmatpush1.bf16.msra.mxu0 0
      %1595 = vmatprep.subr.bf16.mxu0 0
      %1596 = vmatpush1.bf16.msra.mxu0 0
      %1597 = vmatprep.subr.bf16.mxu0 0
      %1598 = vmatpush1.bf16.msra.mxu0 0
      %1599 = vmatprep.subr.bf16.mxu0 0
      %1600 = vmatpush1.bf16.msra.mxu0 0
      %1601 = vmatprep.mubr.bf16.mxu0 0
      %1602 = vmatmul.mubr.bf16.gmra.mrb[0].mxu0 %v1555
      %v1603 = vpop.f32.mrb[0].mxu0
      %v1604 = vadd.f32 0.0, %v1603
      %v1605 = vpop.f32.mrb[0].mxu0
      %v1606 = vpop.f32.mrb[0].mxu0
      %v1607 = vadd.f32 0.0, %v1606
      %v1608 = vpop.f32.mrb[0].mxu0
      %1609 = vmatprep.mubr.bf16.mxu0 0
      %1610 = vmatmul.mubr.bf16.gmra.mrb[0].mxu0 %v1558
      %v1611 = vpop.f32.mrb[0].mxu0
      %v1612 = vadd.f32 0.0, %v1611
      %v1613 = vpop.f32.mrb[0].mxu0
      %v1614 = vpop.f32.mrb[0].mxu0
      %v1615 = vadd.f32 0.0, %v1614
      %v1616 = vpop.f32.mrb[0].mxu0
      %1617 = vmatprep.mubr.bf16.mxu0 0
      %1618 = vmatmul.mubr.bf16.gmra.mrb[0].mxu0 %v1561
      %v1619 = vpop.f32.mrb[0].mxu0
      %v1620 = vadd.f32 0.0, %v1619
      %v1621 = vpop.f32.mrb[0].mxu0
      %v1622 = vpop.f32.mrb[0].mxu0
      %v1623 = vadd.f32 0.0, %v1622
      %v1624 = vpop.f32.mrb[0].mxu0
      %1625 = vmatprep.mubr.bf16.mxu0 0
      %1626 = vmatmul.mubr.bf16.gmra.mrb[0].mxu0 %v1564
      %v1627 = vpop.f32.mrb[0].mxu0
      %v1628 = vadd.f32 0.0, %v1627
      %v1629 = vpop.f32.mrb[0].mxu0
      %v1630 = vpop.f32.mrb[0].mxu0
      %v1631 = vadd.f32 0.0, %v1630
      %v1632 = vpop.f32.mrb[0].mxu0
      %1633 = vmatprep.mubr.bf16.mxu0 0
      %1634 = vmatmul.mubr.bf16.gmra.mrb[0].mxu0 %v1567
      %v1635 = vpop.f32.mrb[0].mxu0
      %v1636 = vadd.f32 0.0, %v1635
      %v1637 = vpop.f32.mrb[0].mxu0
      %v1638 = vpop.f32.mrb[0].mxu0
      %v1639 = vadd.f32 0.0, %v1638
      %v1640 = vpop.f32.mrb[0].mxu0
      %1641 = vdwg.mxu0
      %v1642 = vadd.f32 %v1497, %v1604
      %v1643 = vadd.f32 %v1498, %v1607
      %v1644 = vadd.f32 %v1499, %v1612
      %v1645 = vadd.f32 %v1500, %v1615
      %v1646 = vadd.f32 %v1501, %v1620
      %v1647 = vadd.f32 %v1502, %v1623
      %v1648 = vadd.f32 %v1503, %v1628
      %v1649 = vadd.f32 %v1504, %v1631
      %v1650 = vadd.f32 %v1505, %v1636
      %v1651 = vadd.f32 %v1506, %v1639
      %vm1654 = vcmask 1045504
      %v1655 = vrot.slane %v1643, 2
      %v1656 = vrot.slane %v1644, 2
      %v1657 = vsel %vm1654, %v1655, %v1656
      %vm1660 = vcmask 1043456
      %v1661 = vrot.slane %v1644, 4
      %v1662 = vrot.slane %v1645, 4
      %v1663 = vsel %vm1660, %v1661, %v1662
      %vm1666 = vcmask 1041408
      %v1667 = vrot.slane %v1645, 6
      %v1668 = vrot.slane %v1646, 6
      %v1669 = vsel %vm1666, %v1667, %v1668
      %v1673 = vrot.slane %v1648, 2
      %v1674 = vrot.slane %v1649, 2
      %v1675 = vsel %vm1654, %v1673, %v1674
      %v1678 = vrot.slane %v1649, 4
      %v1679 = vrot.slane %v1650, 4
      %v1680 = vsel %vm1660, %v1678, %v1679
      %v1683 = vrot.slane %v1650, 6
      %v1684 = vrot.slane %v1651, 6
      %v1685 = vsel %vm1666, %v1683, %v1684
      %v1687 = vld [vmem:[%s2] sm:$0x1]
      %v1689 = vlaneseq
      %v1690 = vshrl.u32 %v1689, 7
      %v1691 = vsub.s32 0, %v1690
      %v1692 = vrot.slane %v1687, %v1691
      %v1694 = vadd.f32 %v1642, %v1692
      %v1695 = vadd.f32 %v1657, %v1692
      %v1696 = vadd.f32 %v1663, %v1692
      %v1697 = vadd.f32 %v1669, %v1692
      %v1698 = vadd.f32 %v1647, %v1692
      %v1699 = vadd.f32 %v1675, %v1692
      %v1700 = vadd.f32 %v1680, %v1692
      %v1701 = vadd.f32 %v1685, %v1692
      %v1702 = vsel %vm337, %v1694, 0.0
      %v1703 = vsel %vm337, %v1695, 0.0
      %v1704 = vadd.f32 %v1702, %v1703
      %v1705 = vsel %vm337, %v1696, 0.0
      %v1706 = vadd.f32 %v1704, %v1705
      %v1707 = vsel %vm337, %v1697, 0.0
      %v1708 = vadd.f32 %v1706, %v1707
      %v1709 = vsel %vm337, %v1698, 0.0
      %v1710 = vadd.f32 %v1708, %v1709
      %v1711 = vsel %vm337, %v1699, 0.0
      %v1712 = vadd.f32 %v1710, %v1711
      %v1713 = vsel %vm337, %v1700, 0.0
      %v1714 = vadd.f32 %v1712, %v1713
      %v1715 = vsel %vm337, %v1701, 0.0
      %v1716 = vadd.f32 %v1714, %v1715
      %v1717 = vrot.slane %v1716, 4
      %v1718 = vadd.f32 %v1716, %v1717
      %v1719 = vrot.slane %v1718, 2
      %v1720 = vadd.f32 %v1718, %v1719
      %v1721 = vrot.slane %v1720, 1
      %v1722 = vadd.f32 %v1720, %v1721
      %v1723 = vmul.f32 %v1694, %v1694
      %v1724 = vmul.f32 %v1695, %v1695
      %v1725 = vmul.f32 %v1696, %v1696
      %v1726 = vmul.f32 %v1697, %v1697
      %v1727 = vmul.f32 %v1698, %v1698
      %v1728 = vmul.f32 %v1699, %v1699
      %v1729 = vmul.f32 %v1700, %v1700
      %v1730 = vmul.f32 %v1701, %v1701
      %v1731 = vsel %vm337, %v1723, 0.0
      %v1732 = vsel %vm337, %v1724, 0.0
      %v1733 = vadd.f32 %v1731, %v1732
      %v1734 = vsel %vm337, %v1725, 0.0
      %v1735 = vadd.f32 %v1733, %v1734
      %v1736 = vsel %vm337, %v1726, 0.0
      %v1737 = vadd.f32 %v1735, %v1736
      %v1738 = vsel %vm337, %v1727, 0.0
      %v1739 = vadd.f32 %v1737, %v1738
      %v1740 = vsel %vm337, %v1728, 0.0
      %v1741 = vadd.f32 %v1739, %v1740
      %v1742 = vsel %vm337, %v1729, 0.0
      %v1743 = vadd.f32 %v1741, %v1742
      %v1744 = vsel %vm337, %v1730, 0.0
      %v1745 = vadd.f32 %v1743, %v1744
      %v1746 = vrot.slane %v1745, 4
      %v1747 = vadd.f32 %v1745, %v1746
      %v1748 = vrot.slane %v1747, 2
      %v1749 = vadd.f32 %v1747, %v1748
      %v1750 = vrot.slane %v1749, 1
      %v1751 = vadd.f32 %v1749, %v1750
      %1753 = vrot.lane.b32.xlu0 %v1722, 127
      %v1754 = vpop.permute.xlu0 %1753
      %1756 = vrot.lane.b32.xlu0 %v1722, 63
      %v1757 = vpop.permute.xlu0 %1756
      %vm1759 = vcmask 515072
      %v1760 = vsel %vm1759, %v1754, %v1757
      %1761 = vrot.lane.b32.xlu0 %v1722, 65
      %v1762 = vpop.permute.xlu0 %1761
      %1764 = vrot.lane.b32.xlu0 %v1722, 1
      %v1765 = vpop.permute.xlu0 %1764
      %vm1767 = vcmask 7168
      %v1768 = vsel %vm1767, %v1762, %v1765
      %v1769 = vlaneseq
      %v1770 = vand.u32 %v1769, 127
      %vm1771 = vcmp.lt.s32.totalorder %v1770, 0
      %v1772 = vsub.s32 0, %v1770
      %v1773 = vsel %vm1771, %v1772, %v1770
      %v1774 = vshrl.u32 %v1773, 1
      %v1775 = vand.u32 %v1773, 1
      %v1776 = vsub.s32 0, %v1775
      %v1777 = vsel %vm1771, %v1776, %v1775
      %vm1778 = vcmp.ne.s32.totalorder %v1777, 0
      %vm1779 = vcmp.lt.s32.totalorder %v1777, 0
      %vm1780 = vmand %vm1779, %vm1778
      %v1781 = vadd.s32 %v1777, 2
      %v1782 = vsel %vm1780, %v1781, %v1777
      %vm1783 = vcmp.eq.s32.totalorder %v1782, 0
      %v1784 = vsel %vm1783, %v1760, %v1768
      %v1785 = vadd.f32 %v1722, %v1784
      %v1786 = vrcp.pop 128.0
      %v1787 = vmul.f32 %v1785, %v1786
      %1789 = vrot.lane.b32.xlu0 %v1751, 127
      %v1790 = vpop.permute.xlu0 %1789
      %1792 = vrot.lane.b32.xlu0 %v1751, 63
      %v1793 = vpop.permute.xlu0 %1792
      %v1795 = vsel %vm1759, %v1790, %v1793
      %1796 = vrot.lane.b32.xlu0 %v1751, 65
      %v1797 = vpop.permute.xlu0 %1796
      %1799 = vrot.lane.b32.xlu0 %v1751, 1
      %v1800 = vpop.permute.xlu0 %1799
      %v1802 = vsel %vm1767, %v1797, %v1800
      %v1803 = vsel %vm1783, %v1795, %v1802
      %v1804 = vadd.f32 %v1751, %v1803
      %v1805 = vmul.f32 %v1804, %v1786
      %v1806 = vmul.f32 %v1787, %v1787
      %v1807 = vsub.f32 %v1805, %v1806
      %v1808 = vmax.f32 %v1807, 0.0
      %v1809 = vadd.f32 %v1808, 1e-05
      %v1810 = vrsqrt.pop %v1809
      %v1811 = vld [vmem:[%s3] sm:$0x1]
      %v1812 = vmul.f32 %v1810, %v1811
      %v1813 = vld [vmem:[%s4] sm:$0x1]
      %v1814 = vmul.f32 %v1787, %v1812
      %v1815 = vsub.f32 %v1813, %v1814
      %v1816 = vlaneseq
      %v1817 = vshrl.u32 %v1816, 7
      %v1818 = vsub.s32 0, %v1817
      %v1819 = vrot.slane %v1812, %v1818
      %v1820 = vmul.f32 %v1694, %v1819
      %v1821 = vmul.f32 %v1695, %v1819
      %v1822 = vmul.f32 %v1696, %v1819
      %v1823 = vmul.f32 %v1697, %v1819
      %v1824 = vmul.f32 %v1698, %v1819
      %v1825 = vmul.f32 %v1699, %v1819
      %v1826 = vmul.f32 %v1700, %v1819
      %v1827 = vmul.f32 %v1701, %v1819
      %v1829 = vlaneseq
      %v1830 = vshrl.u32 %v1829, 7
      %v1831 = vsub.s32 0, %v1830
      %v1832 = vrot.slane %v1815, %v1831
      %v1834 = vadd.f32 %v1820, %v1832
      %v1835 = vadd.f32 %v1821, %v1832
      %v1836 = vadd.f32 %v1822, %v1832
      %v1837 = vadd.f32 %v1823, %v1832
      %v1838 = vadd.f32 %v1824, %v1832
      %v1839 = vadd.f32 %v1825, %v1832
      %v1840 = vadd.f32 %v1826, %v1832
      %v1841 = vadd.f32 %v1827, %v1832
      %v1842 = vmax.f32 %v1834, 0.0
      %v1843 = vmax.f32 %v1835, 0.0
      %v1844 = vmax.f32 %v1836, 0.0
      %v1845 = vmax.f32 %v1837, 0.0
      %v1846 = vmax.f32 %v1838, 0.0
      %v1847 = vmax.f32 %v1839, 0.0
      %v1848 = vmax.f32 %v1840, 0.0
      %v1849 = vmax.f32 %v1841, 0.0
      %1850 = vst.msk [vmem:[#allocation2 + $0xb] sm:$0xff] %vm337, %v1842
      %1851 = vst.msk [vmem:[#allocation2 + $0x15] sm:$0xff] %vm337, %v1843
      %1852 = vst.msk [vmem:[#allocation2 + $0x1f] sm:$0xff] %vm337, %v1844
      %1853 = vst.msk [vmem:[#allocation2 + $0x29] sm:$0xff] %vm337, %v1845
      %1854 = vst.msk [vmem:[#allocation2 + $0x33] sm:$0xff] %vm337, %v1846
      %1855 = vst.msk [vmem:[#allocation2 + $0x3d] sm:$0xff] %vm337, %v1847
      %1856 = vst.msk [vmem:[#allocation2 + $0x47] sm:$0xff] %vm337, %v1848
      %1857 = vst.msk [vmem:[#allocation2 + $0x51] sm:$0xff] %vm337, %v1849
      %v1858 = vld [vmem:[#allocation2] sm:$0xff]
      %v1859 = vld [vmem:[#allocation2 + $0x8] sm:$0xff]
      %v1860 = vld [vmem:[#allocation2 + $0x10] sm:$0xff]
      %v1861 = vld [vmem:[#allocation2 + $0x18] sm:$0xff]
      %v1862 = vld [vmem:[#allocation2 + $0x20] sm:$0xff]
      %v1863 = vld [vmem:[#allocation2 + $0x28] sm:$0xff]
      %v1864 = vld [vmem:[#allocation2 + $0x30] sm:$0xff]
      %v1865 = vld [vmem:[#allocation2 + $0x38] sm:$0xff]
      %v1866 = vld [vmem:[#allocation2 + $0x40] sm:$0xff]
      %v1867 = vld [vmem:[#allocation2 + $0x48] sm:$0xff]
      %v1868 = vpack.c.bf16 %v1859, %v1858
      %v1869 = vpack.c.bf16 %v1861, %v1860
      %v1870 = vpack.c.bf16 %v1863, %v1862
      %v1871 = vpack.c.bf16 %v1865, %v1864
      %v1872 = vpack.c.bf16 %v1867, %v1866
      %v1873 = vld [vmem:[%s5] sm:$0xf]
      %v1874 = vld [vmem:[%s5 + $0x4] sm:$0xf]
      %v1875 = vld [vmem:[%s5 + $0x8] sm:$0xf]
      %v1876 = vld [vmem:[%s5 + $0xc] sm:$0xf]
      %v1877 = vld [vmem:[%s5 + $0x10] sm:$0xf]
      %v1878 = vld [vmem:[%s5 + $0x14] sm:$0xf]
      %v1879 = vld [vmem:[%s5 + $0x18] sm:$0xf]
      %v1880 = vld [vmem:[%s5 + $0x1c] sm:$0xf]
      %v1881 = vld [vmem:[#allocation2 + $0x1] sm:$0xff]
      %v1882 = vld [vmem:[#allocation2 + $0x9] sm:$0xff]
      %v1883 = vld [vmem:[#allocation2 + $0x11] sm:$0xff]
      %v1884 = vld [vmem:[#allocation2 + $0x19] sm:$0xff]
      %v1885 = vld [vmem:[#allocation2 + $0x21] sm:$0xff]
      %v1886 = vld [vmem:[#allocation2 + $0x29] sm:$0xff]
      %v1887 = vld [vmem:[#allocation2 + $0x31] sm:$0xff]
      %v1888 = vld [vmem:[#allocation2 + $0x39] sm:$0xff]
      %v1889 = vld [vmem:[#allocation2 + $0x41] sm:$0xff]
      %v1890 = vld [vmem:[#allocation2 + $0x49] sm:$0xff]
      %v1891 = vpack.c.bf16 %v1882, %v1881
      %v1892 = vpack.c.bf16 %v1884, %v1883
      %v1893 = vpack.c.bf16 %v1886, %v1885
      %v1894 = vpack.c.bf16 %v1888, %v1887
      %v1895 = vpack.c.bf16 %v1890, %v1889
      %v1896 = vld [vmem:[%s5 + $0x20] sm:$0xf]
      %v1897 = vld [vmem:[%s5 + $0x24] sm:$0xf]
      %v1898 = vld [vmem:[%s5 + $0x28] sm:$0xf]
      %v1899 = vld [vmem:[%s5 + $0x2c] sm:$0xf]
      %v1900 = vld [vmem:[%s5 + $0x30] sm:$0xf]
      %v1901 = vld [vmem:[%s5 + $0x34] sm:$0xf]
      %v1902 = vld [vmem:[%s5 + $0x38] sm:$0xf]
      %v1903 = vld [vmem:[%s5 + $0x3c] sm:$0xf]
      %v1912 = vunpack.c.l.b16 %v1896
      %v1913 = vunpack.c.l.b16 %v1897
      %v1914 = vunpack.c.l.b16 %v1898
      %v1915 = vunpack.c.l.b16 %v1899
      %v1916 = vunpack.c.l.b16 %v1900
      %v1917 = vunpack.c.l.b16 %v1901
      %v1918 = vunpack.c.l.b16 %v1902
      %v1919 = vunpack.c.l.b16 %v1903
      %v1920 = vpack.c.b16 %v1913, %v1912
      %v1921 = vpack.c.b16 %v1915, %v1914
      %v1922 = vpack.c.b16 %v1917, %v1916
      %v1923 = vpack.c.b16 %v1919, %v1918
      %v1929 = vsel %vm337, %v1891, 0
      %v1932 = vsel %vm337, %v1892, 0
      %v1935 = vsel %vm337, %v1893, 0
      %v1938 = vsel %vm337, %v1894, 0
      %v1941 = vsel %vm337, %v1895, 0
      %1943 = vmatprep.subr.bf16.mxu0 0
      %1944 = vmatpush1.bf16.msra.mxu0 %v1920
      %1945 = vmatprep.subr.bf16.mxu0 0
      %1946 = vmatpush1.bf16.msra.mxu0 %v1921
      %1947 = vmatprep.subr.bf16.mxu0 0
      %1948 = vmatpush1.bf16.msra.mxu0 %v1922
      %1949 = vmatprep.subr.bf16.mxu0 0
      %1950 = vmatpush1.bf16.msra.mxu0 %v1923
      %1951 = vmatprep.subr.bf16.mxu0 0
      %1952 = vmatpush1.bf16.msra.mxu0 0
      %1953 = vmatprep.subr.bf16.mxu0 0
      %1954 = vmatpush1.bf16.msra.mxu0 0
      %1955 = vmatprep.subr.bf16.mxu0 0
      %1956 = vmatpush1.bf16.msra.mxu0 0
      %1957 = vmatprep.subr.bf16.mxu0 0
      %1958 = vmatpush1.bf16.msra.mxu0 0
      %1959 = vmatprep.subr.bf16.mxu0 0
      %1960 = vmatpush1.bf16.msra.mxu0 0
      %1961 = vmatprep.subr.bf16.mxu0 0
      %1962 = vmatpush1.bf16.msra.mxu0 0
      %1963 = vmatprep.subr.bf16.mxu0 0
      %1964 = vmatpush1.bf16.msra.mxu0 0
      %1965 = vmatprep.subr.bf16.mxu0 0
      %1966 = vmatpush1.bf16.msra.mxu0 0
      %1967 = vmatprep.subr.bf16.mxu0 0
      %1968 = vmatpush1.bf16.msra.mxu0 0
      %1969 = vmatprep.subr.bf16.mxu0 0
      %1970 = vmatpush1.bf16.msra.mxu0 0
      %1971 = vmatprep.subr.bf16.mxu0 0
      %1972 = vmatpush1.bf16.msra.mxu0 0
      %1973 = vmatprep.subr.bf16.mxu0 0
      %1974 = vmatpush1.bf16.msra.mxu0 0
      %1975 = vmatprep.mubr.bf16.mxu0 0
      %1976 = vmatmul.mubr.bf16.gmra.mrb[0].mxu0 %v1929
      %v1977 = vpop.f32.mrb[0].mxu0
      %v1978 = vadd.f32 0.0, %v1977
      %v1979 = vpop.f32.mrb[0].mxu0
      %v1980 = vpop.f32.mrb[0].mxu0
      %v1981 = vadd.f32 0.0, %v1980
      %v1982 = vpop.f32.mrb[0].mxu0
      %1983 = vmatprep.mubr.bf16.mxu0 0
      %1984 = vmatmul.mubr.bf16.gmra.mrb[0].mxu0 %v1932
      %v1985 = vpop.f32.mrb[0].mxu0
      %v1986 = vadd.f32 0.0, %v1985
      %v1987 = vpop.f32.mrb[0].mxu0
      %v1988 = vpop.f32.mrb[0].mxu0
      %v1989 = vadd.f32 0.0, %v1988
      %v1990 = vpop.f32.mrb[0].mxu0
      %1991 = vmatprep.mubr.bf16.mxu0 0
      %1992 = vmatmul.mubr.bf16.gmra.mrb[0].mxu0 %v1935
      %v1993 = vpop.f32.mrb[0].mxu0
      %v1994 = vadd.f32 0.0, %v1993
      %v1995 = vpop.f32.mrb[0].mxu0
      %v1996 = vpop.f32.mrb[0].mxu0
      %v1997 = vadd.f32 0.0, %v1996
      %v1998 = vpop.f32.mrb[0].mxu0
      %1999 = vmatprep.mubr.bf16.mxu0 0
      %2000 = vmatmul.mubr.bf16.gmra.mrb[0].mxu0 %v1938
      %v2001 = vpop.f32.mrb[0].mxu0
      %v2002 = vadd.f32 0.0, %v2001
      %v2003 = vpop.f32.mrb[0].mxu0
      %v2004 = vpop.f32.mrb[0].mxu0
      %v2005 = vadd.f32 0.0, %v2004
      %v2006 = vpop.f32.mrb[0].mxu0
      %2007 = vmatprep.mubr.bf16.mxu0 0
      %2008 = vmatmul.mubr.bf16.gmra.mrb[0].mxu0 %v1941
      %v2009 = vpop.f32.mrb[0].mxu0
      %v2010 = vadd.f32 0.0, %v2009
      %v2011 = vpop.f32.mrb[0].mxu0
      %v2012 = vpop.f32.mrb[0].mxu0
      %v2013 = vadd.f32 0.0, %v2012
      %v2014 = vpop.f32.mrb[0].mxu0
      %2015 = vdwg.mxu0
      %v2024 = vunpack.c.l.b16 %v1873
      %v2025 = vunpack.c.l.b16 %v1874
      %v2026 = vunpack.c.l.b16 %v1875
      %v2027 = vunpack.c.l.b16 %v1876
      %v2028 = vunpack.c.l.b16 %v1877
      %v2029 = vunpack.c.l.b16 %v1878
      %v2030 = vunpack.c.l.b16 %v1879
      %v2031 = vunpack.c.l.b16 %v1880
      %v2032 = vpack.c.b16 %v2025, %v2024
      %v2033 = vpack.c.b16 %v2027, %v2026
      %v2034 = vpack.c.b16 %v2029, %v2028
      %v2035 = vpack.c.b16 %v2031, %v2030
      %v2041 = vsel %vm337, %v1868, 0
      %v2044 = vsel %vm337, %v1869, 0
      %v2047 = vsel %vm337, %v1870, 0
      %v2050 = vsel %vm337, %v1871, 0
      %v2053 = vsel %vm337, %v1872, 0
      %2055 = vmatprep.subr.bf16.mxu0 0
      %2056 = vmatpush1.bf16.msra.mxu0 %v2032
      %2057 = vmatprep.subr.bf16.mxu0 0
      %2058 = vmatpush1.bf16.msra.mxu0 %v2033
      %2059 = vmatprep.subr.bf16.mxu0 0
      %2060 = vmatpush1.bf16.msra.mxu0 %v2034
      %2061 = vmatprep.subr.bf16.mxu0 0
      %2062 = vmatpush1.bf16.msra.mxu0 %v2035
      %2063 = vmatprep.subr.bf16.mxu0 0
      %2064 = vmatpush1.bf16.msra.mxu0 0
      %2065 = vmatprep.subr.bf16.mxu0 0
      %2066 = vmatpush1.bf16.msra.mxu0 0
      %2067 = vmatprep.subr.bf16.mxu0 0
      %2068 = vmatpush1.bf16.msra.mxu0 0
      %2069 = vmatprep.subr.bf16.mxu0 0
      %2070 = vmatpush1.bf16.msra.mxu0 0
      %2071 = vmatprep.subr.bf16.mxu0 0
      %2072 = vmatpush1.bf16.msra.mxu0 0
      %2073 = vmatprep.subr.bf16.mxu0 0
      %2074 = vmatpush1.bf16.msra.mxu0 0
      %2075 = vmatprep.subr.bf16.mxu0 0
      %2076 = vmatpush1.bf16.msra.mxu0 0
      %2077 = vmatprep.subr.bf16.mxu0 0
      %2078 = vmatpush1.bf16.msra.mxu0 0
      %2079 = vmatprep.subr.bf16.mxu0 0
      %2080 = vmatpush1.bf16.msra.mxu0 0
      %2081 = vmatprep.subr.bf16.mxu0 0
      %2082 = vmatpush1.bf16.msra.mxu0 0
      %2083 = vmatprep.subr.bf16.mxu0 0
      %2084 = vmatpush1.bf16.msra.mxu0 0
      %2085 = vmatprep.subr.bf16.mxu0 0
      %2086 = vmatpush1.bf16.msra.mxu0 0
      %2087 = vmatprep.mubr.bf16.mxu0 0
      %2088 = vmatmul.mubr.bf16.gmra.mrb[0].mxu0 %v2041
      %v2089 = vpop.f32.mrb[0].mxu0
      %v2090 = vadd.f32 %v1978, %v2089
      %v2091 = vpop.f32.mrb[0].mxu0
      %v2092 = vpop.f32.mrb[0].mxu0
      %v2093 = vadd.f32 %v1981, %v2092
      %v2094 = vpop.f32.mrb[0].mxu0
      %2095 = vmatprep.mubr.bf16.mxu0 0
      %2096 = vmatmul.mubr.bf16.gmra.mrb[0].mxu0 %v2044
      %v2097 = vpop.f32.mrb[0].mxu0
      %v2098 = vadd.f32 %v1986, %v2097
      %v2099 = vpop.f32.mrb[0].mxu0
      %v2100 = vpop.f32.mrb[0].mxu0
      %v2101 = vadd.f32 %v1989, %v2100
      %v2102 = vpop.f32.mrb[0].mxu0
      %2103 = vmatprep.mubr.bf16.mxu0 0
      %2104 = vmatmul.mubr.bf16.gmra.mrb[0].mxu0 %v2047
      %v2105 = vpop.f32.mrb[0].mxu0
      %v2106 = vadd.f32 %v1994, %v2105
      %v2107 = vpop.f32.mrb[0].mxu0
      %v2108 = vpop.f32.mrb[0].mxu0
      %v2109 = vadd.f32 %v1997, %v2108
      %v2110 = vpop.f32.mrb[0].mxu0
      %2111 = vmatprep.mubr.bf16.mxu0 0
      %2112 = vmatmul.mubr.bf16.gmra.mrb[0].mxu0 %v2050
      %v2113 = vpop.f32.mrb[0].mxu0
      %v2114 = vadd.f32 %v2002, %v2113
      %v2115 = vpop.f32.mrb[0].mxu0
      %v2116 = vpop.f32.mrb[0].mxu0
      %v2117 = vadd.f32 %v2005, %v2116
      %v2118 = vpop.f32.mrb[0].mxu0
      %2119 = vmatprep.mubr.bf16.mxu0 0
      %2120 = vmatmul.mubr.bf16.gmra.mrb[0].mxu0 %v2053
      %v2121 = vpop.f32.mrb[0].mxu0
      %v2122 = vadd.f32 %v2010, %v2121
      %v2123 = vpop.f32.mrb[0].mxu0
      %v2124 = vpop.f32.mrb[0].mxu0
      %v2125 = vadd.f32 %v2013, %v2124
      %v2126 = vpop.f32.mrb[0].mxu0
      %2127 = vdwg.mxu0
      %v2128 = vld [vmem:[#allocation2 + $0x2] sm:$0xff]
      %v2129 = vld [vmem:[#allocation2 + $0xa] sm:$0xff]
      %v2130 = vld [vmem:[#allocation2 + $0x12] sm:$0xff]
      %v2131 = vld [vmem:[#allocation2 + $0x1a] sm:$0xff]
      %v2132 = vld [vmem:[#allocation2 + $0x22] sm:$0xff]
      %v2133 = vld [vmem:[#allocation2 + $0x2a] sm:$0xff]
      %v2134 = vld [vmem:[#allocation2 + $0x32] sm:$0xff]
      %v2135 = vld [vmem:[#allocation2 + $0x3a] sm:$0xff]
      %v2136 = vld [vmem:[#allocation2 + $0x42] sm:$0xff]
      %v2137 = vld [vmem:[#allocation2 + $0x4a] sm:$0xff]
      %v2138 = vpack.c.bf16 %v2129, %v2128
      %v2139 = vpack.c.bf16 %v2131, %v2130
      %v2140 = vpack.c.bf16 %v2133, %v2132
      %v2141 = vpack.c.bf16 %v2135, %v2134
      %v2142 = vpack.c.bf16 %v2137, %v2136
      %v2143 = vld [vmem:[%s5 + $0x40] sm:$0xf]
      %v2144 = vld [vmem:[%s5 + $0x44] sm:$0xf]
      %v2145 = vld [vmem:[%s5 + $0x48] sm:$0xf]
      %v2146 = vld [vmem:[%s5 + $0x4c] sm:$0xf]
      %v2147 = vld [vmem:[%s5 + $0x50] sm:$0xf]
      %v2148 = vld [vmem:[%s5 + $0x54] sm:$0xf]
      %v2149 = vld [vmem:[%s5 + $0x58] sm:$0xf]
      %v2150 = vld [vmem:[%s5 + $0x5c] sm:$0xf]
      %v2159 = vunpack.c.l.b16 %v2143
      %v2160 = vunpack.c.l.b16 %v2144
      %v2161 = vunpack.c.l.b16 %v2145
      %v2162 = vunpack.c.l.b16 %v2146
      %v2163 = vunpack.c.l.b16 %v2147
      %v2164 = vunpack.c.l.b16 %v2148
      %v2165 = vunpack.c.l.b16 %v2149
      %v2166 = vunpack.c.l.b16 %v2150
      %v2167 = vpack.c.b16 %v2160, %v2159
      %v2168 = vpack.c.b16 %v2162, %v2161
      %v2169 = vpack.c.b16 %v2164, %v2163
      %v2170 = vpack.c.b16 %v2166, %v2165
      %v2176 = vsel %vm337, %v2138, 0
      %v2179 = vsel %vm337, %v2139, 0
      %v2182 = vsel %vm337, %v2140, 0
      %v2185 = vsel %vm337, %v2141, 0
      %v2188 = vsel %vm337, %v2142, 0
      %2190 = vmatprep.subr.bf16.mxu0 0
      %2191 = vmatpush1.bf16.msra.mxu0 %v2167
      %2192 = vmatprep.subr.bf16.mxu0 0
      %2193 = vmatpush1.bf16.msra.mxu0 %v2168
      %2194 = vmatprep.subr.bf16.mxu0 0
      %2195 = vmatpush1.bf16.msra.mxu0 %v2169
      %2196 = vmatprep.subr.bf16.mxu0 0
      %2197 = vmatpush1.bf16.msra.mxu0 %v2170
      %2198 = vmatprep.subr.bf16.mxu0 0
      %2199 = vmatpush1.bf16.msra.mxu0 0
      %2200 = vmatprep.subr.bf16.mxu0 0
      %2201 = vmatpush1.bf16.msra.mxu0 0
      %2202 = vmatprep.subr.bf16.mxu0 0
      %2203 = vmatpush1.bf16.msra.mxu0 0
      %2204 = vmatprep.subr.bf16.mxu0 0
      %2205 = vmatpush1.bf16.msra.mxu0 0
      %2206 = vmatprep.subr.bf16.mxu0 0
      %2207 = vmatpush1.bf16.msra.mxu0 0
      %2208 = vmatprep.subr.bf16.mxu0 0
      %2209 = vmatpush1.bf16.msra.mxu0 0
      %2210 = vmatprep.subr.bf16.mxu0 0
      %2211 = vmatpush1.bf16.msra.mxu0 0
      %2212 = vmatprep.subr.bf16.mxu0 0
      %2213 = vmatpush1.bf16.msra.mxu0 0
      %2214 = vmatprep.subr.bf16.mxu0 0
      %2215 = vmatpush1.bf16.msra.mxu0 0
      %2216 = vmatprep.subr.bf16.mxu0 0
      %2217 = vmatpush1.bf16.msra.mxu0 0
      %2218 = vmatprep.subr.bf16.mxu0 0
      %2219 = vmatpush1.bf16.msra.mxu0 0
      %2220 = vmatprep.subr.bf16.mxu0 0
      %2221 = vmatpush1.bf16.msra.mxu0 0
      %2222 = vmatprep.mubr.bf16.mxu0 0
      %2223 = vmatmul.mubr.bf16.gmra.mrb[0].mxu0 %v2176
      %v2224 = vpop.f32.mrb[0].mxu0
      %v2225 = vadd.f32 0.0, %v2224
      %v2226 = vpop.f32.mrb[0].mxu0
      %v2227 = vpop.f32.mrb[0].mxu0
      %v2228 = vadd.f32 0.0, %v2227
      %v2229 = vpop.f32.mrb[0].mxu0
      %2230 = vmatprep.mubr.bf16.mxu0 0
      %2231 = vmatmul.mubr.bf16.gmra.mrb[0].mxu0 %v2179
      %v2232 = vpop.f32.mrb[0].mxu0
      %v2233 = vadd.f32 0.0, %v2232
      %v2234 = vpop.f32.mrb[0].mxu0
      %v2235 = vpop.f32.mrb[0].mxu0
      %v2236 = vadd.f32 0.0, %v2235
      %v2237 = vpop.f32.mrb[0].mxu0
      %2238 = vmatprep.mubr.bf16.mxu0 0
      %2239 = vmatmul.mubr.bf16.gmra.mrb[0].mxu0 %v2182
      %v2240 = vpop.f32.mrb[0].mxu0
      %v2241 = vadd.f32 0.0, %v2240
      %v2242 = vpop.f32.mrb[0].mxu0
      %v2243 = vpop.f32.mrb[0].mxu0
      %v2244 = vadd.f32 0.0, %v2243
      %v2245 = vpop.f32.mrb[0].mxu0
      %2246 = vmatprep.mubr.bf16.mxu0 0
      %2247 = vmatmul.mubr.bf16.gmra.mrb[0].mxu0 %v2185
      %v2248 = vpop.f32.mrb[0].mxu0
      %v2249 = vadd.f32 0.0, %v2248
      %v2250 = vpop.f32.mrb[0].mxu0
      %v2251 = vpop.f32.mrb[0].mxu0
      %v2252 = vadd.f32 0.0, %v2251
      %v2253 = vpop.f32.mrb[0].mxu0
      %2254 = vmatprep.mubr.bf16.mxu0 0
      %2255 = vmatmul.mubr.bf16.gmra.mrb[0].mxu0 %v2188
      %v2256 = vpop.f32.mrb[0].mxu0
      %v2257 = vadd.f32 0.0, %v2256
      %v2258 = vpop.f32.mrb[0].mxu0
      %v2259 = vpop.f32.mrb[0].mxu0
      %v2260 = vadd.f32 0.0, %v2259
      %v2261 = vpop.f32.mrb[0].mxu0
      %2262 = vdwg.mxu0
      %v2263 = vadd.f32 %v2090, %v2225
      %v2264 = vadd.f32 %v2093, %v2228
      %v2265 = vadd.f32 %v2098, %v2233
      %v2266 = vadd.f32 %v2101, %v2236
      %v2267 = vadd.f32 %v2106, %v2241
      %v2268 = vadd.f32 %v2109, %v2244
      %v2269 = vadd.f32 %v2114, %v2249
      %v2270 = vadd.f32 %v2117, %v2252
      %v2271 = vadd.f32 %v2122, %v2257
      %v2272 = vadd.f32 %v2125, %v2260
      %v2273 = vld [vmem:[#allocation2 + $0xa] sm:$0xff]
      %v2274 = vld [vmem:[#allocation2 + $0x12] sm:$0xff]
      %v2275 = vld [vmem:[#allocation2 + $0x1a] sm:$0xff]
      %v2276 = vld [vmem:[#allocation2 + $0x22] sm:$0xff]
      %v2277 = vld [vmem:[#allocation2 + $0x2a] sm:$0xff]
      %v2278 = vld [vmem:[#allocation2 + $0x32] sm:$0xff]
      %v2279 = vld [vmem:[#allocation2 + $0x3a] sm:$0xff]
      %v2280 = vld [vmem:[#allocation2 + $0x42] sm:$0xff]
      %v2281 = vld [vmem:[#allocation2 + $0x4a] sm:$0xff]
      %v2282 = vld [vmem:[#allocation2 + $0x52] sm:$0xff]
      %v2283 = vpack.c.bf16 %v2274, %v2273
      %v2284 = vpack.c.bf16 %v2276, %v2275
      %v2285 = vpack.c.bf16 %v2278, %v2277
      %v2286 = vpack.c.bf16 %v2280, %v2279
      %v2287 = vpack.c.bf16 %v2282, %v2281
      %v2288 = vld [vmem:[%s5 + $0x60] sm:$0xf]
      %v2289 = vld [vmem:[%s5 + $0x64] sm:$0xf]
      %v2290 = vld [vmem:[%s5 + $0x68] sm:$0xf]
      %v2291 = vld [vmem:[%s5 + $0x6c] sm:$0xf]
      %v2292 = vld [vmem:[%s5 + $0x70] sm:$0xf]
      %v2293 = vld [vmem:[%s5 + $0x74] sm:$0xf]
      %v2294 = vld [vmem:[%s5 + $0x78] sm:$0xf]
      %v2295 = vld [vmem:[%s5 + $0x7c] sm:$0xf]
      %v2304 = vunpack.c.l.b16 %v2288
      %v2305 = vunpack.c.l.b16 %v2289
      %v2306 = vunpack.c.l.b16 %v2290
      %v2307 = vunpack.c.l.b16 %v2291
      %v2308 = vunpack.c.l.b16 %v2292
      %v2309 = vunpack.c.l.b16 %v2293
      %v2310 = vunpack.c.l.b16 %v2294
      %v2311 = vunpack.c.l.b16 %v2295
      %v2312 = vpack.c.b16 %v2305, %v2304
      %v2313 = vpack.c.b16 %v2307, %v2306
      %v2314 = vpack.c.b16 %v2309, %v2308
      %v2315 = vpack.c.b16 %v2311, %v2310
      %v2321 = vsel %vm337, %v2283, 0
      %v2324 = vsel %vm337, %v2284, 0
      %v2327 = vsel %vm337, %v2285, 0
      %v2330 = vsel %vm337, %v2286, 0
      %v2333 = vsel %vm337, %v2287, 0
      %2335 = vmatprep.subr.bf16.mxu0 0
      %2336 = vmatpush1.bf16.msra.mxu0 %v2312
      %2337 = vmatprep.subr.bf16.mxu0 0
      %2338 = vmatpush1.bf16.msra.mxu0 %v2313
      %2339 = vmatprep.subr.bf16.mxu0 0
      %2340 = vmatpush1.bf16.msra.mxu0 %v2314
      %2341 = vmatprep.subr.bf16.mxu0 0
      %2342 = vmatpush1.bf16.msra.mxu0 %v2315
      %2343 = vmatprep.subr.bf16.mxu0 0
      %2344 = vmatpush1.bf16.msra.mxu0 0
      %2345 = vmatprep.subr.bf16.mxu0 0
      %2346 = vmatpush1.bf16.msra.mxu0 0
      %2347 = vmatprep.subr.bf16.mxu0 0
      %2348 = vmatpush1.bf16.msra.mxu0 0
      %2349 = vmatprep.subr.bf16.mxu0 0
      %2350 = vmatpush1.bf16.msra.mxu0 0
      %2351 = vmatprep.subr.bf16.mxu0 0
      %2352 = vmatpush1.bf16.msra.mxu0 0
      %2353 = vmatprep.subr.bf16.mxu0 0
      %2354 = vmatpush1.bf16.msra.mxu0 0
      %2355 = vmatprep.subr.bf16.mxu0 0
      %2356 = vmatpush1.bf16.msra.mxu0 0
      %2357 = vmatprep.subr.bf16.mxu0 0
      %2358 = vmatpush1.bf16.msra.mxu0 0
      %2359 = vmatprep.subr.bf16.mxu0 0
      %2360 = vmatpush1.bf16.msra.mxu0 0
      %2361 = vmatprep.subr.bf16.mxu0 0
      %2362 = vmatpush1.bf16.msra.mxu0 0
      %2363 = vmatprep.subr.bf16.mxu0 0
      %2364 = vmatpush1.bf16.msra.mxu0 0
      %2365 = vmatprep.subr.bf16.mxu0 0
      %2366 = vmatpush1.bf16.msra.mxu0 0
      %2367 = vmatprep.mubr.bf16.mxu0 0
      %2368 = vmatmul.mubr.bf16.gmra.mrb[0].mxu0 %v2321
      %v2369 = vpop.f32.mrb[0].mxu0
      %v2370 = vadd.f32 0.0, %v2369
      %v2371 = vpop.f32.mrb[0].mxu0
      %v2372 = vpop.f32.mrb[0].mxu0
      %v2373 = vadd.f32 0.0, %v2372
      %v2374 = vpop.f32.mrb[0].mxu0
      %2375 = vmatprep.mubr.bf16.mxu0 0
      %2376 = vmatmul.mubr.bf16.gmra.mrb[0].mxu0 %v2324
      %v2377 = vpop.f32.mrb[0].mxu0
      %v2378 = vadd.f32 0.0, %v2377
      %v2379 = vpop.f32.mrb[0].mxu0
      %v2380 = vpop.f32.mrb[0].mxu0
      %v2381 = vadd.f32 0.0, %v2380
      %v2382 = vpop.f32.mrb[0].mxu0
      %2383 = vmatprep.mubr.bf16.mxu0 0
      %2384 = vmatmul.mubr.bf16.gmra.mrb[0].mxu0 %v2327
      %v2385 = vpop.f32.mrb[0].mxu0
      %v2386 = vadd.f32 0.0, %v2385
      %v2387 = vpop.f32.mrb[0].mxu0
      %v2388 = vpop.f32.mrb[0].mxu0
      %v2389 = vadd.f32 0.0, %v2388
      %v2390 = vpop.f32.mrb[0].mxu0
      %2391 = vmatprep.mubr.bf16.mxu0 0
      %2392 = vmatmul.mubr.bf16.gmra.mrb[0].mxu0 %v2330
      %v2393 = vpop.f32.mrb[0].mxu0
      %v2394 = vadd.f32 0.0, %v2393
      %v2395 = vpop.f32.mrb[0].mxu0
      %v2396 = vpop.f32.mrb[0].mxu0
      %v2397 = vadd.f32 0.0, %v2396
      %v2398 = vpop.f32.mrb[0].mxu0
      %2399 = vmatprep.mubr.bf16.mxu0 0
      %2400 = vmatmul.mubr.bf16.gmra.mrb[0].mxu0 %v2333
      %v2401 = vpop.f32.mrb[0].mxu0
      %v2402 = vadd.f32 0.0, %v2401
      %v2403 = vpop.f32.mrb[0].mxu0
      %v2404 = vpop.f32.mrb[0].mxu0
      %v2405 = vadd.f32 0.0, %v2404
      %v2406 = vpop.f32.mrb[0].mxu0
      %2407 = vdwg.mxu0
      %v2408 = vadd.f32 %v2263, %v2370
      %v2409 = vadd.f32 %v2264, %v2373
      %v2410 = vadd.f32 %v2265, %v2378
      %v2411 = vadd.f32 %v2266, %v2381
      %v2412 = vadd.f32 %v2267, %v2386
      %v2413 = vadd.f32 %v2268, %v2389
      %v2414 = vadd.f32 %v2269, %v2394
      %v2415 = vadd.f32 %v2270, %v2397
      %v2416 = vadd.f32 %v2271, %v2402
      %v2417 = vadd.f32 %v2272, %v2405
      %v2418 = vld [vmem:[#allocation2 + $0xb] sm:$0xff]
      %v2419 = vld [vmem:[#allocation2 + $0x13] sm:$0xff]
      %v2420 = vld [vmem:[#allocation2 + $0x1b] sm:$0xff]
      %v2421 = vld [vmem:[#allocation2 + $0x23] sm:$0xff]
      %v2422 = vld [vmem:[#allocation2 + $0x2b] sm:$0xff]
      %v2423 = vld [vmem:[#allocation2 + $0x33] sm:$0xff]
      %v2424 = vld [vmem:[#allocation2 + $0x3b] sm:$0xff]
      %v2425 = vld [vmem:[#allocation2 + $0x43] sm:$0xff]
      %v2426 = vld [vmem:[#allocation2 + $0x4b] sm:$0xff]
      %v2427 = vld [vmem:[#allocation2 + $0x53] sm:$0xff]
      %v2428 = vpack.c.bf16 %v2419, %v2418
      %v2429 = vpack.c.bf16 %v2421, %v2420
      %v2430 = vpack.c.bf16 %v2423, %v2422
      %v2431 = vpack.c.bf16 %v2425, %v2424
      %v2432 = vpack.c.bf16 %v2427, %v2426
      %v2433 = vld [vmem:[%s5 + $0x80] sm:$0xf]
      %v2434 = vld [vmem:[%s5 + $0x84] sm:$0xf]
      %v2435 = vld [vmem:[%s5 + $0x88] sm:$0xf]
      %v2436 = vld [vmem:[%s5 + $0x8c] sm:$0xf]
      %v2437 = vld [vmem:[%s5 + $0x90] sm:$0xf]
      %v2438 = vld [vmem:[%s5 + $0x94] sm:$0xf]
      %v2439 = vld [vmem:[%s5 + $0x98] sm:$0xf]
      %v2440 = vld [vmem:[%s5 + $0x9c] sm:$0xf]
      %v2449 = vunpack.c.l.b16 %v2433
      %v2450 = vunpack.c.l.b16 %v2434
      %v2451 = vunpack.c.l.b16 %v2435
      %v2452 = vunpack.c.l.b16 %v2436
      %v2453 = vunpack.c.l.b16 %v2437
      %v2454 = vunpack.c.l.b16 %v2438
      %v2455 = vunpack.c.l.b16 %v2439
      %v2456 = vunpack.c.l.b16 %v2440
      %v2457 = vpack.c.b16 %v2450, %v2449
      %v2458 = vpack.c.b16 %v2452, %v2451
      %v2459 = vpack.c.b16 %v2454, %v2453
      %v2460 = vpack.c.b16 %v2456, %v2455
      %v2466 = vsel %vm337, %v2428, 0
      %v2469 = vsel %vm337, %v2429, 0
      %v2472 = vsel %vm337, %v2430, 0
      %v2475 = vsel %vm337, %v2431, 0
      %v2478 = vsel %vm337, %v2432, 0
      %2480 = vmatprep.subr.bf16.mxu0 0
      %2481 = vmatpush1.bf16.msra.mxu0 %v2457
      %2482 = vmatprep.subr.bf16.mxu0 0
      %2483 = vmatpush1.bf16.msra.mxu0 %v2458
      %2484 = vmatprep.subr.bf16.mxu0 0
      %2485 = vmatpush1.bf16.msra.mxu0 %v2459
      %2486 = vmatprep.subr.bf16.mxu0 0
      %2487 = vmatpush1.bf16.msra.mxu0 %v2460
      %2488 = vmatprep.subr.bf16.mxu0 0
      %2489 = vmatpush1.bf16.msra.mxu0 0
      %2490 = vmatprep.subr.bf16.mxu0 0
      %2491 = vmatpush1.bf16.msra.mxu0 0
      %2492 = vmatprep.subr.bf16.mxu0 0
      %2493 = vmatpush1.bf16.msra.mxu0 0
      %2494 = vmatprep.subr.bf16.mxu0 0
      %2495 = vmatpush1.bf16.msra.mxu0 0
      %2496 = vmatprep.subr.bf16.mxu0 0
      %2497 = vmatpush1.bf16.msra.mxu0 0
      %2498 = vmatprep.subr.bf16.mxu0 0
      %2499 = vmatpush1.bf16.msra.mxu0 0
      %2500 = vmatprep.subr.bf16.mxu0 0
      %2501 = vmatpush1.bf16.msra.mxu0 0
      %2502 = vmatprep.subr.bf16.mxu0 0
      %2503 = vmatpush1.bf16.msra.mxu0 0
      %2504 = vmatprep.subr.bf16.mxu0 0
      %2505 = vmatpush1.bf16.msra.mxu0 0
      %2506 = vmatprep.subr.bf16.mxu0 0
      %2507 = vmatpush1.bf16.msra.mxu0 0
      %2508 = vmatprep.subr.bf16.mxu0 0
      %2509 = vmatpush1.bf16.msra.mxu0 0
      %2510 = vmatprep.subr.bf16.mxu0 0
      %2511 = vmatpush1.bf16.msra.mxu0 0
      %2512 = vmatprep.mubr.bf16.mxu0 0
      %2513 = vmatmul.mubr.bf16.gmra.mrb[0].mxu0 %v2466
      %v2514 = vpop.f32.mrb[0].mxu0
      %v2515 = vadd.f32 0.0, %v2514
      %v2516 = vpop.f32.mrb[0].mxu0
      %v2517 = vpop.f32.mrb[0].mxu0
      %v2518 = vadd.f32 0.0, %v2517
      %v2519 = vpop.f32.mrb[0].mxu0
      %2520 = vmatprep.mubr.bf16.mxu0 0
      %2521 = vmatmul.mubr.bf16.gmra.mrb[0].mxu0 %v2469
      %v2522 = vpop.f32.mrb[0].mxu0
      %v2523 = vadd.f32 0.0, %v2522
      %v2524 = vpop.f32.mrb[0].mxu0
      %v2525 = vpop.f32.mrb[0].mxu0
      %v2526 = vadd.f32 0.0, %v2525
      %v2527 = vpop.f32.mrb[0].mxu0
      %2528 = vmatprep.mubr.bf16.mxu0 0
      %2529 = vmatmul.mubr.bf16.gmra.mrb[0].mxu0 %v2472
      %v2530 = vpop.f32.mrb[0].mxu0
      %v2531 = vadd.f32 0.0, %v2530
      %v2532 = vpop.f32.mrb[0].mxu0
      %v2533 = vpop.f32.mrb[0].mxu0
      %v2534 = vadd.f32 0.0, %v2533
      %v2535 = vpop.f32.mrb[0].mxu0
      %2536 = vmatprep.mubr.bf16.mxu0 0
      %2537 = vmatmul.mubr.bf16.gmra.mrb[0].mxu0 %v2475
      %v2538 = vpop.f32.mrb[0].mxu0
      %v2539 = vadd.f32 0.0, %v2538
      %v2540 = vpop.f32.mrb[0].mxu0
      %v2541 = vpop.f32.mrb[0].mxu0
      %v2542 = vadd.f32 0.0, %v2541
      %v2543 = vpop.f32.mrb[0].mxu0
      %2544 = vmatprep.mubr.bf16.mxu0 0
      %2545 = vmatmul.mubr.bf16.gmra.mrb[0].mxu0 %v2478
      %v2546 = vpop.f32.mrb[0].mxu0
      %v2547 = vadd.f32 0.0, %v2546
      %v2548 = vpop.f32.mrb[0].mxu0
      %v2549 = vpop.f32.mrb[0].mxu0
      %v2550 = vadd.f32 0.0, %v2549
      %v2551 = vpop.f32.mrb[0].mxu0
      %2552 = vdwg.mxu0
      %v2553 = vadd.f32 %v2408, %v2515
      %v2554 = vadd.f32 %v2409, %v2518
      %v2555 = vadd.f32 %v2410, %v2523
      %v2556 = vadd.f32 %v2411, %v2526
      %v2557 = vadd.f32 %v2412, %v2531
      %v2558 = vadd.f32 %v2413, %v2534
      %v2559 = vadd.f32 %v2414, %v2539
      %v2560 = vadd.f32 %v2415, %v2542
      %v2561 = vadd.f32 %v2416, %v2547
      %v2562 = vadd.f32 %v2417, %v2550
      %v2563 = vld [vmem:[#allocation2 + $0xc] sm:$0xff]
      %v2564 = vld [vmem:[#allocation2 + $0x14] sm:$0xff]
      %v2565 = vld [vmem:[#allocation2 + $0x1c] sm:$0xff]
      %v2566 = vld [vmem:[#allocation2 + $0x24] sm:$0xff]
      %v2567 = vld [vmem:[#allocation2 + $0x2c] sm:$0xff]
      %v2568 = vld [vmem:[#allocation2 + $0x34] sm:$0xff]
      %v2569 = vld [vmem:[#allocation2 + $0x3c] sm:$0xff]
      %v2570 = vld [vmem:[#allocation2 + $0x44] sm:$0xff]
      %v2571 = vld [vmem:[#allocation2 + $0x4c] sm:$0xff]
      %v2572 = vld [vmem:[#allocation2 + $0x54] sm:$0xff]
      %v2573 = vpack.c.bf16 %v2564, %v2563
      %v2574 = vpack.c.bf16 %v2566, %v2565
      %v2575 = vpack.c.bf16 %v2568, %v2567
      %v2576 = vpack.c.bf16 %v2570, %v2569
      %v2577 = vpack.c.bf16 %v2572, %v2571
      %v2578 = vld [vmem:[%s5 + $0xa0] sm:$0xf]
      %v2579 = vld [vmem:[%s5 + $0xa4] sm:$0xf]
      %v2580 = vld [vmem:[%s5 + $0xa8] sm:$0xf]
      %v2581 = vld [vmem:[%s5 + $0xac] sm:$0xf]
      %v2582 = vld [vmem:[%s5 + $0xb0] sm:$0xf]
      %v2583 = vld [vmem:[%s5 + $0xb4] sm:$0xf]
      %v2584 = vld [vmem:[%s5 + $0xb8] sm:$0xf]
      %v2585 = vld [vmem:[%s5 + $0xbc] sm:$0xf]
      %v2594 = vunpack.c.l.b16 %v2578
      %v2595 = vunpack.c.l.b16 %v2579
      %v2596 = vunpack.c.l.b16 %v2580
      %v2597 = vunpack.c.l.b16 %v2581
      %v2598 = vunpack.c.l.b16 %v2582
      %v2599 = vunpack.c.l.b16 %v2583
      %v2600 = vunpack.c.l.b16 %v2584
      %v2601 = vunpack.c.l.b16 %v2585
      %v2602 = vpack.c.b16 %v2595, %v2594
      %v2603 = vpack.c.b16 %v2597, %v2596
      %v2604 = vpack.c.b16 %v2599, %v2598
      %v2605 = vpack.c.b16 %v2601, %v2600
      %v2611 = vsel %vm337, %v2573, 0
      %v2614 = vsel %vm337, %v2574, 0
      %v2617 = vsel %vm337, %v2575, 0
      %v2620 = vsel %vm337, %v2576, 0
      %v2623 = vsel %vm337, %v2577, 0
      %2625 = vmatprep.subr.bf16.mxu0 0
      %2626 = vmatpush1.bf16.msra.mxu0 %v2602
      %2627 = vmatprep.subr.bf16.mxu0 0
      %2628 = vmatpush1.bf16.msra.mxu0 %v2603
      %2629 = vmatprep.subr.bf16.mxu0 0
      %2630 = vmatpush1.bf16.msra.mxu0 %v2604
      %2631 = vmatprep.subr.bf16.mxu0 0
      %2632 = vmatpush1.bf16.msra.mxu0 %v2605
      %2633 = vmatprep.subr.bf16.mxu0 0
      %2634 = vmatpush1.bf16.msra.mxu0 0
      %2635 = vmatprep.subr.bf16.mxu0 0
      %2636 = vmatpush1.bf16.msra.mxu0 0
      %2637 = vmatprep.subr.bf16.mxu0 0
      %2638 = vmatpush1.bf16.msra.mxu0 0
      %2639 = vmatprep.subr.bf16.mxu0 0
      %2640 = vmatpush1.bf16.msra.mxu0 0
      %2641 = vmatprep.subr.bf16.mxu0 0
      %2642 = vmatpush1.bf16.msra.mxu0 0
      %2643 = vmatprep.subr.bf16.mxu0 0
      %2644 = vmatpush1.bf16.msra.mxu0 0
      %2645 = vmatprep.subr.bf16.mxu0 0
      %2646 = vmatpush1.bf16.msra.mxu0 0
      %2647 = vmatprep.subr.bf16.mxu0 0
      %2648 = vmatpush1.bf16.msra.mxu0 0
      %2649 = vmatprep.subr.bf16.mxu0 0
      %2650 = vmatpush1.bf16.msra.mxu0 0
      %2651 = vmatprep.subr.bf16.mxu0 0
      %2652 = vmatpush1.bf16.msra.mxu0 0
      %2653 = vmatprep.subr.bf16.mxu0 0
      %2654 = vmatpush1.bf16.msra.mxu0 0
      %2655 = vmatprep.subr.bf16.mxu0 0
      %2656 = vmatpush1.bf16.msra.mxu0 0
      %2657 = vmatprep.mubr.bf16.mxu0 0
      %2658 = vmatmul.mubr.bf16.gmra.mrb[0].mxu0 %v2611
      %v2659 = vpop.f32.mrb[0].mxu0
      %v2660 = vadd.f32 0.0, %v2659
      %v2661 = vpop.f32.mrb[0].mxu0
      %v2662 = vpop.f32.mrb[0].mxu0
      %v2663 = vadd.f32 0.0, %v2662
      %v2664 = vpop.f32.mrb[0].mxu0
      %2665 = vmatprep.mubr.bf16.mxu0 0
      %2666 = vmatmul.mubr.bf16.gmra.mrb[0].mxu0 %v2614
      %v2667 = vpop.f32.mrb[0].mxu0
      %v2668 = vadd.f32 0.0, %v2667
      %v2669 = vpop.f32.mrb[0].mxu0
      %v2670 = vpop.f32.mrb[0].mxu0
      %v2671 = vadd.f32 0.0, %v2670
      %v2672 = vpop.f32.mrb[0].mxu0
      %2673 = vmatprep.mubr.bf16.mxu0 0
      %2674 = vmatmul.mubr.bf16.gmra.mrb[0].mxu0 %v2617
      %v2675 = vpop.f32.mrb[0].mxu0
      %v2676 = vadd.f32 0.0, %v2675
      %v2677 = vpop.f32.mrb[0].mxu0
      %v2678 = vpop.f32.mrb[0].mxu0
      %v2679 = vadd.f32 0.0, %v2678
      %v2680 = vpop.f32.mrb[0].mxu0
      %2681 = vmatprep.mubr.bf16.mxu0 0
      %2682 = vmatmul.mubr.bf16.gmra.mrb[0].mxu0 %v2620
      %v2683 = vpop.f32.mrb[0].mxu0
      %v2684 = vadd.f32 0.0, %v2683
      %v2685 = vpop.f32.mrb[0].mxu0
      %v2686 = vpop.f32.mrb[0].mxu0
      %v2687 = vadd.f32 0.0, %v2686
      %v2688 = vpop.f32.mrb[0].mxu0
      %2689 = vmatprep.mubr.bf16.mxu0 0
      %2690 = vmatmul.mubr.bf16.gmra.mrb[0].mxu0 %v2623
      %v2691 = vpop.f32.mrb[0].mxu0
      %v2692 = vadd.f32 0.0, %v2691
      %v2693 = vpop.f32.mrb[0].mxu0
      %v2694 = vpop.f32.mrb[0].mxu0
      %v2695 = vadd.f32 0.0, %v2694
      %v2696 = vpop.f32.mrb[0].mxu0
      %2697 = vdwg.mxu0
      %v2698 = vadd.f32 %v2553, %v2660
      %v2699 = vadd.f32 %v2554, %v2663
      %v2700 = vadd.f32 %v2555, %v2668
      %v2701 = vadd.f32 %v2556, %v2671
      %v2702 = vadd.f32 %v2557, %v2676
      %v2703 = vadd.f32 %v2558, %v2679
      %v2704 = vadd.f32 %v2559, %v2684
      %v2705 = vadd.f32 %v2560, %v2687
      %v2706 = vadd.f32 %v2561, %v2692
      %v2707 = vadd.f32 %v2562, %v2695
      %v2708 = vld [vmem:[#allocation2 + $0x14] sm:$0xff]
      %v2709 = vld [vmem:[#allocation2 + $0x1c] sm:$0xff]
      %v2710 = vld [vmem:[#allocation2 + $0x24] sm:$0xff]
      %v2711 = vld [vmem:[#allocation2 + $0x2c] sm:$0xff]
      %v2712 = vld [vmem:[#allocation2 + $0x34] sm:$0xff]
      %v2713 = vld [vmem:[#allocation2 + $0x3c] sm:$0xff]
      %v2714 = vld [vmem:[#allocation2 + $0x44] sm:$0xff]
      %v2715 = vld [vmem:[#allocation2 + $0x4c] sm:$0xff]
      %v2716 = vld [vmem:[#allocation2 + $0x54] sm:$0xff]
      %v2717 = vld [vmem:[#allocation2 + $0x5c] sm:$0xff]
      %v2718 = vpack.c.bf16 %v2709, %v2708
      %v2719 = vpack.c.bf16 %v2711, %v2710
      %v2720 = vpack.c.bf16 %v2713, %v2712
      %v2721 = vpack.c.bf16 %v2715, %v2714
      %v2722 = vpack.c.bf16 %v2717, %v2716
      %v2723 = vld [vmem:[%s5 + $0xc0] sm:$0xf]
      %v2724 = vld [vmem:[%s5 + $0xc4] sm:$0xf]
      %v2725 = vld [vmem:[%s5 + $0xc8] sm:$0xf]
      %v2726 = vld [vmem:[%s5 + $0xcc] sm:$0xf]
      %v2727 = vld [vmem:[%s5 + $0xd0] sm:$0xf]
      %v2728 = vld [vmem:[%s5 + $0xd4] sm:$0xf]
      %v2729 = vld [vmem:[%s5 + $0xd8] sm:$0xf]
      %v2730 = vld [vmem:[%s5 + $0xdc] sm:$0xf]
      %v2739 = vunpack.c.l.b16 %v2723
      %v2740 = vunpack.c.l.b16 %v2724
      %v2741 = vunpack.c.l.b16 %v2725
      %v2742 = vunpack.c.l.b16 %v2726
      %v2743 = vunpack.c.l.b16 %v2727
      %v2744 = vunpack.c.l.b16 %v2728
      %v2745 = vunpack.c.l.b16 %v2729
      %v2746 = vunpack.c.l.b16 %v2730
      %v2747 = vpack.c.b16 %v2740, %v2739
      %v2748 = vpack.c.b16 %v2742, %v2741
      %v2749 = vpack.c.b16 %v2744, %v2743
      %v2750 = vpack.c.b16 %v2746, %v2745
      %v2756 = vsel %vm337, %v2718, 0
      %v2759 = vsel %vm337, %v2719, 0
      %v2762 = vsel %vm337, %v2720, 0
      %v2765 = vsel %vm337, %v2721, 0
      %v2768 = vsel %vm337, %v2722, 0
      %2770 = vmatprep.subr.bf16.mxu0 0
      %2771 = vmatpush1.bf16.msra.mxu0 %v2747
      %2772 = vmatprep.subr.bf16.mxu0 0
      %2773 = vmatpush1.bf16.msra.mxu0 %v2748
      %2774 = vmatprep.subr.bf16.mxu0 0
      %2775 = vmatpush1.bf16.msra.mxu0 %v2749
      %2776 = vmatprep.subr.bf16.mxu0 0
      %2777 = vmatpush1.bf16.msra.mxu0 %v2750
      %2778 = vmatprep.subr.bf16.mxu0 0
      %2779 = vmatpush1.bf16.msra.mxu0 0
      %2780 = vmatprep.subr.bf16.mxu0 0
      %2781 = vmatpush1.bf16.msra.mxu0 0
      %2782 = vmatprep.subr.bf16.mxu0 0
      %2783 = vmatpush1.bf16.msra.mxu0 0
      %2784 = vmatprep.subr.bf16.mxu0 0
      %2785 = vmatpush1.bf16.msra.mxu0 0
      %2786 = vmatprep.subr.bf16.mxu0 0
      %2787 = vmatpush1.bf16.msra.mxu0 0
      %2788 = vmatprep.subr.bf16.mxu0 0
      %2789 = vmatpush1.bf16.msra.mxu0 0
      %2790 = vmatprep.subr.bf16.mxu0 0
      %2791 = vmatpush1.bf16.msra.mxu0 0
      %2792 = vmatprep.subr.bf16.mxu0 0
      %2793 = vmatpush1.bf16.msra.mxu0 0
      %2794 = vmatprep.subr.bf16.mxu0 0
      %2795 = vmatpush1.bf16.msra.mxu0 0
      %2796 = vmatprep.subr.bf16.mxu0 0
      %2797 = vmatpush1.bf16.msra.mxu0 0
      %2798 = vmatprep.subr.bf16.mxu0 0
      %2799 = vmatpush1.bf16.msra.mxu0 0
      %2800 = vmatprep.subr.bf16.mxu0 0
      %2801 = vmatpush1.bf16.msra.mxu0 0
      %2802 = vmatprep.mubr.bf16.mxu0 0
      %2803 = vmatmul.mubr.bf16.gmra.mrb[0].mxu0 %v2756
      %v2804 = vpop.f32.mrb[0].mxu0
      %v2805 = vadd.f32 0.0, %v2804
      %v2806 = vpop.f32.mrb[0].mxu0
      %v2807 = vpop.f32.mrb[0].mxu0
      %v2808 = vadd.f32 0.0, %v2807
      %v2809 = vpop.f32.mrb[0].mxu0
      %2810 = vmatprep.mubr.bf16.mxu0 0
      %2811 = vmatmul.mubr.bf16.gmra.mrb[0].mxu0 %v2759
      %v2812 = vpop.f32.mrb[0].mxu0
      %v2813 = vadd.f32 0.0, %v2812
      %v2814 = vpop.f32.mrb[0].mxu0
      %v2815 = vpop.f32.mrb[0].mxu0
      %v2816 = vadd.f32 0.0, %v2815
      %v2817 = vpop.f32.mrb[0].mxu0
      %2818 = vmatprep.mubr.bf16.mxu0 0
      %2819 = vmatmul.mubr.bf16.gmra.mrb[0].mxu0 %v2762
      %v2820 = vpop.f32.mrb[0].mxu0
      %v2821 = vadd.f32 0.0, %v2820
      %v2822 = vpop.f32.mrb[0].mxu0
      %v2823 = vpop.f32.mrb[0].mxu0
      %v2824 = vadd.f32 0.0, %v2823
      %v2825 = vpop.f32.mrb[0].mxu0
      %2826 = vmatprep.mubr.bf16.mxu0 0
      %2827 = vmatmul.mubr.bf16.gmra.mrb[0].mxu0 %v2765
      %v2828 = vpop.f32.mrb[0].mxu0
      %v2829 = vadd.f32 0.0, %v2828
      %v2830 = vpop.f32.mrb[0].mxu0
      %v2831 = vpop.f32.mrb[0].mxu0
      %v2832 = vadd.f32 0.0, %v2831
      %v2833 = vpop.f32.mrb[0].mxu0
      %2834 = vmatprep.mubr.bf16.mxu0 0
      %2835 = vmatmul.mubr.bf16.gmra.mrb[0].mxu0 %v2768
      %v2836 = vpop.f32.mrb[0].mxu0
      %v2837 = vadd.f32 0.0, %v2836
      %v2838 = vpop.f32.mrb[0].mxu0
      %v2839 = vpop.f32.mrb[0].mxu0
      %v2840 = vadd.f32 0.0, %v2839
      %v2841 = vpop.f32.mrb[0].mxu0
      %2842 = vdwg.mxu0
      %v2843 = vadd.f32 %v2698, %v2805
      %v2844 = vadd.f32 %v2699, %v2808
      %v2845 = vadd.f32 %v2700, %v2813
      %v2846 = vadd.f32 %v2701, %v2816
      %v2847 = vadd.f32 %v2702, %v2821
      %v2848 = vadd.f32 %v2703, %v2824
      %v2849 = vadd.f32 %v2704, %v2829
      %v2850 = vadd.f32 %v2705, %v2832
      %v2851 = vadd.f32 %v2706, %v2837
      %v2852 = vadd.f32 %v2707, %v2840
      %v2853 = vld [vmem:[#allocation2 + $0x15] sm:$0xff]
      %v2854 = vld [vmem:[#allocation2 + $0x1d] sm:$0xff]
      %v2855 = vld [vmem:[#allocation2 + $0x25] sm:$0xff]
      %v2856 = vld [vmem:[#allocation2 + $0x2d] sm:$0xff]
      %v2857 = vld [vmem:[#allocation2 + $0x35] sm:$0xff]
      %v2858 = vld [vmem:[#allocation2 + $0x3d] sm:$0xff]
      %v2859 = vld [vmem:[#allocation2 + $0x45] sm:$0xff]
      %v2860 = vld [vmem:[#allocation2 + $0x4d] sm:$0xff]
      %v2861 = vld [vmem:[#allocation2 + $0x55] sm:$0xff]
      %v2862 = vld [vmem:[#allocation2 + $0x5d] sm:$0xff]
      %v2863 = vpack.c.bf16 %v2854, %v2853
      %v2864 = vpack.c.bf16 %v2856, %v2855
      %v2865 = vpack.c.bf16 %v2858, %v2857
      %v2866 = vpack.c.bf16 %v2860, %v2859
      %v2867 = vpack.c.bf16 %v2862, %v2861
      %v2868 = vld [vmem:[%s5 + $0xe0] sm:$0xf]
      %v2869 = vld [vmem:[%s5 + $0xe4] sm:$0xf]
      %v2870 = vld [vmem:[%s5 + $0xe8] sm:$0xf]
      %v2871 = vld [vmem:[%s5 + $0xec] sm:$0xf]
      %v2872 = vld [vmem:[%s5 + $0xf0] sm:$0xf]
      %v2873 = vld [vmem:[%s5 + $0xf4] sm:$0xf]
      %v2874 = vld [vmem:[%s5 + $0xf8] sm:$0xf]
      %v2875 = vld [vmem:[%s5 + $0xfc] sm:$0xf]
      %v2884 = vunpack.c.l.b16 %v2868
      %v2885 = vunpack.c.l.b16 %v2869
      %v2886 = vunpack.c.l.b16 %v2870
      %v2887 = vunpack.c.l.b16 %v2871
      %v2888 = vunpack.c.l.b16 %v2872
      %v2889 = vunpack.c.l.b16 %v2873
      %v2890 = vunpack.c.l.b16 %v2874
      %v2891 = vunpack.c.l.b16 %v2875
      %v2892 = vpack.c.b16 %v2885, %v2884
      %v2893 = vpack.c.b16 %v2887, %v2886
      %v2894 = vpack.c.b16 %v2889, %v2888
      %v2895 = vpack.c.b16 %v2891, %v2890
      %v2901 = vsel %vm337, %v2863, 0
      %v2904 = vsel %vm337, %v2864, 0
      %v2907 = vsel %vm337, %v2865, 0
      %v2910 = vsel %vm337, %v2866, 0
      %v2913 = vsel %vm337, %v2867, 0
      %2915 = vmatprep.subr.bf16.mxu0 0
      %2916 = vmatpush1.bf16.msra.mxu0 %v2892
      %2917 = vmatprep.subr.bf16.mxu0 0
      %2918 = vmatpush1.bf16.msra.mxu0 %v2893
      %2919 = vmatprep.subr.bf16.mxu0 0
      %2920 = vmatpush1.bf16.msra.mxu0 %v2894
      %2921 = vmatprep.subr.bf16.mxu0 0
      %2922 = vmatpush1.bf16.msra.mxu0 %v2895
      %2923 = vmatprep.subr.bf16.mxu0 0
      %2924 = vmatpush1.bf16.msra.mxu0 0
      %2925 = vmatprep.subr.bf16.mxu0 0
      %2926 = vmatpush1.bf16.msra.mxu0 0
      %2927 = vmatprep.subr.bf16.mxu0 0
      %2928 = vmatpush1.bf16.msra.mxu0 0
      %2929 = vmatprep.subr.bf16.mxu0 0
      %2930 = vmatpush1.bf16.msra.mxu0 0
      %2931 = vmatprep.subr.bf16.mxu0 0
      %2932 = vmatpush1.bf16.msra.mxu0 0
      %2933 = vmatprep.subr.bf16.mxu0 0
      %2934 = vmatpush1.bf16.msra.mxu0 0
      %2935 = vmatprep.subr.bf16.mxu0 0
      %2936 = vmatpush1.bf16.msra.mxu0 0
      %2937 = vmatprep.subr.bf16.mxu0 0
      %2938 = vmatpush1.bf16.msra.mxu0 0
      %2939 = vmatprep.subr.bf16.mxu0 0
      %2940 = vmatpush1.bf16.msra.mxu0 0
      %2941 = vmatprep.subr.bf16.mxu0 0
      %2942 = vmatpush1.bf16.msra.mxu0 0
      %2943 = vmatprep.subr.bf16.mxu0 0
      %2944 = vmatpush1.bf16.msra.mxu0 0
      %2945 = vmatprep.subr.bf16.mxu0 0
      %2946 = vmatpush1.bf16.msra.mxu0 0
      %2947 = vmatprep.mubr.bf16.mxu0 0
      %2948 = vmatmul.mubr.bf16.gmra.mrb[0].mxu0 %v2901
      %v2949 = vpop.f32.mrb[0].mxu0
      %v2950 = vadd.f32 0.0, %v2949
      %v2951 = vpop.f32.mrb[0].mxu0
      %v2952 = vpop.f32.mrb[0].mxu0
      %v2953 = vadd.f32 0.0, %v2952
      %v2954 = vpop.f32.mrb[0].mxu0
      %2955 = vmatprep.mubr.bf16.mxu0 0
      %2956 = vmatmul.mubr.bf16.gmra.mrb[0].mxu0 %v2904
      %v2957 = vpop.f32.mrb[0].mxu0
      %v2958 = vadd.f32 0.0, %v2957
      %v2959 = vpop.f32.mrb[0].mxu0
      %v2960 = vpop.f32.mrb[0].mxu0
      %v2961 = vadd.f32 0.0, %v2960
      %v2962 = vpop.f32.mrb[0].mxu0
      %2963 = vmatprep.mubr.bf16.mxu0 0
      %2964 = vmatmul.mubr.bf16.gmra.mrb[0].mxu0 %v2907
      %v2965 = vpop.f32.mrb[0].mxu0
      %v2966 = vadd.f32 0.0, %v2965
      %v2967 = vpop.f32.mrb[0].mxu0
      %v2968 = vpop.f32.mrb[0].mxu0
      %v2969 = vadd.f32 0.0, %v2968
      %v2970 = vpop.f32.mrb[0].mxu0
      %2971 = vmatprep.mubr.bf16.mxu0 0
      %2972 = vmatmul.mubr.bf16.gmra.mrb[0].mxu0 %v2910
      %v2973 = vpop.f32.mrb[0].mxu0
      %v2974 = vadd.f32 0.0, %v2973
      %v2975 = vpop.f32.mrb[0].mxu0
      %v2976 = vpop.f32.mrb[0].mxu0
      %v2977 = vadd.f32 0.0, %v2976
      %v2978 = vpop.f32.mrb[0].mxu0
      %2979 = vmatprep.mubr.bf16.mxu0 0
      %2980 = vmatmul.mubr.bf16.gmra.mrb[0].mxu0 %v2913
      %v2981 = vpop.f32.mrb[0].mxu0
      %v2982 = vadd.f32 0.0, %v2981
      %v2983 = vpop.f32.mrb[0].mxu0
      %v2984 = vpop.f32.mrb[0].mxu0
      %v2985 = vadd.f32 0.0, %v2984
      %v2986 = vpop.f32.mrb[0].mxu0
      %2987 = vdwg.mxu0
      %v2988 = vadd.f32 %v2843, %v2950
      %v2989 = vadd.f32 %v2844, %v2953
      %v2990 = vadd.f32 %v2845, %v2958
      %v2991 = vadd.f32 %v2846, %v2961
      %v2992 = vadd.f32 %v2847, %v2966
      %v2993 = vadd.f32 %v2848, %v2969
      %v2994 = vadd.f32 %v2849, %v2974
      %v2995 = vadd.f32 %v2850, %v2977
      %v2996 = vadd.f32 %v2851, %v2982
      %v2997 = vadd.f32 %v2852, %v2985
      %v2998 = vld [vmem:[#allocation2 + $0x16] sm:$0xff]
      %v2999 = vld [vmem:[#allocation2 + $0x1e] sm:$0xff]
      %v3000 = vld [vmem:[#allocation2 + $0x26] sm:$0xff]
      %v3001 = vld [vmem:[#allocation2 + $0x2e] sm:$0xff]
      %v3002 = vld [vmem:[#allocation2 + $0x36] sm:$0xff]
      %v3003 = vld [vmem:[#allocation2 + $0x3e] sm:$0xff]
      %v3004 = vld [vmem:[#allocation2 + $0x46] sm:$0xff]
      %v3005 = vld [vmem:[#allocation2 + $0x4e] sm:$0xff]
      %v3006 = vld [vmem:[#allocation2 + $0x56] sm:$0xff]
      %v3007 = vld [vmem:[#allocation2 + $0x5e] sm:$0xff]
      %v3008 = vpack.c.bf16 %v2999, %v2998
      %v3009 = vpack.c.bf16 %v3001, %v3000
      %v3010 = vpack.c.bf16 %v3003, %v3002
      %v3011 = vpack.c.bf16 %v3005, %v3004
      %v3012 = vpack.c.bf16 %v3007, %v3006
      %v3013 = vld [vmem:[%s5 + $0x100] sm:$0xf]
      %v3014 = vld [vmem:[%s5 + $0x104] sm:$0xf]
      %v3015 = vld [vmem:[%s5 + $0x108] sm:$0xf]
      %v3016 = vld [vmem:[%s5 + $0x10c] sm:$0xf]
      %v3017 = vld [vmem:[%s5 + $0x110] sm:$0xf]
      %v3018 = vld [vmem:[%s5 + $0x114] sm:$0xf]
      %v3019 = vld [vmem:[%s5 + $0x118] sm:$0xf]
      %v3020 = vld [vmem:[%s5 + $0x11c] sm:$0xf]
      %v3029 = vunpack.c.l.b16 %v3013
      %v3030 = vunpack.c.l.b16 %v3014
      %v3031 = vunpack.c.l.b16 %v3015
      %v3032 = vunpack.c.l.b16 %v3016
      %v3033 = vunpack.c.l.b16 %v3017
      %v3034 = vunpack.c.l.b16 %v3018
      %v3035 = vunpack.c.l.b16 %v3019
      %v3036 = vunpack.c.l.b16 %v3020
      %v3037 = vpack.c.b16 %v3030, %v3029
      %v3038 = vpack.c.b16 %v3032, %v3031
      %v3039 = vpack.c.b16 %v3034, %v3033
      %v3040 = vpack.c.b16 %v3036, %v3035
      %v3046 = vsel %vm337, %v3008, 0
      %v3049 = vsel %vm337, %v3009, 0
      %v3052 = vsel %vm337, %v3010, 0
      %v3055 = vsel %vm337, %v3011, 0
      %v3058 = vsel %vm337, %v3012, 0
      %3060 = vmatprep.subr.bf16.mxu0 0
      %3061 = vmatpush1.bf16.msra.mxu0 %v3037
      %3062 = vmatprep.subr.bf16.mxu0 0
      %3063 = vmatpush1.bf16.msra.mxu0 %v3038
      %3064 = vmatprep.subr.bf16.mxu0 0
      %3065 = vmatpush1.bf16.msra.mxu0 %v3039
      %3066 = vmatprep.subr.bf16.mxu0 0
      %3067 = vmatpush1.bf16.msra.mxu0 %v3040
      %3068 = vmatprep.subr.bf16.mxu0 0
      %3069 = vmatpush1.bf16.msra.mxu0 0
      %3070 = vmatprep.subr.bf16.mxu0 0
      %3071 = vmatpush1.bf16.msra.mxu0 0
      %3072 = vmatprep.subr.bf16.mxu0 0
      %3073 = vmatpush1.bf16.msra.mxu0 0
      %3074 = vmatprep.subr.bf16.mxu0 0
      %3075 = vmatpush1.bf16.msra.mxu0 0
      %3076 = vmatprep.subr.bf16.mxu0 0
      %3077 = vmatpush1.bf16.msra.mxu0 0
      %3078 = vmatprep.subr.bf16.mxu0 0
      %3079 = vmatpush1.bf16.msra.mxu0 0
      %3080 = vmatprep.subr.bf16.mxu0 0
      %3081 = vmatpush1.bf16.msra.mxu0 0
      %3082 = vmatprep.subr.bf16.mxu0 0
      %3083 = vmatpush1.bf16.msra.mxu0 0
      %3084 = vmatprep.subr.bf16.mxu0 0
      %3085 = vmatpush1.bf16.msra.mxu0 0
      %3086 = vmatprep.subr.bf16.mxu0 0
      %3087 = vmatpush1.bf16.msra.mxu0 0
      %3088 = vmatprep.subr.bf16.mxu0 0
      %3089 = vmatpush1.bf16.msra.mxu0 0
      %3090 = vmatprep.subr.bf16.mxu0 0
      %3091 = vmatpush1.bf16.msra.mxu0 0
      %3092 = vmatprep.mubr.bf16.mxu0 0
      %3093 = vmatmul.mubr.bf16.gmra.mrb[0].mxu0 %v3046
      %v3094 = vpop.f32.mrb[0].mxu0
      %v3095 = vadd.f32 0.0, %v3094
      %v3096 = vpop.f32.mrb[0].mxu0
      %v3097 = vpop.f32.mrb[0].mxu0
      %v3098 = vadd.f32 0.0, %v3097
      %v3099 = vpop.f32.mrb[0].mxu0
      %3100 = vmatprep.mubr.bf16.mxu0 0
      %3101 = vmatmul.mubr.bf16.gmra.mrb[0].mxu0 %v3049
      %v3102 = vpop.f32.mrb[0].mxu0
      %v3103 = vadd.f32 0.0, %v3102
      %v3104 = vpop.f32.mrb[0].mxu0
      %v3105 = vpop.f32.mrb[0].mxu0
      %v3106 = vadd.f32 0.0, %v3105
      %v3107 = vpop.f32.mrb[0].mxu0
      %3108 = vmatprep.mubr.bf16.mxu0 0
      %3109 = vmatmul.mubr.bf16.gmra.mrb[0].mxu0 %v3052
      %v3110 = vpop.f32.mrb[0].mxu0
      %v3111 = vadd.f32 0.0, %v3110
      %v3112 = vpop.f32.mrb[0].mxu0
      %v3113 = vpop.f32.mrb[0].mxu0
      %v3114 = vadd.f32 0.0, %v3113
      %v3115 = vpop.f32.mrb[0].mxu0
      %3116 = vmatprep.mubr.bf16.mxu0 0
      %3117 = vmatmul.mubr.bf16.gmra.mrb[0].mxu0 %v3055
      %v3118 = vpop.f32.mrb[0].mxu0
      %v3119 = vadd.f32 0.0, %v3118
      %v3120 = vpop.f32.mrb[0].mxu0
      %v3121 = vpop.f32.mrb[0].mxu0
      %v3122 = vadd.f32 0.0, %v3121
      %v3123 = vpop.f32.mrb[0].mxu0
      %3124 = vmatprep.mubr.bf16.mxu0 0
      %3125 = vmatmul.mubr.bf16.gmra.mrb[0].mxu0 %v3058
      %v3126 = vpop.f32.mrb[0].mxu0
      %v3127 = vadd.f32 0.0, %v3126
      %v3128 = vpop.f32.mrb[0].mxu0
      %v3129 = vpop.f32.mrb[0].mxu0
      %v3130 = vadd.f32 0.0, %v3129
      %v3131 = vpop.f32.mrb[0].mxu0
      %3132 = vdwg.mxu0
      %v3133 = vadd.f32 %v2988, %v3095
      %v3134 = vadd.f32 %v2989, %v3098
      %v3135 = vadd.f32 %v2990, %v3103
      %v3136 = vadd.f32 %v2991, %v3106
      %v3137 = vadd.f32 %v2992, %v3111
      %v3138 = vadd.f32 %v2993, %v3114
      %v3139 = vadd.f32 %v2994, %v3119
      %v3140 = vadd.f32 %v2995, %v3122
      %v3141 = vadd.f32 %v2996, %v3127
      %v3142 = vadd.f32 %v2997, %v3130
      %v3145 = vrot.slane %v3134, 2
      %v3146 = vrot.slane %v3135, 2
      %v3147 = vsel %vm1654, %v3145, %v3146
      %v3150 = vrot.slane %v3135, 4
      %v3151 = vrot.slane %v3136, 4
      %v3152 = vsel %vm1660, %v3150, %v3151
      %v3155 = vrot.slane %v3136, 6
      %v3156 = vrot.slane %v3137, 6
      %v3157 = vsel %vm1666, %v3155, %v3156
      %v3161 = vrot.slane %v3139, 2
      %v3162 = vrot.slane %v3140, 2
      %v3163 = vsel %vm1654, %v3161, %v3162
      %v3166 = vrot.slane %v3140, 4
      %v3167 = vrot.slane %v3141, 4
      %v3168 = vsel %vm1660, %v3166, %v3167
      %v3171 = vrot.slane %v3141, 6
      %v3172 = vrot.slane %v3142, 6
      %v3173 = vsel %vm1666, %v3171, %v3172
      %v3175 = vld [vmem:[%s6] sm:$0x1]
      %v3177 = vlaneseq
      %v3178 = vshrl.u32 %v3177, 7
      %v3179 = vsub.s32 0, %v3178
      %v3180 = vrot.slane %v3175, %v3179
      %v3182 = vadd.f32 %v3133, %v3180
      %v3183 = vadd.f32 %v3147, %v3180
      %v3184 = vadd.f32 %v3152, %v3180
      %v3185 = vadd.f32 %v3157, %v3180
      %v3186 = vadd.f32 %v3138, %v3180
      %v3187 = vadd.f32 %v3163, %v3180
      %v3188 = vadd.f32 %v3168, %v3180
      %v3189 = vadd.f32 %v3173, %v3180
      %v3190 = vsel %vm337, %v3182, 0.0
      %v3191 = vsel %vm337, %v3183, 0.0
      %v3192 = vadd.f32 %v3190, %v3191
      %v3193 = vsel %vm337, %v3184, 0.0
      %v3194 = vadd.f32 %v3192, %v3193
      %v3195 = vsel %vm337, %v3185, 0.0
      %v3196 = vadd.f32 %v3194, %v3195
      %v3197 = vsel %vm337, %v3186, 0.0
      %v3198 = vadd.f32 %v3196, %v3197
      %v3199 = vsel %vm337, %v3187, 0.0
      %v3200 = vadd.f32 %v3198, %v3199
      %v3201 = vsel %vm337, %v3188, 0.0
      %v3202 = vadd.f32 %v3200, %v3201
      %v3203 = vsel %vm337, %v3189, 0.0
      %v3204 = vadd.f32 %v3202, %v3203
      %v3205 = vrot.slane %v3204, 4
      %v3206 = vadd.f32 %v3204, %v3205
      %v3207 = vrot.slane %v3206, 2
      %v3208 = vadd.f32 %v3206, %v3207
      %v3209 = vrot.slane %v3208, 1
      %v3210 = vadd.f32 %v3208, %v3209
      %v3211 = vmul.f32 %v3182, %v3182
      %v3212 = vmul.f32 %v3183, %v3183
      %v3213 = vmul.f32 %v3184, %v3184
      %v3214 = vmul.f32 %v3185, %v3185
      %v3215 = vmul.f32 %v3186, %v3186
      %v3216 = vmul.f32 %v3187, %v3187
      %v3217 = vmul.f32 %v3188, %v3188
      %v3218 = vmul.f32 %v3189, %v3189
      %v3219 = vsel %vm337, %v3211, 0.0
      %v3220 = vsel %vm337, %v3212, 0.0
      %v3221 = vadd.f32 %v3219, %v3220
      %v3222 = vsel %vm337, %v3213, 0.0
      %v3223 = vadd.f32 %v3221, %v3222
      %v3224 = vsel %vm337, %v3214, 0.0
      %v3225 = vadd.f32 %v3223, %v3224
      %v3226 = vsel %vm337, %v3215, 0.0
      %v3227 = vadd.f32 %v3225, %v3226
      %v3228 = vsel %vm337, %v3216, 0.0
      %v3229 = vadd.f32 %v3227, %v3228
      %v3230 = vsel %vm337, %v3217, 0.0
      %v3231 = vadd.f32 %v3229, %v3230
      %v3232 = vsel %vm337, %v3218, 0.0
      %v3233 = vadd.f32 %v3231, %v3232
      %v3234 = vrot.slane %v3233, 4
      %v3235 = vadd.f32 %v3233, %v3234
      %v3236 = vrot.slane %v3235, 2
      %v3237 = vadd.f32 %v3235, %v3236
      %v3238 = vrot.slane %v3237, 1
      %v3239 = vadd.f32 %v3237, %v3238
      %3241 = vrot.lane.b32.xlu0 %v3210, 127
      %v3242 = vpop.permute.xlu0 %3241
      %3244 = vrot.lane.b32.xlu0 %v3210, 63
      %v3245 = vpop.permute.xlu0 %3244
      %v3247 = vsel %vm1759, %v3242, %v3245
      %3248 = vrot.lane.b32.xlu0 %v3210, 65
      %v3249 = vpop.permute.xlu0 %3248
      %3251 = vrot.lane.b32.xlu0 %v3210, 1
      %v3252 = vpop.permute.xlu0 %3251
      %v3254 = vsel %vm1767, %v3249, %v3252
      %v3255 = vsel %vm1783, %v3247, %v3254
      %v3256 = vadd.f32 %v3210, %v3255
      %v3257 = vmul.f32 %v3256, %v1786
      %3259 = vrot.lane.b32.xlu0 %v3239, 127
      %v3260 = vpop.permute.xlu0 %3259
      %3262 = vrot.lane.b32.xlu0 %v3239, 63
      %v3263 = vpop.permute.xlu0 %3262
      %v3265 = vsel %vm1759, %v3260, %v3263
      %3266 = vrot.lane.b32.xlu0 %v3239, 65
      %v3267 = vpop.permute.xlu0 %3266
      %3269 = vrot.lane.b32.xlu0 %v3239, 1
      %v3270 = vpop.permute.xlu0 %3269
      %v3272 = vsel %vm1767, %v3267, %v3270
      %v3273 = vsel %vm1783, %v3265, %v3272
      %v3274 = vadd.f32 %v3239, %v3273
      %v3275 = vmul.f32 %v3274, %v1786
      %v3276 = vmul.f32 %v3257, %v3257
      %v3277 = vsub.f32 %v3275, %v3276
      %v3278 = vmax.f32 %v3277, 0.0
      %v3279 = vadd.f32 %v3278, 1e-05
      %v3280 = vrsqrt.pop %v3279
      %v3281 = vld [vmem:[%s7] sm:$0x1]
      %v3282 = vmul.f32 %v3280, %v3281
      %v3283 = vld [vmem:[%s8] sm:$0x1]
      %v3284 = vmul.f32 %v3257, %v3282
      %v3285 = vsub.f32 %v3283, %v3284
      %v3286 = vlaneseq
      %v3287 = vshrl.u32 %v3286, 7
      %v3288 = vsub.s32 0, %v3287
      %v3289 = vrot.slane %v3282, %v3288
      %v3290 = vmul.f32 %v3182, %v3289
      %v3291 = vmul.f32 %v3183, %v3289
      %v3292 = vmul.f32 %v3184, %v3289
      %v3293 = vmul.f32 %v3185, %v3289
      %v3294 = vmul.f32 %v3186, %v3289
      %v3295 = vmul.f32 %v3187, %v3289
      %v3296 = vmul.f32 %v3188, %v3289
      %v3297 = vmul.f32 %v3189, %v3289
      %v3299 = vlaneseq
      %v3300 = vshrl.u32 %v3299, 7
      %v3301 = vsub.s32 0, %v3300
      %v3302 = vrot.slane %v3285, %v3301
      %v3304 = vadd.f32 %v3290, %v3302
      %v3305 = vadd.f32 %v3291, %v3302
      %v3306 = vadd.f32 %v3292, %v3302
      %v3307 = vadd.f32 %v3293, %v3302
      %v3308 = vadd.f32 %v3294, %v3302
      %v3309 = vadd.f32 %v3295, %v3302
      %v3310 = vadd.f32 %v3296, %v3302
      %v3311 = vadd.f32 %v3297, %v3302
      %v3312 = vadd.f32 %v3304, %v351
      %v3313 = vadd.f32 %v3305, %v352
      %v3314 = vadd.f32 %v3306, %v353
      %v3315 = vadd.f32 %v3307, %v354
      %v3316 = vadd.f32 %v3308, %v355
      %v3317 = vadd.f32 %v3309, %v356
      %v3318 = vadd.f32 %v3310, %v357
      %v3319 = vadd.f32 %v3311, %v358
      %3320 = vst.msk [vmem:[%s334] sm:$0xff] %vm337, %v3312
      %3321 = vst.msk [vmem:[%s334 + $0x8] sm:$0xff] %vm337, %v3313
      %3322 = vst.msk [vmem:[%s334 + $0x10] sm:$0xff] %vm337, %v3314
      %3323 = vst.msk [vmem:[%s334 + $0x18] sm:$0xff] %vm337, %v3315
      %3324 = vst.msk [vmem:[%s334 + $0x20] sm:$0xff] %vm337, %v3316
      %3325 = vst.msk [vmem:[%s334 + $0x28] sm:$0xff] %vm337, %v3317
      %3326 = vst.msk [vmem:[%s334 + $0x30] sm:$0xff] %vm337, %v3318
      %3327 = vst.msk [vmem:[%s334 + $0x38] sm:$0xff] %vm337, %v3319
      %s3328 = smul.u32 8, %s20
      %p3329 = scmp.lt.s32.totalorder %s3328, 15
      %s3330 = scalar_select %p3329, %s3328, 15
      %s3331 = smul.addr %s3330, 8
      %s3332 = scalar_lea.vmem %s9, %s3331
      // Predicated region
      $region57: #{tpu_custom_call.1} parent=55 // pred_check
        %p3333 = pneg %p232
      $region58: #{tpu_custom_call.1} parent=55 // pred_check_branch
        %3335 = sbr.rel (%p3333) target = $region60
      $region59: #{tpu_custom_call.1} parent=55 // pred_region
        %s3336 = smul.u32 8, %s20
      $region60: #{tpu_custom_call.1} parent=55 // pred_fallthru
        _
    $region56: #{tpu_custom_call.1} parent=5 // pred_fallthru
      _
    %p3337 = scmp.le.s32.totalorder 2, %s15
    // Predicated region
    $region61: #{tpu_custom_call.1} parent=5 // pred_check
      %p3338 = pneg %p3337
    $region62: #{tpu_custom_call.1} parent=5 // pred_check_branch
      %3340 = sbr.rel (%p3338) target = $region64
    $region63: #{tpu_custom_call.1} parent=5 // pred_region
      %s3341 = ssub.s32 %s15, 2
      // Predicated region
      $region65: #{tpu_custom_call.1} parent=63 // pred_check
        %p3342 = pneg %p238
      $region66: #{tpu_custom_call.1} parent=63 // pred_check_branch
        %3344 = sbr.rel (%p3342) target = $region68
      $region67: #{tpu_custom_call.1} parent=63 // pred_region
        %s3345 = smul.u32 8, %s21
        %p3346 = scmp.lt.s32.totalorder %s3345, 15
        %s3347 = scalar_select %p3346, %s3345, 15
        %s3348 = smul.addr %s3347, 8
        %s3349 = scalar_lea.vmem %s9, %s3348
      $region68: #{tpu_custom_call.1} parent=63 // pred_fallthru
        _
    $region64: #{tpu_custom_call.1} parent=5 // pred_fallthru
      _
  $region6: #{tpu_custom_call.1} parent=0 // loop_footer
    %s19 = sadd.s32 1, %s15
  $region7: #{tpu_custom_call.1} parent=0 // loop_footer_branch
    %14 = sbr.rel target = $region3
  $region8: #{tpu_custom_call.1} parent=0 // loop_exit
    _

</llo_original>
